<compile_context>
chip_gen: v5e
topology: v5e:2x2
jax: 0.10.0
libtpu: 0.0.40
codegen_flags: <defaults>
</compile_context>

<pallas_src>
import jax
import jax.numpy as jnp
from jax.experimental import pallas as pl
from jax.experimental.pallas import tpu as pltpu

LANE = 128


def _round_up(n, m):
    return ((n + m - 1) // m) * m


def _device_kind():
    devs = jax.devices()
    return devs[0].device_kind.lower() if devs else ""


# ----------------------------- kernel ---------------------------------------
def vqa_mlp_kernel(x_ref, w1_ref, b1_ref, w2_ref, b2_ref, o_ref):
    # x_ref: (TB, IN) f32, w1_ref: (IN, H) bf16, b1_ref: (1, H) f32
    # w2_ref: (H, OUT_P) bf16, b2_ref: (1, OUT_P) f32, o_ref: (TB, OUT_P) f32
    x = x_ref[...].astype(w1_ref.dtype)              # in-kernel bf16 cast (VPU)
    h = jnp.dot(x, w1_ref[...], preferred_element_type=jnp.float32) + b1_ref[...]
    h = jnp.maximum(h, 0.0)                          # ReLU, fused (VPU)
    y = jnp.dot(h.astype(w2_ref.dtype), w2_ref[...],
                preferred_element_type=jnp.float32) + b2_ref[...]
    o_ref[...] = y.astype(o_ref.dtype)


# --------------------------- one-time param prep -----------------------------
def prepare_params(w1, b1, w2, b2, *, weight_dtype=jnp.bfloat16):
    """Cast weights to bf16 and pad fc2 to a 128-lane-dense output ONCE.

    Weights are stored as [in, out] (transpose of torch nn.Linear's [out, in]).
    Call this at init, not per forward step.
    """
    out_dim = w2.shape[1]
    out_p = _round_up(max(out_dim, LANE), LANE)
    if out_p != out_dim:
        w2 = jnp.pad(w2, ((0, 0), (0, out_p - out_dim)))
        b2 = jnp.pad(b2, ((0, 0), (0, out_p - out_dim)))
    return {
        "w1": w1.astype(weight_dtype),
        "b1": b1.astype(jnp.float32).reshape(1, -1),
        "w2": w2.astype(weight_dtype),
        "b2": b2.astype(jnp.float32).reshape(1, -1),
        "out_dim": out_dim,
    }


# ------------------------------- forward -------------------------------------
def vqa_model_forward(x, params, *, block_b=None):
    """x: [B, input_dim] f32 -> logits [B, output_dim] f32."""
    B, IN = x.shape
    w1, b1, w2, b2 = params["w1"], params["b1"], params["w2"], params["b2"]
    OUT = params["out_dim"]
    H = w1.shape[1]
    OUT_P = w2.shape[1]

    # ---- generation-aware batch tiling ----
    two_tc = "v7" in _device_kind()          # v7x: 2 TensorCores per chip
    if block_b is None:
        block_b = 256 if two_tc else 512     # v5e/v6e: bigger tiles, fewer steps
    if two_tc and B > 16:
        # keep grid >= 2 so both TensorCores get a share of the batch
        bb = min(block_b, _round_up(pl.cdiv(B, 2), 16))
    else:
        bb = min(block_b, _round_up(B, 16))
    bb = max(bb, 16)                         # bf16 packs 2 rows / sublane

    B_P = _round_up(B, bb)
    if B_P != B:
        # Only when the batch isn't tile-aligned (no-op for aligned batches).
        x = jnp.pad(x, ((0, B_P - B), (0, 0)))

    grid = (B_P // bb,)

    def const_spec(shape):
        # Constant index_map -> weight/bias blocks stay resident across steps.
        return pl.BlockSpec(shape, lambda i: (0, 0))

    out = pl.pallas_call(
        vqa_mlp_kernel,
        out_shape=jax.ShapeDtypeStruct((B_P, OUT_P), jnp.float32),
        grid_spec=pltpu.PrefetchScalarGridSpec(
            num_scalar_prefetch=0,
            grid=grid,
            in_specs=[
                pl.BlockSpec((bb, IN), lambda i: (i, 0)),   # x tile per step
                const_spec((IN, H)),                        # W1 (resident)
                const_spec((1, H)),                         # b1
                const_spec((H, OUT_P)),                     # W2 (resident)
                const_spec((1, OUT_P)),                     # b2
            ],
            out_specs=pl.BlockSpec((bb, OUT_P), lambda i: (i, 0)),
        ),
        compiler_params=pltpu.CompilerParams(
            dimension_semantics=("parallel",),
            vmem_limit_bytes=48 * 1024 * 1024,
        ),
    )(x, w1, b1, w2, b2)

    return out[:B, :OUT]


# ------------------------------- init ----------------------------------------
def init_params(key, input_dim, hidden_dim, output_dim):
    """Deterministic synthetic parameters (PyTorch-Linear-like uniform init)."""
    k1, k2, k3, k4 = jax.random.split(key, 4)
    lim1 = 1.0 / jnp.sqrt(input_dim)
    lim2 = 1.0 / jnp.sqrt(hidden_dim)
    # stored as [in, out] (transpose of torch's [out, in])
    w1 = jax.random.uniform(k1, (input_dim, hidden_dim), jnp.float32, -lim1, lim1)
    b1 = jax.random.uniform(k2, (1, hidden_dim), jnp.float32, -lim1, lim1)
    w2 = jax.random.uniform(k3, (hidden_dim, output_dim), jnp.float32, -lim2, lim2)
    b2 = jax.random.uniform(k4, (1, output_dim), jnp.float32, -lim2, lim2)
    return w1, b1, w2, b2


if __name__ == "__main__":
    # Shapes implied by the module: input_dim = 768 + 768 = 1536, hidden_dim = 512.
    # output_dim depends on the dataset's answer vocabulary; small synthetic value.
    batch = 32
    input_dim = 768 + 768
    hidden_dim = 512
    output_dim = 10

    key = jax.random.PRNGKey(0)
    kx, kp = jax.random.split(key)
    x = jax.random.normal(kx, (batch, input_dim), jnp.float32)  # "combined_features"
    w1, b1, w2, b2 = init_params(kp, input_dim, hidden_dim, output_dim)

    params = prepare_params(w1, b1, w2, b2)        # one-time: bf16 cast + lane pad
    out = vqa_model_forward(x, params)
    out = jax.block_until_ready(out)

    # Pure-JAX reference with the same bf16-weight / f32-accumulate recipe.
    # NOTE: activations are bf16 in the MXU, so parity with the f32 torch model
    # is within ~1e-2 (documented tolerance).
    xb = x.astype(jnp.bfloat16)
    w1b = w1.astype(jnp.bfloat16)
    w2b = w2.astype(jnp.bfloat16)
    h_ref = jnp.maximum(
        jnp.dot(xb, w1b, preferred_element_type=jnp.float32) + b1, 0.0)
    ref = jnp.dot(h_ref.astype(jnp.bfloat16), w2b,
                  preferred_element_type=jnp.float32) + b2

    assert out.shape == (batch, output_dim)
    assert jnp.allclose(out, ref, atol=1e-2, rtol=1e-2), "mismatch vs reference"

    print("KERNEL_OK")
</pallas_src>

<mosaic_0001>
module attributes {stable_mosaic.version = 11 : i64} {
  func.func @vqa_mlp_kernel(%arg0: i32, %arg1: memref<32x1536xf32, #tpu.memory_space<vmem>>, %arg2: memref<1536x512xbf16, #tpu.memory_space<vmem>>, %arg3: memref<1x512xf32, #tpu.memory_space<vmem>>, %arg4: memref<512x128xbf16, #tpu.memory_space<vmem>>, %arg5: memref<1x128xf32, #tpu.memory_space<vmem>>, %arg6: memref<32x128xf32, #tpu.memory_space<vmem>>) attributes {dimension_semantics = [#tpu.dimension_semantics<parallel>], iteration_bounds = array<i64: 1>, scalar_prefetch = 0 : i64, scratch_operands = 0 : i64, tpu.core_type = #tpu.core_type<tc>, window_params = [{transform_indices = @transform_0, window_bounds = array<i64: 32, 1536>}, {pipeline_mode = #tpu.pipeline_mode<synchronous>, transform_indices = @transform_1, window_bounds = array<i64: 1536, 512>}, {pipeline_mode = #tpu.pipeline_mode<synchronous>, transform_indices = @transform_2, window_bounds = array<i64: 1, 512>}, {pipeline_mode = #tpu.pipeline_mode<synchronous>, transform_indices = @transform_3, window_bounds = array<i64: 512, 128>}, {pipeline_mode = #tpu.pipeline_mode<synchronous>, transform_indices = @transform_4, window_bounds = array<i64: 1, 128>}, {transform_indices = @transform_5, window_bounds = array<i64: 32, 128>}]} {
    %c0 = arith.constant 0 : index
    %c0_0 = arith.constant 0 : index
    %0 = vector.load %arg1[%c0, %c0_0] : memref<32x1536xf32, #tpu.memory_space<vmem>>, vector<32x1536xf32>
    %1 = arith.truncf %0 : vector<32x1536xf32> to vector<32x1536xbf16>
    %c0_1 = arith.constant 0 : index
    %c0_2 = arith.constant 0 : index
    %2 = vector.load %arg2[%c0_1, %c0_2] : memref<1536x512xbf16, #tpu.memory_space<vmem>>, vector<1536x512xbf16>
    %cst = arith.constant dense<0.000000e+00> : vector<32x512xf32>
    %3 = tpu.matmul %1, %2, %cst {dimension_numbers = #tpu.dot_dimension_numbers<[1], [0], [0], [1], [0, 0, 1, 1], [], []>} : vector<32x1536xbf16>, vector<1536x512xbf16>, vector<32x512xf32> -> vector<32x512xf32>
    %c0_3 = arith.constant 0 : index
    %c0_4 = arith.constant 0 : index
    %4 = vector.load %arg3[%c0_3, %c0_4] : memref<1x512xf32, #tpu.memory_space<vmem>>, vector<1x512xf32>
    %5 = vector.broadcast %4 : vector<1x512xf32> to vector<32x512xf32>
    %6 = arith.addf %3, %5 : vector<32x512xf32>
    %cst_5 = arith.constant 0.000000e+00 : f32
    %7 = vector.broadcast %cst_5 : f32 to vector<32x512xf32>
    %8 = arith.maximumf %6, %7 : vector<32x512xf32>
    %9 = arith.truncf %8 : vector<32x512xf32> to vector<32x512xbf16>
    %c0_6 = arith.constant 0 : index
    %c0_7 = arith.constant 0 : index
    %10 = vector.load %arg4[%c0_6, %c0_7] : memref<512x128xbf16, #tpu.memory_space<vmem>>, vector<512x128xbf16>
    %cst_8 = arith.constant dense<0.000000e+00> : vector<32x128xf32>
    %11 = tpu.matmul %9, %10, %cst_8 {dimension_numbers = #tpu.dot_dimension_numbers<[1], [0], [0], [1], [0, 0, 1, 1], [], []>} : vector<32x512xbf16>, vector<512x128xbf16>, vector<32x128xf32> -> vector<32x128xf32>
    %c0_9 = arith.constant 0 : index
    %c0_10 = arith.constant 0 : index
    %12 = vector.load %arg5[%c0_9, %c0_10] : memref<1x128xf32, #tpu.memory_space<vmem>>, vector<1x128xf32>
    %13 = vector.broadcast %12 : vector<1x128xf32> to vector<32x128xf32>
    %14 = arith.addf %11, %13 : vector<32x128xf32>
    %c0_11 = arith.constant 0 : index
    %c0_12 = arith.constant 0 : index
    %15 = vector.load %arg6[%c0_11, %c0_12] : memref<32x128xf32, #tpu.memory_space<vmem>>, vector<32x128xf32>
    tpu.vector_store %arg6[%c0_11, %c0_12], %14 {strides = array<i32>} : memref<32x128xf32, #tpu.memory_space<vmem>>, vector<32x128xf32>,
    return
  }
  func.func @transform_0(%arg0: i32) -> (i32, i32) {
    %c0_i32 = arith.constant 0 : i32
    %c0_i32_0 = arith.constant 0 : i32
    return %arg0, %c0_i32 : i32, i32
  }
  func.func @transform_1(%arg0: i32) -> (i32, i32) {
    %c0_i32 = arith.constant 0 : i32
    %c0_i32_0 = arith.constant 0 : i32
    %c0_i32_1 = arith.constant 0 : i32
    return %c0_i32, %c0_i32_0 : i32, i32
  }
  func.func @transform_2(%arg0: i32) -> (i32, i32) {
    %c0_i32 = arith.constant 0 : i32
    %c0_i32_0 = arith.constant 0 : i32
    %c0_i32_1 = arith.constant 0 : i32
    return %c0_i32, %c0_i32_0 : i32, i32
  }
  func.func @transform_3(%arg0: i32) -> (i32, i32) {
    %c0_i32 = arith.constant 0 : i32
    %c0_i32_0 = arith.constant 0 : i32
    %c0_i32_1 = arith.constant 0 : i32
    return %c0_i32, %c0_i32_0 : i32, i32
  }
  func.func @transform_4(%arg0: i32) -> (i32, i32) {
    %c0_i32 = arith.constant 0 : i32
    %c0_i32_0 = arith.constant 0 : i32
    %c0_i32_1 = arith.constant 0 : i32
    return %c0_i32, %c0_i32_0 : i32, i32
  }
  func.func @transform_5(%arg0: i32) -> (i32, i32) {
    %c0_i32 = arith.constant 0 : i32
    %c0_i32_0 = arith.constant 0 : i32
    return %arg0, %c0_i32 : i32, i32
  }
}

</mosaic_0001>

<llo_original>
// kernel: tpu_custom_call.1
$region0: #{tpu_custom_call.1}
  #allocation0 [shape = 'u32[]', space=smem, size = 0x4, offset = 0x4, fixed_abs, tag = 'smem constant byte address 0x4 - core index']
  #allocation1 [shape = 'u32[72,128]{1,0:T(1,128)}', space=vmem, size = 0x9000, scoped, tag = 'internal scratch']
  %s0 = inlined_call_operand.hbm [shape: f32[32,1536], index: 0, kind: input, shape index: {}]
  %s1 = inlined_call_operand.hbm [shape: bf16[1536,512], index: 1, kind: input, shape index: {}]
  %s2 = inlined_call_operand.hbm [shape: f32[1,512], index: 2, kind: input, shape index: {}]
  %s3 = inlined_call_operand.hbm [shape: bf16[512,128], index: 3, kind: input, shape index: {}]
  %s4 = inlined_call_operand.hbm [shape: f32[1,128], index: 4, kind: input, shape index: {}]
  %s5 = inlined_call_operand.hbm [shape: f32[32,128], index: 5, kind: output, shape index: {}]
  %s6 = sld [smem:[#allocation0]]
  $region50: #{tpu_custom_call.1} parent=0
    _
  %s8 = ssub.s32 1, %s6
  %s9 = scalar_select 0, %s8, %s6
  $region1: #{tpu_custom_call.1} parent=0
    #allocation2 [shape = 'u8[196608]{0}', space=vmem, size = 0x30000, scoped, tag = 'input window, operand 0, single buffered']
    #allocation3 [shape = 's32[1]{0}', space=sflag, size = 0x4, scoped, tag = 'scoped memory for tpu_custom_call.1']
    #allocation4 [shape = 's32[1]{0}', space=sflag, size = 0x4, scoped, tag = 'scoped memory for tpu_custom_call.1']
    #allocation5 [shape = 'u8[1572864]{0}', space=vmem, size = 0x180000, scoped, tag = 'input window, operand 1, single buffered']
    #allocation6 [shape = 's32[1]{0}', space=sflag, size = 0x4, scoped, tag = 'scoped memory for tpu_custom_call.1']
    #allocation7 [shape = 'u8[2048]{0}', space=vmem, size = 0x800, scoped, tag = 'input window, operand 2, single buffered']
    #allocation8 [shape = 'u8[131072]{0}', space=vmem, size = 0x20000, scoped, tag = 'input window, operand 3, single buffered']
    #allocation9 [shape = 's32[1]{0}', space=sflag, size = 0x4, scoped, tag = 'scoped memory for tpu_custom_call.1']
    #allocation10 [shape = 'u8[512]{0}', space=vmem, size = 0x400, scoped, tag = 'input window, operand 4, single buffered']
    #allocation11 [shape = 'u8[16384]{0}', space=vmem, size = 0x4000, scoped, tag = 'output window, operand 0, single buffered']
    %10 = vsyncpa [#allocation3], 0
    %11 = vsyncpa [#allocation6], 0
    %12 = vsyncpa [#allocation9], 0
    %13 = vsyncpa [#allocation4], 0
    // Predicated region
    $region2: #{tpu_custom_call.1} parent=1 // pred_check
      _
    $region3: #{tpu_custom_call.1} parent=1 // pred_check_branch
      %15 = sbr.rel (0) target = $region5
    $region4: #{tpu_custom_call.1} parent=1 // pred_region
      %17 = vsyncadd [#allocation3], 0
      %s18 = sshll.u32 %s0, 4
      %s19 = int_to_ptr.hbm [resolvable:$true] %s18
      %s20 = sshll.u32 [#allocation2], 4
      %s21 = int_to_ptr.vmem [resolvable:$true] %s20
      %26 = dma.hbm_to_vmem [thread:$0]  %s19, 6144, %s21, [#allocation3], 1536, 1536, 96
    $region5: #{tpu_custom_call.1} parent=1 // pred_fallthru
      _
    // Predicated region
    $region6: #{tpu_custom_call.1} parent=1 // pred_check
      _
    $region7: #{tpu_custom_call.1} parent=1 // pred_check_branch
      %28 = sbr.rel (0) target = $region9
    $region8: #{tpu_custom_call.1} parent=1 // pred_region
      %30 = vsyncadd [#allocation6], 0
      %s31 = sshll.u32 %s1, 4
      %s32 = int_to_ptr.hbm [resolvable:$true] %s31
      %s33 = sshll.u32 [#allocation5], 4
      %s34 = int_to_ptr.vmem [resolvable:$true] %s33
      %39 = dma.hbm_to_vmem [thread:$0]  %s32, 49152, %s34, [#allocation6], 256, 256, 16
    $region9: #{tpu_custom_call.1} parent=1 // pred_fallthru
      _
    // Predicated region
    $region10: #{tpu_custom_call.1} parent=1 // pred_check
      _
    $region11: #{tpu_custom_call.1} parent=1 // pred_check_branch
      %41 = sbr.rel (0) target = $region13
    $region12: #{tpu_custom_call.1} parent=1 // pred_region
      %43 = vsyncadd [#allocation6], 0
      %s45 = sshll.u32 %s2, 4
      %s46 = int_to_ptr.hbm [resolvable:$true] %s45
      %s47 = sshll.u32 [#allocation7], 4
      %s48 = int_to_ptr.vmem [resolvable:$true] %s47
      %50 = dma.hbm_to_vmem [thread:$0]  %s46, 64, %s48, [#allocation6]
    $region13: #{tpu_custom_call.1} parent=1 // pred_fallthru
      _
    // Predicated region
    $region14: #{tpu_custom_call.1} parent=1 // pred_check
      _
    $region15: #{tpu_custom_call.1} parent=1 // pred_check_branch
      %52 = sbr.rel (0) target = $region17
    $region16: #{tpu_custom_call.1} parent=1 // pred_region
      %54 = vsyncadd [#allocation9], 0
      %s55 = sshll.u32 %s3, 4
      %s56 = int_to_ptr.hbm [resolvable:$true] %s55
      %s57 = sshll.u32 [#allocation8], 4
      %s58 = int_to_ptr.vmem [resolvable:$true] %s57
      %63 = dma.hbm_to_vmem [thread:$0]  %s56, 4096, %s58, [#allocation9], 64, 64, 4
    $region17: #{tpu_custom_call.1} parent=1 // pred_fallthru
      _
    // Predicated region
    $region18: #{tpu_custom_call.1} parent=1 // pred_check
      _
    $region19: #{tpu_custom_call.1} parent=1 // pred_check_branch
      %65 = sbr.rel (0) target = $region21
    $region20: #{tpu_custom_call.1} parent=1 // pred_region
      %67 = vsyncadd [#allocation9], 0
      %s69 = sshll.u32 %s4, 4
      %s70 = int_to_ptr.hbm [resolvable:$true] %s69
      %s71 = sshll.u32 [#allocation10], 4
      %s72 = int_to_ptr.vmem [resolvable:$true] %s71
      %74 = dma.hbm_to_vmem [thread:$0]  %s70, 16, %s72, [#allocation9]
    $region21: #{tpu_custom_call.1} parent=1 // pred_fallthru
      _
    // Predicated region
    $region22: #{tpu_custom_call.1} parent=1 // pred_check
      _
    $region23: #{tpu_custom_call.1} parent=1 // pred_check_branch
      %76 = sbr.rel (0) target = $region25
    $region24: #{tpu_custom_call.1} parent=1 // pred_region
      %78 = dma.done [#allocation3], 6144
    $region25: #{tpu_custom_call.1} parent=1 // pred_fallthru
      _
    // Predicated region
    $region26: #{tpu_custom_call.1} parent=1 // pred_check
      _
    $region27: #{tpu_custom_call.1} parent=1 // pred_check_branch
      %80 = sbr.rel (0) target = $region29
    $region28: #{tpu_custom_call.1} parent=1 // pred_region
      %82 = dma.done [#allocation6], 49152
    $region29: #{tpu_custom_call.1} parent=1 // pred_fallthru
      _
    // Predicated region
    $region30: #{tpu_custom_call.1} parent=1 // pred_check
      _
    $region31: #{tpu_custom_call.1} parent=1 // pred_check_branch
      %84 = sbr.rel (0) target = $region33
    $region32: #{tpu_custom_call.1} parent=1 // pred_region
      %86 = dma.done [#allocation6], 64
    $region33: #{tpu_custom_call.1} parent=1 // pred_fallthru
      _
    // Predicated region
    $region34: #{tpu_custom_call.1} parent=1 // pred_check
      _
    $region35: #{tpu_custom_call.1} parent=1 // pred_check_branch
      %88 = sbr.rel (0) target = $region37
    $region36: #{tpu_custom_call.1} parent=1 // pred_region
      %90 = dma.done [#allocation9], 4096
    $region37: #{tpu_custom_call.1} parent=1 // pred_fallthru
      _
    // Predicated region
    $region38: #{tpu_custom_call.1} parent=1 // pred_check
      _
    $region39: #{tpu_custom_call.1} parent=1 // pred_check_branch
      %92 = sbr.rel (0) target = $region41
    $region40: #{tpu_custom_call.1} parent=1 // pred_region
      %94 = dma.done [#allocation9], 16
    $region41: #{tpu_custom_call.1} parent=1 // pred_fallthru
      _
    %v95 = vld [vmem:[#allocation2] sm:$0xff]
    %v96 = vld [vmem:[#allocation2 + $0x8] sm:$0xff]
    %v97 = vld [vmem:[#allocation2 + $0x10] sm:$0xff]
    %v98 = vld [vmem:[#allocation2 + $0x18] sm:$0xff]
    %v99 = vld [vmem:[#allocation2 + $0x20] sm:$0xff]
    %v100 = vld [vmem:[#allocation2 + $0x28] sm:$0xff]
    %v101 = vld [vmem:[#allocation2 + $0x30] sm:$0xff]
    %v102 = vld [vmem:[#allocation2 + $0x38] sm:$0xff]
    %v103 = vld [vmem:[#allocation2 + $0x40] sm:$0xff]
    %v104 = vld [vmem:[#allocation2 + $0x48] sm:$0xff]
    %v105 = vld [vmem:[#allocation2 + $0x50] sm:$0xff]
    %v106 = vld [vmem:[#allocation2 + $0x58] sm:$0xff]
    %v107 = vld [vmem:[#allocation2 + $0x60] sm:$0xff]
    %v108 = vld [vmem:[#allocation2 + $0x68] sm:$0xff]
    %v109 = vld [vmem:[#allocation2 + $0x70] sm:$0xff]
    %v110 = vld [vmem:[#allocation2 + $0x78] sm:$0xff]
    %v111 = vld [vmem:[#allocation2 + $0x80] sm:$0xff]
    %v112 = vld [vmem:[#allocation2 + $0x88] sm:$0xff]
    %v113 = vld [vmem:[#allocation2 + $0x90] sm:$0xff]
    %v114 = vld [vmem:[#allocation2 + $0x98] sm:$0xff]
    %v115 = vld [vmem:[#allocation2 + $0xa0] sm:$0xff]
    %v116 = vld [vmem:[#allocation2 + $0xa8] sm:$0xff]
    %v117 = vld [vmem:[#allocation2 + $0xb0] sm:$0xff]
    %v118 = vld [vmem:[#allocation2 + $0xb8] sm:$0xff]
    %v119 = vld [vmem:[#allocation2 + $0xc0] sm:$0xff]
    %v120 = vld [vmem:[#allocation2 + $0xc8] sm:$0xff]
    %v121 = vld [vmem:[#allocation2 + $0xd0] sm:$0xff]
    %v122 = vld [vmem:[#allocation2 + $0xd8] sm:$0xff]
    %v123 = vld [vmem:[#allocation2 + $0xe0] sm:$0xff]
    %v124 = vld [vmem:[#allocation2 + $0xe8] sm:$0xff]
    %v125 = vld [vmem:[#allocation2 + $0xf0] sm:$0xff]
    %v126 = vld [vmem:[#allocation2 + $0xf8] sm:$0xff]
    %v127 = vld [vmem:[#allocation2 + $0x100] sm:$0xff]
    %v128 = vld [vmem:[#allocation2 + $0x108] sm:$0xff]
    %v129 = vld [vmem:[#allocation2 + $0x110] sm:$0xff]
    %v130 = vld [vmem:[#allocation2 + $0x118] sm:$0xff]
    %v131 = vld [vmem:[#allocation2 + $0x120] sm:$0xff]
    %v132 = vld [vmem:[#allocation2 + $0x128] sm:$0xff]
    %v133 = vld [vmem:[#allocation2 + $0x130] sm:$0xff]
    %v134 = vld [vmem:[#allocation2 + $0x138] sm:$0xff]
    %v135 = vld [vmem:[#allocation2 + $0x140] sm:$0xff]
    %v136 = vld [vmem:[#allocation2 + $0x148] sm:$0xff]
    %v137 = vld [vmem:[#allocation2 + $0x150] sm:$0xff]
    %v138 = vld [vmem:[#allocation2 + $0x158] sm:$0xff]
    %v139 = vld [vmem:[#allocation2 + $0x160] sm:$0xff]
    %v140 = vld [vmem:[#allocation2 + $0x168] sm:$0xff]
    %v141 = vld [vmem:[#allocation2 + $0x170] sm:$0xff]
    %v142 = vld [vmem:[#allocation2 + $0x178] sm:$0xff]
    %v143 = vpack.c.bf16 %v107, %v95
    %v144 = vpack.c.bf16 %v108, %v96
    %v145 = vpack.c.bf16 %v109, %v97
    %v146 = vpack.c.bf16 %v110, %v98
    %v147 = vpack.c.bf16 %v111, %v99
    %v148 = vpack.c.bf16 %v112, %v100
    %v149 = vpack.c.bf16 %v113, %v101
    %v150 = vpack.c.bf16 %v114, %v102
    %v151 = vpack.c.bf16 %v115, %v103
    %v152 = vpack.c.bf16 %v116, %v104
    %v153 = vpack.c.bf16 %v117, %v105
    %v154 = vpack.c.bf16 %v118, %v106
    %v155 = vpack.c.bf16 %v131, %v119
    %v156 = vpack.c.bf16 %v132, %v120
    %v157 = vpack.c.bf16 %v133, %v121
    %v158 = vpack.c.bf16 %v134, %v122
    %v159 = vpack.c.bf16 %v135, %v123
    %v160 = vpack.c.bf16 %v136, %v124
    %v161 = vpack.c.bf16 %v137, %v125
    %v162 = vpack.c.bf16 %v138, %v126
    %v163 = vpack.c.bf16 %v139, %v127
    %v164 = vpack.c.bf16 %v140, %v128
    %v165 = vpack.c.bf16 %v141, %v129
    %v166 = vpack.c.bf16 %v142, %v130
    %v167 = vld [vmem:[#allocation5] sm:$0xff]
    %v168 = vld [vmem:[#allocation5 + $0x8] sm:$0xff]
    %v169 = vld [vmem:[#allocation5 + $0x10] sm:$0xff]
    %v170 = vld [vmem:[#allocation5 + $0x18] sm:$0xff]
    %v171 = vld [vmem:[#allocation5 + $0x20] sm:$0xff]
    %v172 = vld [vmem:[#allocation5 + $0x28] sm:$0xff]
    %v173 = vld [vmem:[#allocation5 + $0x30] sm:$0xff]
    %v174 = vld [vmem:[#allocation5 + $0x38] sm:$0xff]
    %v175 = vld [vmem:[#allocation5 + $0x40] sm:$0xff]
    %v176 = vld [vmem:[#allocation5 + $0x48] sm:$0xff]
    %v177 = vld [vmem:[#allocation5 + $0x50] sm:$0xff]
    %v178 = vld [vmem:[#allocation5 + $0x58] sm:$0xff]
    %v179 = vld [vmem:[#allocation5 + $0x60] sm:$0xff]
    %v180 = vld [vmem:[#allocation5 + $0x68] sm:$0xff]
    %v181 = vld [vmem:[#allocation5 + $0x70] sm:$0xff]
    %v182 = vld [vmem:[#allocation5 + $0x78] sm:$0xff]
    %v183 = vld [vmem:[#allocation5 + $0x80] sm:$0xff]
    %v184 = vld [vmem:[#allocation5 + $0x88] sm:$0xff]
    %v185 = vld [vmem:[#allocation5 + $0x90] sm:$0xff]
    %v186 = vld [vmem:[#allocation5 + $0x98] sm:$0xff]
    %v187 = vld [vmem:[#allocation5 + $0xa0] sm:$0xff]
    %v188 = vld [vmem:[#allocation5 + $0xa8] sm:$0xff]
    %v189 = vld [vmem:[#allocation5 + $0xb0] sm:$0xff]
    %v190 = vld [vmem:[#allocation5 + $0xb8] sm:$0xff]
    %v191 = vld [vmem:[#allocation5 + $0xc0] sm:$0xff]
    %v192 = vld [vmem:[#allocation5 + $0xc8] sm:$0xff]
    %v193 = vld [vmem:[#allocation5 + $0xd0] sm:$0xff]
    %v194 = vld [vmem:[#allocation5 + $0xd8] sm:$0xff]
    %v195 = vld [vmem:[#allocation5 + $0xe0] sm:$0xff]
    %v196 = vld [vmem:[#allocation5 + $0xe8] sm:$0xff]
    %v197 = vld [vmem:[#allocation5 + $0xf0] sm:$0xff]
    %v198 = vld [vmem:[#allocation5 + $0xf8] sm:$0xff]
    %v199 = vld [vmem:[#allocation5 + $0x100] sm:$0xff]
    %v200 = vld [vmem:[#allocation5 + $0x108] sm:$0xff]
    %v201 = vld [vmem:[#allocation5 + $0x110] sm:$0xff]
    %v202 = vld [vmem:[#allocation5 + $0x118] sm:$0xff]
    %v203 = vld [vmem:[#allocation5 + $0x120] sm:$0xff]
    %v204 = vld [vmem:[#allocation5 + $0x128] sm:$0xff]
    %v205 = vld [vmem:[#allocation5 + $0x130] sm:$0xff]
    %v206 = vld [vmem:[#allocation5 + $0x138] sm:$0xff]
    %v207 = vld [vmem:[#allocation5 + $0x140] sm:$0xff]
    %v208 = vld [vmem:[#allocation5 + $0x148] sm:$0xff]
    %v209 = vld [vmem:[#allocation5 + $0x150] sm:$0xff]
    %v210 = vld [vmem:[#allocation5 + $0x158] sm:$0xff]
    %v211 = vld [vmem:[#allocation5 + $0x160] sm:$0xff]
    %v212 = vld [vmem:[#allocation5 + $0x168] sm:$0xff]
    %v213 = vld [vmem:[#allocation5 + $0x170] sm:$0xff]
    %v214 = vld [vmem:[#allocation5 + $0x178] sm:$0xff]
    %v215 = vld [vmem:[#allocation5 + $0x180] sm:$0xff]
    %v216 = vld [vmem:[#allocation5 + $0x188] sm:$0xff]
    %v217 = vld [vmem:[#allocation5 + $0x190] sm:$0xff]
    %v218 = vld [vmem:[#allocation5 + $0x198] sm:$0xff]
    %v219 = vld [vmem:[#allocation5 + $0x1a0] sm:$0xff]
    %v220 = vld [vmem:[#allocation5 + $0x1a8] sm:$0xff]
    %v221 = vld [vmem:[#allocation5 + $0x1b0] sm:$0xff]
    %v222 = vld [vmem:[#allocation5 + $0x1b8] sm:$0xff]
    %v223 = vld [vmem:[#allocation5 + $0x1c0] sm:$0xff]
    %v224 = vld [vmem:[#allocation5 + $0x1c8] sm:$0xff]
    %v225 = vld [vmem:[#allocation5 + $0x1d0] sm:$0xff]
    %v226 = vld [vmem:[#allocation5 + $0x1d8] sm:$0xff]
    %v227 = vld [vmem:[#allocation5 + $0x1e0] sm:$0xff]
    %v228 = vld [vmem:[#allocation5 + $0x1e8] sm:$0xff]
    %v229 = vld [vmem:[#allocation5 + $0x1f0] sm:$0xff]
    %v230 = vld [vmem:[#allocation5 + $0x1f8] sm:$0xff]
    %v231 = vld [vmem:[#allocation5 + $0x200] sm:$0xff]
    %v232 = vld [vmem:[#allocation5 + $0x208] sm:$0xff]
    %v233 = vld [vmem:[#allocation5 + $0x210] sm:$0xff]
    %v234 = vld [vmem:[#allocation5 + $0x218] sm:$0xff]
    %v235 = vld [vmem:[#allocation5 + $0x220] sm:$0xff]
    %v236 = vld [vmem:[#allocation5 + $0x228] sm:$0xff]
    %v237 = vld [vmem:[#allocation5 + $0x230] sm:$0xff]
    %v238 = vld [vmem:[#allocation5 + $0x238] sm:$0xff]
    %v239 = vld [vmem:[#allocation5 + $0x240] sm:$0xff]
    %v240 = vld [vmem:[#allocation5 + $0x248] sm:$0xff]
    %v241 = vld [vmem:[#allocation5 + $0x250] sm:$0xff]
    %v242 = vld [vmem:[#allocation5 + $0x258] sm:$0xff]
    %v243 = vld [vmem:[#allocation5 + $0x260] sm:$0xff]
    %v244 = vld [vmem:[#allocation5 + $0x268] sm:$0xff]
    %v245 = vld [vmem:[#allocation5 + $0x270] sm:$0xff]
    %v246 = vld [vmem:[#allocation5 + $0x278] sm:$0xff]
    %v247 = vld [vmem:[#allocation5 + $0x280] sm:$0xff]
    %v248 = vld [vmem:[#allocation5 + $0x288] sm:$0xff]
    %v249 = vld [vmem:[#allocation5 + $0x290] sm:$0xff]
    %v250 = vld [vmem:[#allocation5 + $0x298] sm:$0xff]
    %v251 = vld [vmem:[#allocation5 + $0x2a0] sm:$0xff]
    %v252 = vld [vmem:[#allocation5 + $0x2a8] sm:$0xff]
    %v253 = vld [vmem:[#allocation5 + $0x2b0] sm:$0xff]
    %v254 = vld [vmem:[#allocation5 + $0x2b8] sm:$0xff]
    %v255 = vld [vmem:[#allocation5 + $0x2c0] sm:$0xff]
    %v256 = vld [vmem:[#allocation5 + $0x2c8] sm:$0xff]
    %v257 = vld [vmem:[#allocation5 + $0x2d0] sm:$0xff]
    %v258 = vld [vmem:[#allocation5 + $0x2d8] sm:$0xff]
    %v259 = vld [vmem:[#allocation5 + $0x2e0] sm:$0xff]
    %v260 = vld [vmem:[#allocation5 + $0x2e8] sm:$0xff]
    %v261 = vld [vmem:[#allocation5 + $0x2f0] sm:$0xff]
    %v262 = vld [vmem:[#allocation5 + $0x2f8] sm:$0xff]
    %v263 = vld [vmem:[#allocation5 + $0x300] sm:$0xff]
    %v264 = vld [vmem:[#allocation5 + $0x308] sm:$0xff]
    %v265 = vld [vmem:[#allocation5 + $0x310] sm:$0xff]
    %v266 = vld [vmem:[#allocation5 + $0x318] sm:$0xff]
    %v267 = vld [vmem:[#allocation5 + $0x320] sm:$0xff]
    %v268 = vld [vmem:[#allocation5 + $0x328] sm:$0xff]
    %v269 = vld [vmem:[#allocation5 + $0x330] sm:$0xff]
    %v270 = vld [vmem:[#allocation5 + $0x338] sm:$0xff]
    %v271 = vld [vmem:[#allocation5 + $0x340] sm:$0xff]
    %v272 = vld [vmem:[#allocation5 + $0x348] sm:$0xff]
    %v273 = vld [vmem:[#allocation5 + $0x350] sm:$0xff]
    %v274 = vld [vmem:[#allocation5 + $0x358] sm:$0xff]
    %v275 = vld [vmem:[#allocation5 + $0x360] sm:$0xff]
    %v276 = vld [vmem:[#allocation5 + $0x368] sm:$0xff]
    %v277 = vld [vmem:[#allocation5 + $0x370] sm:$0xff]
    %v278 = vld [vmem:[#allocation5 + $0x378] sm:$0xff]
    %v279 = vld [vmem:[#allocation5 + $0x380] sm:$0xff]
    %v280 = vld [vmem:[#allocation5 + $0x388] sm:$0xff]
    %v281 = vld [vmem:[#allocation5 + $0x390] sm:$0xff]
    %v282 = vld [vmem:[#allocation5 + $0x398] sm:$0xff]
    %v283 = vld [vmem:[#allocation5 + $0x3a0] sm:$0xff]
    %v284 = vld [vmem:[#allocation5 + $0x3a8] sm:$0xff]
    %v285 = vld [vmem:[#allocation5 + $0x3b0] sm:$0xff]
    %v286 = vld [vmem:[#allocation5 + $0x3b8] sm:$0xff]
    %v287 = vld [vmem:[#allocation5 + $0x3c0] sm:$0xff]
    %v288 = vld [vmem:[#allocation5 + $0x3c8] sm:$0xff]
    %v289 = vld [vmem:[#allocation5 + $0x3d0] sm:$0xff]
    %v290 = vld [vmem:[#allocation5 + $0x3d8] sm:$0xff]
    %v291 = vld [vmem:[#allocation5 + $0x3e0] sm:$0xff]
    %v292 = vld [vmem:[#allocation5 + $0x3e8] sm:$0xff]
    %v293 = vld [vmem:[#allocation5 + $0x3f0] sm:$0xff]
    %v294 = vld [vmem:[#allocation5 + $0x3f8] sm:$0xff]
    %v295 = vld [vmem:[#allocation5 + $0x400] sm:$0xff]
    %v296 = vld [vmem:[#allocation5 + $0x408] sm:$0xff]
    %v297 = vld [vmem:[#allocation5 + $0x410] sm:$0xff]
    %v298 = vld [vmem:[#allocation5 + $0x418] sm:$0xff]
    %v299 = vld [vmem:[#allocation5 + $0x420] sm:$0xff]
    %v300 = vld [vmem:[#allocation5 + $0x428] sm:$0xff]
    %v301 = vld [vmem:[#allocation5 + $0x430] sm:$0xff]
    %v302 = vld [vmem:[#allocation5 + $0x438] sm:$0xff]
    %v303 = vld [vmem:[#allocation5 + $0x440] sm:$0xff]
    %v304 = vld [vmem:[#allocation5 + $0x448] sm:$0xff]
    %v305 = vld [vmem:[#allocation5 + $0x450] sm:$0xff]
    %v306 = vld [vmem:[#allocation5 + $0x458] sm:$0xff]
    %v307 = vld [vmem:[#allocation5 + $0x460] sm:$0xff]
    %v308 = vld [vmem:[#allocation5 + $0x468] sm:$0xff]
    %v309 = vld [vmem:[#allocation5 + $0x470] sm:$0xff]
    %v310 = vld [vmem:[#allocation5 + $0x478] sm:$0xff]
    %v311 = vld [vmem:[#allocation5 + $0x480] sm:$0xff]
    %v312 = vld [vmem:[#allocation5 + $0x488] sm:$0xff]
    %v313 = vld [vmem:[#allocation5 + $0x490] sm:$0xff]
    %v314 = vld [vmem:[#allocation5 + $0x498] sm:$0xff]
    %v315 = vld [vmem:[#allocation5 + $0x4a0] sm:$0xff]
    %v316 = vld [vmem:[#allocation5 + $0x4a8] sm:$0xff]
    %v317 = vld [vmem:[#allocation5 + $0x4b0] sm:$0xff]
    %v318 = vld [vmem:[#allocation5 + $0x4b8] sm:$0xff]
    %v319 = vld [vmem:[#allocation5 + $0x4c0] sm:$0xff]
    %v320 = vld [vmem:[#allocation5 + $0x4c8] sm:$0xff]
    %v321 = vld [vmem:[#allocation5 + $0x4d0] sm:$0xff]
    %v322 = vld [vmem:[#allocation5 + $0x4d8] sm:$0xff]
    %v323 = vld [vmem:[#allocation5 + $0x4e0] sm:$0xff]
    %v324 = vld [vmem:[#allocation5 + $0x4e8] sm:$0xff]
    %v325 = vld [vmem:[#allocation5 + $0x4f0] sm:$0xff]
    %v326 = vld [vmem:[#allocation5 + $0x4f8] sm:$0xff]
    %v327 = vld [vmem:[#allocation5 + $0x500] sm:$0xff]
    %v328 = vld [vmem:[#allocation5 + $0x508] sm:$0xff]
    %v329 = vld [vmem:[#allocation5 + $0x510] sm:$0xff]
    %v330 = vld [vmem:[#allocation5 + $0x518] sm:$0xff]
    %v331 = vld [vmem:[#allocation5 + $0x520] sm:$0xff]
    %v332 = vld [vmem:[#allocation5 + $0x528] sm:$0xff]
    %v333 = vld [vmem:[#allocation5 + $0x530] sm:$0xff]
    %v334 = vld [vmem:[#allocation5 + $0x538] sm:$0xff]
    %v335 = vld [vmem:[#allocation5 + $0x540] sm:$0xff]
    %v336 = vld [vmem:[#allocation5 + $0x548] sm:$0xff]
    %v337 = vld [vmem:[#allocation5 + $0x550] sm:$0xff]
    %v338 = vld [vmem:[#allocation5 + $0x558] sm:$0xff]
    %v339 = vld [vmem:[#allocation5 + $0x560] sm:$0xff]
    %v340 = vld [vmem:[#allocation5 + $0x568] sm:$0xff]
    %v341 = vld [vmem:[#allocation5 + $0x570] sm:$0xff]
    %v342 = vld [vmem:[#allocation5 + $0x578] sm:$0xff]
    %v343 = vld [vmem:[#allocation5 + $0x580] sm:$0xff]
    %v344 = vld [vmem:[#allocation5 + $0x588] sm:$0xff]
    %v345 = vld [vmem:[#allocation5 + $0x590] sm:$0xff]
    %v346 = vld [vmem:[#allocation5 + $0x598] sm:$0xff]
    %v347 = vld [vmem:[#allocation5 + $0x5a0] sm:$0xff]
    %v348 = vld [vmem:[#allocation5 + $0x5a8] sm:$0xff]
    %v349 = vld [vmem:[#allocation5 + $0x5b0] sm:$0xff]
    %v350 = vld [vmem:[#allocation5 + $0x5b8] sm:$0xff]
    %v351 = vld [vmem:[#allocation5 + $0x5c0] sm:$0xff]
    %v352 = vld [vmem:[#allocation5 + $0x5c8] sm:$0xff]
    %v353 = vld [vmem:[#allocation5 + $0x5d0] sm:$0xff]
    %v354 = vld [vmem:[#allocation5 + $0x5d8] sm:$0xff]
    %v355 = vld [vmem:[#allocation5 + $0x5e0] sm:$0xff]
    %v356 = vld [vmem:[#allocation5 + $0x5e8] sm:$0xff]
    %v357 = vld [vmem:[#allocation5 + $0x5f0] sm:$0xff]
    %v358 = vld [vmem:[#allocation5 + $0x5f8] sm:$0xff]
    %v359 = vld [vmem:[#allocation5 + $0x600] sm:$0xff]
    %v360 = vld [vmem:[#allocation5 + $0x608] sm:$0xff]
    %v361 = vld [vmem:[#allocation5 + $0x610] sm:$0xff]
    %v362 = vld [vmem:[#allocation5 + $0x618] sm:$0xff]
    %v363 = vld [vmem:[#allocation5 + $0x620] sm:$0xff]
    %v364 = vld [vmem:[#allocation5 + $0x628] sm:$0xff]
    %v365 = vld [vmem:[#allocation5 + $0x630] sm:$0xff]
    %v366 = vld [vmem:[#allocation5 + $0x638] sm:$0xff]
    %v367 = vld [vmem:[#allocation5 + $0x640] sm:$0xff]
    %v368 = vld [vmem:[#allocation5 + $0x648] sm:$0xff]
    %v369 = vld [vmem:[#allocation5 + $0x650] sm:$0xff]
    %v370 = vld [vmem:[#allocation5 + $0x658] sm:$0xff]
    %v371 = vld [vmem:[#allocation5 + $0x660] sm:$0xff]
    %v372 = vld [vmem:[#allocation5 + $0x668] sm:$0xff]
    %v373 = vld [vmem:[#allocation5 + $0x670] sm:$0xff]
    %v374 = vld [vmem:[#allocation5 + $0x678] sm:$0xff]
    %v375 = vld [vmem:[#allocation5 + $0x680] sm:$0xff]
    %v376 = vld [vmem:[#allocation5 + $0x688] sm:$0xff]
    %v377 = vld [vmem:[#allocation5 + $0x690] sm:$0xff]
    %v378 = vld [vmem:[#allocation5 + $0x698] sm:$0xff]
    %v379 = vld [vmem:[#allocation5 + $0x6a0] sm:$0xff]
    %v380 = vld [vmem:[#allocation5 + $0x6a8] sm:$0xff]
    %v381 = vld [vmem:[#allocation5 + $0x6b0] sm:$0xff]
    %v382 = vld [vmem:[#allocation5 + $0x6b8] sm:$0xff]
    %v383 = vld [vmem:[#allocation5 + $0x6c0] sm:$0xff]
    %v384 = vld [vmem:[#allocation5 + $0x6c8] sm:$0xff]
    %v385 = vld [vmem:[#allocation5 + $0x6d0] sm:$0xff]
    %v386 = vld [vmem:[#allocation5 + $0x6d8] sm:$0xff]
    %v387 = vld [vmem:[#allocation5 + $0x6e0] sm:$0xff]
    %v388 = vld [vmem:[#allocation5 + $0x6e8] sm:$0xff]
    %v389 = vld [vmem:[#allocation5 + $0x6f0] sm:$0xff]
    %v390 = vld [vmem:[#allocation5 + $0x6f8] sm:$0xff]
    %v391 = vld [vmem:[#allocation5 + $0x700] sm:$0xff]
    %v392 = vld [vmem:[#allocation5 + $0x708] sm:$0xff]
    %v393 = vld [vmem:[#allocation5 + $0x710] sm:$0xff]
    %v394 = vld [vmem:[#allocation5 + $0x718] sm:$0xff]
    %v395 = vld [vmem:[#allocation5 + $0x720] sm:$0xff]
    %v396 = vld [vmem:[#allocation5 + $0x728] sm:$0xff]
    %v397 = vld [vmem:[#allocation5 + $0x730] sm:$0xff]
    %v398 = vld [vmem:[#allocation5 + $0x738] sm:$0xff]
    %v399 = vld [vmem:[#allocation5 + $0x740] sm:$0xff]
    %v400 = vld [vmem:[#allocation5 + $0x748] sm:$0xff]
    %v401 = vld [vmem:[#allocation5 + $0x750] sm:$0xff]
    %v402 = vld [vmem:[#allocation5 + $0x758] sm:$0xff]
    %v403 = vld [vmem:[#allocation5 + $0x760] sm:$0xff]
    %v404 = vld [vmem:[#allocation5 + $0x768] sm:$0xff]
    %v405 = vld [vmem:[#allocation5 + $0x770] sm:$0xff]
    %v406 = vld [vmem:[#allocation5 + $0x778] sm:$0xff]
    %v407 = vld [vmem:[#allocation5 + $0x780] sm:$0xff]
    %v408 = vld [vmem:[#allocation5 + $0x788] sm:$0xff]
    %v409 = vld [vmem:[#allocation5 + $0x790] sm:$0xff]
    %v410 = vld [vmem:[#allocation5 + $0x798] sm:$0xff]
    %v411 = vld [vmem:[#allocation5 + $0x7a0] sm:$0xff]
    %v412 = vld [vmem:[#allocation5 + $0x7a8] sm:$0xff]
    %v413 = vld [vmem:[#allocation5 + $0x7b0] sm:$0xff]
    %v414 = vld [vmem:[#allocation5 + $0x7b8] sm:$0xff]
    %v415 = vld [vmem:[#allocation5 + $0x7c0] sm:$0xff]
    %v416 = vld [vmem:[#allocation5 + $0x7c8] sm:$0xff]
    %v417 = vld [vmem:[#allocation5 + $0x7d0] sm:$0xff]
    %v418 = vld [vmem:[#allocation5 + $0x7d8] sm:$0xff]
    %v419 = vld [vmem:[#allocation5 + $0x7e0] sm:$0xff]
    %v420 = vld [vmem:[#allocation5 + $0x7e8] sm:$0xff]
    %v421 = vld [vmem:[#allocation5 + $0x7f0] sm:$0xff]
    %v422 = vld [vmem:[#allocation5 + $0x7f8] sm:$0xff]
    %v423 = vld [vmem:[#allocation5 + $0x800] sm:$0xff]
    %v424 = vld [vmem:[#allocation5 + $0x808] sm:$0xff]
    %v425 = vld [vmem:[#allocation5 + $0x810] sm:$0xff]
    %v426 = vld [vmem:[#allocation5 + $0x818] sm:$0xff]
    %v427 = vld [vmem:[#allocation5 + $0x820] sm:$0xff]
    %v428 = vld [vmem:[#allocation5 + $0x828] sm:$0xff]
    %v429 = vld [vmem:[#allocation5 + $0x830] sm:$0xff]
    %v430 = vld [vmem:[#allocation5 + $0x838] sm:$0xff]
    %v431 = vld [vmem:[#allocation5 + $0x840] sm:$0xff]
    %v432 = vld [vmem:[#allocation5 + $0x848] sm:$0xff]
    %v433 = vld [vmem:[#allocation5 + $0x850] sm:$0xff]
    %v434 = vld [vmem:[#allocation5 + $0x858] sm:$0xff]
    %v435 = vld [vmem:[#allocation5 + $0x860] sm:$0xff]
    %v436 = vld [vmem:[#allocation5 + $0x868] sm:$0xff]
    %v437 = vld [vmem:[#allocation5 + $0x870] sm:$0xff]
    %v438 = vld [vmem:[#allocation5 + $0x878] sm:$0xff]
    %v439 = vld [vmem:[#allocation5 + $0x880] sm:$0xff]
    %v440 = vld [vmem:[#allocation5 + $0x888] sm:$0xff]
    %v441 = vld [vmem:[#allocation5 + $0x890] sm:$0xff]
    %v442 = vld [vmem:[#allocation5 + $0x898] sm:$0xff]
    %v443 = vld [vmem:[#allocation5 + $0x8a0] sm:$0xff]
    %v444 = vld [vmem:[#allocation5 + $0x8a8] sm:$0xff]
    %v445 = vld [vmem:[#allocation5 + $0x8b0] sm:$0xff]
    %v446 = vld [vmem:[#allocation5 + $0x8b8] sm:$0xff]
    %v447 = vld [vmem:[#allocation5 + $0x8c0] sm:$0xff]
    %v448 = vld [vmem:[#allocation5 + $0x8c8] sm:$0xff]
    %v449 = vld [vmem:[#allocation5 + $0x8d0] sm:$0xff]
    %v450 = vld [vmem:[#allocation5 + $0x8d8] sm:$0xff]
    %v451 = vld [vmem:[#allocation5 + $0x8e0] sm:$0xff]
    %v452 = vld [vmem:[#allocation5 + $0x8e8] sm:$0xff]
    %v453 = vld [vmem:[#allocation5 + $0x8f0] sm:$0xff]
    %v454 = vld [vmem:[#allocation5 + $0x8f8] sm:$0xff]
    %v455 = vld [vmem:[#allocation5 + $0x900] sm:$0xff]
    %v456 = vld [vmem:[#allocation5 + $0x908] sm:$0xff]
    %v457 = vld [vmem:[#allocation5 + $0x910] sm:$0xff]
    %v458 = vld [vmem:[#allocation5 + $0x918] sm:$0xff]
    %v459 = vld [vmem:[#allocation5 + $0x920] sm:$0xff]
    %v460 = vld [vmem:[#allocation5 + $0x928] sm:$0xff]
    %v461 = vld [vmem:[#allocation5 + $0x930] sm:$0xff]
    %v462 = vld [vmem:[#allocation5 + $0x938] sm:$0xff]
    %v463 = vld [vmem:[#allocation5 + $0x940] sm:$0xff]
    %v464 = vld [vmem:[#allocation5 + $0x948] sm:$0xff]
    %v465 = vld [vmem:[#allocation5 + $0x950] sm:$0xff]
    %v466 = vld [vmem:[#allocation5 + $0x958] sm:$0xff]
    %v467 = vld [vmem:[#allocation5 + $0x960] sm:$0xff]
    %v468 = vld [vmem:[#allocation5 + $0x968] sm:$0xff]
    %v469 = vld [vmem:[#allocation5 + $0x970] sm:$0xff]
    %v470 = vld [vmem:[#allocation5 + $0x978] sm:$0xff]
    %v471 = vld [vmem:[#allocation5 + $0x980] sm:$0xff]
    %v472 = vld [vmem:[#allocation5 + $0x988] sm:$0xff]
    %v473 = vld [vmem:[#allocation5 + $0x990] sm:$0xff]
    %v474 = vld [vmem:[#allocation5 + $0x998] sm:$0xff]
    %v475 = vld [vmem:[#allocation5 + $0x9a0] sm:$0xff]
    %v476 = vld [vmem:[#allocation5 + $0x9a8] sm:$0xff]
    %v477 = vld [vmem:[#allocation5 + $0x9b0] sm:$0xff]
    %v478 = vld [vmem:[#allocation5 + $0x9b8] sm:$0xff]
    %v479 = vld [vmem:[#allocation5 + $0x9c0] sm:$0xff]
    %v480 = vld [vmem:[#allocation5 + $0x9c8] sm:$0xff]
    %v481 = vld [vmem:[#allocation5 + $0x9d0] sm:$0xff]
    %v482 = vld [vmem:[#allocation5 + $0x9d8] sm:$0xff]
    %v483 = vld [vmem:[#allocation5 + $0x9e0] sm:$0xff]
    %v484 = vld [vmem:[#allocation5 + $0x9e8] sm:$0xff]
    %v485 = vld [vmem:[#allocation5 + $0x9f0] sm:$0xff]
    %v486 = vld [vmem:[#allocation5 + $0x9f8] sm:$0xff]
    %v487 = vld [vmem:[#allocation5 + $0xa00] sm:$0xff]
    %v488 = vld [vmem:[#allocation5 + $0xa08] sm:$0xff]
    %v489 = vld [vmem:[#allocation5 + $0xa10] sm:$0xff]
    %v490 = vld [vmem:[#allocation5 + $0xa18] sm:$0xff]
    %v491 = vld [vmem:[#allocation5 + $0xa20] sm:$0xff]
    %v492 = vld [vmem:[#allocation5 + $0xa28] sm:$0xff]
    %v493 = vld [vmem:[#allocation5 + $0xa30] sm:$0xff]
    %v494 = vld [vmem:[#allocation5 + $0xa38] sm:$0xff]
    %v495 = vld [vmem:[#allocation5 + $0xa40] sm:$0xff]
    %v496 = vld [vmem:[#allocation5 + $0xa48] sm:$0xff]
    %v497 = vld [vmem:[#allocation5 + $0xa50] sm:$0xff]
    %v498 = vld [vmem:[#allocation5 + $0xa58] sm:$0xff]
    %v499 = vld [vmem:[#allocation5 + $0xa60] sm:$0xff]
    %v500 = vld [vmem:[#allocation5 + $0xa68] sm:$0xff]
    %v501 = vld [vmem:[#allocation5 + $0xa70] sm:$0xff]
    %v502 = vld [vmem:[#allocation5 + $0xa78] sm:$0xff]
    %v503 = vld [vmem:[#allocation5 + $0xa80] sm:$0xff]
    %v504 = vld [vmem:[#allocation5 + $0xa88] sm:$0xff]
    %v505 = vld [vmem:[#allocation5 + $0xa90] sm:$0xff]
    %v506 = vld [vmem:[#allocation5 + $0xa98] sm:$0xff]
    %v507 = vld [vmem:[#allocation5 + $0xaa0] sm:$0xff]
    %v508 = vld [vmem:[#allocation5 + $0xaa8] sm:$0xff]
    %v509 = vld [vmem:[#allocation5 + $0xab0] sm:$0xff]
    %v510 = vld [vmem:[#allocation5 + $0xab8] sm:$0xff]
    %v511 = vld [vmem:[#allocation5 + $0xac0] sm:$0xff]
    %v512 = vld [vmem:[#allocation5 + $0xac8] sm:$0xff]
    %v513 = vld [vmem:[#allocation5 + $0xad0] sm:$0xff]
    %v514 = vld [vmem:[#allocation5 + $0xad8] sm:$0xff]
    %v515 = vld [vmem:[#allocation5 + $0xae0] sm:$0xff]
    %v516 = vld [vmem:[#allocation5 + $0xae8] sm:$0xff]
    %v517 = vld [vmem:[#allocation5 + $0xaf0] sm:$0xff]
    %v518 = vld [vmem:[#allocation5 + $0xaf8] sm:$0xff]
    %v519 = vld [vmem:[#allocation5 + $0xb00] sm:$0xff]
    %v520 = vld [vmem:[#allocation5 + $0xb08] sm:$0xff]
    %v521 = vld [vmem:[#allocation5 + $0xb10] sm:$0xff]
    %v522 = vld [vmem:[#allocation5 + $0xb18] sm:$0xff]
    %v523 = vld [vmem:[#allocation5 + $0xb20] sm:$0xff]
    %v524 = vld [vmem:[#allocation5 + $0xb28] sm:$0xff]
    %v525 = vld [vmem:[#allocation5 + $0xb30] sm:$0xff]
    %v526 = vld [vmem:[#allocation5 + $0xb38] sm:$0xff]
    %v527 = vld [vmem:[#allocation5 + $0xb40] sm:$0xff]
    %v528 = vld [vmem:[#allocation5 + $0xb48] sm:$0xff]
    %v529 = vld [vmem:[#allocation5 + $0xb50] sm:$0xff]
    %v530 = vld [vmem:[#allocation5 + $0xb58] sm:$0xff]
    %v531 = vld [vmem:[#allocation5 + $0xb60] sm:$0xff]
    %v532 = vld [vmem:[#allocation5 + $0xb68] sm:$0xff]
    %v533 = vld [vmem:[#allocation5 + $0xb70] sm:$0xff]
    %v534 = vld [vmem:[#allocation5 + $0xb78] sm:$0xff]
    %v535 = vld [vmem:[#allocation5 + $0xb80] sm:$0xff]
    %v536 = vld [vmem:[#allocation5 + $0xb88] sm:$0xff]
    %v537 = vld [vmem:[#allocation5 + $0xb90] sm:$0xff]
    %v538 = vld [vmem:[#allocation5 + $0xb98] sm:$0xff]
    %v539 = vld [vmem:[#allocation5 + $0xba0] sm:$0xff]
    %v540 = vld [vmem:[#allocation5 + $0xba8] sm:$0xff]
    %v541 = vld [vmem:[#allocation5 + $0xbb0] sm:$0xff]
    %v542 = vld [vmem:[#allocation5 + $0xbb8] sm:$0xff]
    %v543 = vld [vmem:[#allocation5 + $0xbc0] sm:$0xff]
    %v544 = vld [vmem:[#allocation5 + $0xbc8] sm:$0xff]
    %v545 = vld [vmem:[#allocation5 + $0xbd0] sm:$0xff]
    %v546 = vld [vmem:[#allocation5 + $0xbd8] sm:$0xff]
    %v547 = vld [vmem:[#allocation5 + $0xbe0] sm:$0xff]
    %v548 = vld [vmem:[#allocation5 + $0xbe8] sm:$0xff]
    %v549 = vld [vmem:[#allocation5 + $0xbf0] sm:$0xff]
    %v550 = vld [vmem:[#allocation5 + $0xbf8] sm:$0xff]
    %v551 = vld [vmem:[#allocation7] sm:$0xf]
    %v553 = vperm.slane %v551, 0
    %v554 = vperm.slane %v551, 1
    %v555 = vperm.slane %v551, 2
    %v556 = vperm.slane %v551, 3
    %v945 = vunpack.c.l.b16 %v167
    %v946 = vunpack.c.h.b16 %v167
    %v947 = vunpack.c.l.b16 %v168
    %v948 = vunpack.c.h.b16 %v168
    %v949 = vunpack.c.l.b16 %v169
    %v950 = vunpack.c.h.b16 %v169
    %v951 = vunpack.c.l.b16 %v170
    %v952 = vunpack.c.h.b16 %v170
    %v953 = vunpack.c.l.b16 %v171
    %v954 = vunpack.c.h.b16 %v171
    %v955 = vunpack.c.l.b16 %v172
    %v956 = vunpack.c.h.b16 %v172
    %v957 = vunpack.c.l.b16 %v173
    %v958 = vunpack.c.h.b16 %v173
    %v959 = vunpack.c.l.b16 %v174
    %v960 = vunpack.c.h.b16 %v174
    %v961 = vunpack.c.l.b16 %v175
    %v962 = vunpack.c.h.b16 %v175
    %v963 = vunpack.c.l.b16 %v176
    %v964 = vunpack.c.h.b16 %v176
    %v965 = vunpack.c.l.b16 %v177
    %v966 = vunpack.c.h.b16 %v177
    %v967 = vunpack.c.l.b16 %v178
    %v968 = vunpack.c.h.b16 %v178
    %v969 = vunpack.c.l.b16 %v179
    %v970 = vunpack.c.h.b16 %v179
    %v971 = vunpack.c.l.b16 %v180
    %v972 = vunpack.c.h.b16 %v180
    %v973 = vunpack.c.l.b16 %v181
    %v974 = vunpack.c.h.b16 %v181
    %v975 = vunpack.c.l.b16 %v182
    %v976 = vunpack.c.h.b16 %v182
    %v977 = vunpack.c.l.b16 %v183
    %v978 = vunpack.c.h.b16 %v183
    %v979 = vunpack.c.l.b16 %v184
    %v980 = vunpack.c.h.b16 %v184
    %v981 = vunpack.c.l.b16 %v185
    %v982 = vunpack.c.h.b16 %v185
    %v983 = vunpack.c.l.b16 %v186
    %v984 = vunpack.c.h.b16 %v186
    %v985 = vunpack.c.l.b16 %v187
    %v986 = vunpack.c.h.b16 %v187
    %v987 = vunpack.c.l.b16 %v188
    %v988 = vunpack.c.h.b16 %v188
    %v989 = vunpack.c.l.b16 %v189
    %v990 = vunpack.c.h.b16 %v189
    %v991 = vunpack.c.l.b16 %v190
    %v992 = vunpack.c.h.b16 %v190
    %v993 = vunpack.c.l.b16 %v191
    %v994 = vunpack.c.h.b16 %v191
    %v995 = vunpack.c.l.b16 %v192
    %v996 = vunpack.c.h.b16 %v192
    %v997 = vunpack.c.l.b16 %v193
    %v998 = vunpack.c.h.b16 %v193
    %v999 = vunpack.c.l.b16 %v194
    %v1000 = vunpack.c.h.b16 %v194
    %v1001 = vunpack.c.l.b16 %v195
    %v1002 = vunpack.c.h.b16 %v195
    %v1003 = vunpack.c.l.b16 %v196
    %v1004 = vunpack.c.h.b16 %v196
    %v1005 = vunpack.c.l.b16 %v197
    %v1006 = vunpack.c.h.b16 %v197
    %v1007 = vunpack.c.l.b16 %v198
    %v1008 = vunpack.c.h.b16 %v198
    %v1009 = vunpack.c.l.b16 %v199
    %v1010 = vunpack.c.h.b16 %v199
    %v1011 = vunpack.c.l.b16 %v200
    %v1012 = vunpack.c.h.b16 %v200
    %v1013 = vunpack.c.l.b16 %v201
    %v1014 = vunpack.c.h.b16 %v201
    %v1015 = vunpack.c.l.b16 %v202
    %v1016 = vunpack.c.h.b16 %v202
    %v1017 = vunpack.c.l.b16 %v203
    %v1018 = vunpack.c.h.b16 %v203
    %v1019 = vunpack.c.l.b16 %v204
    %v1020 = vunpack.c.h.b16 %v204
    %v1021 = vunpack.c.l.b16 %v205
    %v1022 = vunpack.c.h.b16 %v205
    %v1023 = vunpack.c.l.b16 %v206
    %v1024 = vunpack.c.h.b16 %v206
    %v1025 = vunpack.c.l.b16 %v207
    %v1026 = vunpack.c.h.b16 %v207
    %v1027 = vunpack.c.l.b16 %v208
    %v1028 = vunpack.c.h.b16 %v208
    %v1029 = vunpack.c.l.b16 %v209
    %v1030 = vunpack.c.h.b16 %v209
    %v1031 = vunpack.c.l.b16 %v210
    %v1032 = vunpack.c.h.b16 %v210
    %v1033 = vunpack.c.l.b16 %v211
    %v1034 = vunpack.c.h.b16 %v211
    %v1035 = vunpack.c.l.b16 %v212
    %v1036 = vunpack.c.h.b16 %v212
    %v1037 = vunpack.c.l.b16 %v213
    %v1038 = vunpack.c.h.b16 %v213
    %v1039 = vunpack.c.l.b16 %v214
    %v1040 = vunpack.c.h.b16 %v214
    %v1041 = vunpack.c.l.b16 %v215
    %v1042 = vunpack.c.h.b16 %v215
    %v1043 = vunpack.c.l.b16 %v216
    %v1044 = vunpack.c.h.b16 %v216
    %v1045 = vunpack.c.l.b16 %v217
    %v1046 = vunpack.c.h.b16 %v217
    %v1047 = vunpack.c.l.b16 %v218
    %v1048 = vunpack.c.h.b16 %v218
    %v1049 = vunpack.c.l.b16 %v219
    %v1050 = vunpack.c.h.b16 %v219
    %v1051 = vunpack.c.l.b16 %v220
    %v1052 = vunpack.c.h.b16 %v220
    %v1053 = vunpack.c.l.b16 %v221
    %v1054 = vunpack.c.h.b16 %v221
    %v1055 = vunpack.c.l.b16 %v222
    %v1056 = vunpack.c.h.b16 %v222
    %v1057 = vunpack.c.l.b16 %v223
    %v1058 = vunpack.c.h.b16 %v223
    %v1059 = vunpack.c.l.b16 %v224
    %v1060 = vunpack.c.h.b16 %v224
    %v1061 = vunpack.c.l.b16 %v225
    %v1062 = vunpack.c.h.b16 %v225
    %v1063 = vunpack.c.l.b16 %v226
    %v1064 = vunpack.c.h.b16 %v226
    %v1065 = vunpack.c.l.b16 %v227
    %v1066 = vunpack.c.h.b16 %v227
    %v1067 = vunpack.c.l.b16 %v228
    %v1068 = vunpack.c.h.b16 %v228
    %v1069 = vunpack.c.l.b16 %v229
    %v1070 = vunpack.c.h.b16 %v229
    %v1071 = vunpack.c.l.b16 %v230
    %v1072 = vunpack.c.h.b16 %v230
    %v1073 = vunpack.c.l.b16 %v231
    %v1074 = vunpack.c.h.b16 %v231
    %v1075 = vunpack.c.l.b16 %v232
    %v1076 = vunpack.c.h.b16 %v232
    %v1077 = vunpack.c.l.b16 %v233
    %v1078 = vunpack.c.h.b16 %v233
    %v1079 = vunpack.c.l.b16 %v234
    %v1080 = vunpack.c.h.b16 %v234
    %v1081 = vunpack.c.l.b16 %v235
    %v1082 = vunpack.c.h.b16 %v235
    %v1083 = vunpack.c.l.b16 %v236
    %v1084 = vunpack.c.h.b16 %v236
    %v1085 = vunpack.c.l.b16 %v237
    %v1086 = vunpack.c.h.b16 %v237
    %v1087 = vunpack.c.l.b16 %v238
    %v1088 = vunpack.c.h.b16 %v238
    %v1089 = vunpack.c.l.b16 %v239
    %v1090 = vunpack.c.h.b16 %v239
    %v1091 = vunpack.c.l.b16 %v240
    %v1092 = vunpack.c.h.b16 %v240
    %v1093 = vunpack.c.l.b16 %v241
    %v1094 = vunpack.c.h.b16 %v241
    %v1095 = vunpack.c.l.b16 %v242
    %v1096 = vunpack.c.h.b16 %v242
    %v1097 = vunpack.c.l.b16 %v243
    %v1098 = vunpack.c.h.b16 %v243
    %v1099 = vunpack.c.l.b16 %v244
    %v1100 = vunpack.c.h.b16 %v244
    %v1101 = vunpack.c.l.b16 %v245
    %v1102 = vunpack.c.h.b16 %v245
    %v1103 = vunpack.c.l.b16 %v246
    %v1104 = vunpack.c.h.b16 %v246
    %v1105 = vunpack.c.l.b16 %v247
    %v1106 = vunpack.c.h.b16 %v247
    %v1107 = vunpack.c.l.b16 %v248
    %v1108 = vunpack.c.h.b16 %v248
    %v1109 = vunpack.c.l.b16 %v249
    %v1110 = vunpack.c.h.b16 %v249
    %v1111 = vunpack.c.l.b16 %v250
    %v1112 = vunpack.c.h.b16 %v250
    %v1113 = vunpack.c.l.b16 %v251
    %v1114 = vunpack.c.h.b16 %v251
    %v1115 = vunpack.c.l.b16 %v252
    %v1116 = vunpack.c.h.b16 %v252
    %v1117 = vunpack.c.l.b16 %v253
    %v1118 = vunpack.c.h.b16 %v253
    %v1119 = vunpack.c.l.b16 %v254
    %v1120 = vunpack.c.h.b16 %v254
    %v1121 = vunpack.c.l.b16 %v255
    %v1122 = vunpack.c.h.b16 %v255
    %v1123 = vunpack.c.l.b16 %v256
    %v1124 = vunpack.c.h.b16 %v256
    %v1125 = vunpack.c.l.b16 %v257
    %v1126 = vunpack.c.h.b16 %v257
    %v1127 = vunpack.c.l.b16 %v258
    %v1128 = vunpack.c.h.b16 %v258
    %v1129 = vunpack.c.l.b16 %v259
    %v1130 = vunpack.c.h.b16 %v259
    %v1131 = vunpack.c.l.b16 %v260
    %v1132 = vunpack.c.h.b16 %v260
    %v1133 = vunpack.c.l.b16 %v261
    %v1134 = vunpack.c.h.b16 %v261
    %v1135 = vunpack.c.l.b16 %v262
    %v1136 = vunpack.c.h.b16 %v262
    %v1137 = vunpack.c.l.b16 %v263
    %v1138 = vunpack.c.h.b16 %v263
    %v1139 = vunpack.c.l.b16 %v264
    %v1140 = vunpack.c.h.b16 %v264
    %v1141 = vunpack.c.l.b16 %v265
    %v1142 = vunpack.c.h.b16 %v265
    %v1143 = vunpack.c.l.b16 %v266
    %v1144 = vunpack.c.h.b16 %v266
    %v1145 = vunpack.c.l.b16 %v267
    %v1146 = vunpack.c.h.b16 %v267
    %v1147 = vunpack.c.l.b16 %v268
    %v1148 = vunpack.c.h.b16 %v268
    %v1149 = vunpack.c.l.b16 %v269
    %v1150 = vunpack.c.h.b16 %v269
    %v1151 = vunpack.c.l.b16 %v270
    %v1152 = vunpack.c.h.b16 %v270
    %v1153 = vunpack.c.l.b16 %v271
    %v1154 = vunpack.c.h.b16 %v271
    %v1155 = vunpack.c.l.b16 %v272
    %v1156 = vunpack.c.h.b16 %v272
    %v1157 = vunpack.c.l.b16 %v273
    %v1158 = vunpack.c.h.b16 %v273
    %v1159 = vunpack.c.l.b16 %v274
    %v1160 = vunpack.c.h.b16 %v274
    %v1161 = vunpack.c.l.b16 %v275
    %v1162 = vunpack.c.h.b16 %v275
    %v1163 = vunpack.c.l.b16 %v276
    %v1164 = vunpack.c.h.b16 %v276
    %v1165 = vunpack.c.l.b16 %v277
    %v1166 = vunpack.c.h.b16 %v277
    %v1167 = vunpack.c.l.b16 %v278
    %v1168 = vunpack.c.h.b16 %v278
    %v1169 = vunpack.c.l.b16 %v279
    %v1170 = vunpack.c.h.b16 %v279
    %v1171 = vunpack.c.l.b16 %v280
    %v1172 = vunpack.c.h.b16 %v280
    %v1173 = vunpack.c.l.b16 %v281
    %v1174 = vunpack.c.h.b16 %v281
    %v1175 = vunpack.c.l.b16 %v282
    %v1176 = vunpack.c.h.b16 %v282
    %v1177 = vunpack.c.l.b16 %v283
    %v1178 = vunpack.c.h.b16 %v283
    %v1179 = vunpack.c.l.b16 %v284
    %v1180 = vunpack.c.h.b16 %v284
    %v1181 = vunpack.c.l.b16 %v285
    %v1182 = vunpack.c.h.b16 %v285
    %v1183 = vunpack.c.l.b16 %v286
    %v1184 = vunpack.c.h.b16 %v286
    %v1185 = vunpack.c.l.b16 %v287
    %v1186 = vunpack.c.h.b16 %v287
    %v1187 = vunpack.c.l.b16 %v288
    %v1188 = vunpack.c.h.b16 %v288
    %v1189 = vunpack.c.l.b16 %v289
    %v1190 = vunpack.c.h.b16 %v289
    %v1191 = vunpack.c.l.b16 %v290
    %v1192 = vunpack.c.h.b16 %v290
    %v1193 = vunpack.c.l.b16 %v291
    %v1194 = vunpack.c.h.b16 %v291
    %v1195 = vunpack.c.l.b16 %v292
    %v1196 = vunpack.c.h.b16 %v292
    %v1197 = vunpack.c.l.b16 %v293
    %v1198 = vunpack.c.h.b16 %v293
    %v1199 = vunpack.c.l.b16 %v294
    %v1200 = vunpack.c.h.b16 %v294
    %v1201 = vunpack.c.l.b16 %v295
    %v1202 = vunpack.c.h.b16 %v295
    %v1203 = vunpack.c.l.b16 %v296
    %v1204 = vunpack.c.h.b16 %v296
    %v1205 = vunpack.c.l.b16 %v297
    %v1206 = vunpack.c.h.b16 %v297
    %v1207 = vunpack.c.l.b16 %v298
    %v1208 = vunpack.c.h.b16 %v298
    %v1209 = vunpack.c.l.b16 %v299
    %v1210 = vunpack.c.h.b16 %v299
    %v1211 = vunpack.c.l.b16 %v300
    %v1212 = vunpack.c.h.b16 %v300
    %v1213 = vunpack.c.l.b16 %v301
    %v1214 = vunpack.c.h.b16 %v301
    %v1215 = vunpack.c.l.b16 %v302
    %v1216 = vunpack.c.h.b16 %v302
    %v1217 = vunpack.c.l.b16 %v303
    %v1218 = vunpack.c.h.b16 %v303
    %v1219 = vunpack.c.l.b16 %v304
    %v1220 = vunpack.c.h.b16 %v304
    %v1221 = vunpack.c.l.b16 %v305
    %v1222 = vunpack.c.h.b16 %v305
    %v1223 = vunpack.c.l.b16 %v306
    %v1224 = vunpack.c.h.b16 %v306
    %v1225 = vunpack.c.l.b16 %v307
    %v1226 = vunpack.c.h.b16 %v307
    %v1227 = vunpack.c.l.b16 %v308
    %v1228 = vunpack.c.h.b16 %v308
    %v1229 = vunpack.c.l.b16 %v309
    %v1230 = vunpack.c.h.b16 %v309
    %v1231 = vunpack.c.l.b16 %v310
    %v1232 = vunpack.c.h.b16 %v310
    %v1233 = vunpack.c.l.b16 %v311
    %v1234 = vunpack.c.h.b16 %v311
    %v1235 = vunpack.c.l.b16 %v312
    %v1236 = vunpack.c.h.b16 %v312
    %v1237 = vunpack.c.l.b16 %v313
    %v1238 = vunpack.c.h.b16 %v313
    %v1239 = vunpack.c.l.b16 %v314
    %v1240 = vunpack.c.h.b16 %v314
    %v1241 = vunpack.c.l.b16 %v315
    %v1242 = vunpack.c.h.b16 %v315
    %v1243 = vunpack.c.l.b16 %v316
    %v1244 = vunpack.c.h.b16 %v316
    %v1245 = vunpack.c.l.b16 %v317
    %v1246 = vunpack.c.h.b16 %v317
    %v1247 = vunpack.c.l.b16 %v318
    %v1248 = vunpack.c.h.b16 %v318
    %v1249 = vunpack.c.l.b16 %v319
    %v1250 = vunpack.c.h.b16 %v319
    %v1251 = vunpack.c.l.b16 %v320
    %v1252 = vunpack.c.h.b16 %v320
    %v1253 = vunpack.c.l.b16 %v321
    %v1254 = vunpack.c.h.b16 %v321
    %v1255 = vunpack.c.l.b16 %v322
    %v1256 = vunpack.c.h.b16 %v322
    %v1257 = vunpack.c.l.b16 %v323
    %v1258 = vunpack.c.h.b16 %v323
    %v1259 = vunpack.c.l.b16 %v324
    %v1260 = vunpack.c.h.b16 %v324
    %v1261 = vunpack.c.l.b16 %v325
    %v1262 = vunpack.c.h.b16 %v325
    %v1263 = vunpack.c.l.b16 %v326
    %v1264 = vunpack.c.h.b16 %v326
    %v1265 = vunpack.c.l.b16 %v327
    %v1266 = vunpack.c.h.b16 %v327
    %v1267 = vunpack.c.l.b16 %v328
    %v1268 = vunpack.c.h.b16 %v328
    %v1269 = vunpack.c.l.b16 %v329
    %v1270 = vunpack.c.h.b16 %v329
    %v1271 = vunpack.c.l.b16 %v330
    %v1272 = vunpack.c.h.b16 %v330
    %v1273 = vunpack.c.l.b16 %v331
    %v1274 = vunpack.c.h.b16 %v331
    %v1275 = vunpack.c.l.b16 %v332
    %v1276 = vunpack.c.h.b16 %v332
    %v1277 = vunpack.c.l.b16 %v333
    %v1278 = vunpack.c.h.b16 %v333
    %v1279 = vunpack.c.l.b16 %v334
    %v1280 = vunpack.c.h.b16 %v334
    %v1281 = vunpack.c.l.b16 %v335
    %v1282 = vunpack.c.h.b16 %v335
    %v1283 = vunpack.c.l.b16 %v336
    %v1284 = vunpack.c.h.b16 %v336
    %v1285 = vunpack.c.l.b16 %v337
    %v1286 = vunpack.c.h.b16 %v337
    %v1287 = vunpack.c.l.b16 %v338
    %v1288 = vunpack.c.h.b16 %v338
    %v1289 = vunpack.c.l.b16 %v339
    %v1290 = vunpack.c.h.b16 %v339
    %v1291 = vunpack.c.l.b16 %v340
    %v1292 = vunpack.c.h.b16 %v340
    %v1293 = vunpack.c.l.b16 %v341
    %v1294 = vunpack.c.h.b16 %v341
    %v1295 = vunpack.c.l.b16 %v342
    %v1296 = vunpack.c.h.b16 %v342
    %v1297 = vunpack.c.l.b16 %v343
    %v1298 = vunpack.c.h.b16 %v343
    %v1299 = vunpack.c.l.b16 %v344
    %v1300 = vunpack.c.h.b16 %v344
    %v1301 = vunpack.c.l.b16 %v345
    %v1302 = vunpack.c.h.b16 %v345
    %v1303 = vunpack.c.l.b16 %v346
    %v1304 = vunpack.c.h.b16 %v346
    %v1305 = vunpack.c.l.b16 %v347
    %v1306 = vunpack.c.h.b16 %v347
    %v1307 = vunpack.c.l.b16 %v348
    %v1308 = vunpack.c.h.b16 %v348
    %v1309 = vunpack.c.l.b16 %v349
    %v1310 = vunpack.c.h.b16 %v349
    %v1311 = vunpack.c.l.b16 %v350
    %v1312 = vunpack.c.h.b16 %v350
    %v1313 = vunpack.c.l.b16 %v351
    %v1314 = vunpack.c.h.b16 %v351
    %v1315 = vunpack.c.l.b16 %v352
    %v1316 = vunpack.c.h.b16 %v352
    %v1317 = vunpack.c.l.b16 %v353
    %v1318 = vunpack.c.h.b16 %v353
    %v1319 = vunpack.c.l.b16 %v354
    %v1320 = vunpack.c.h.b16 %v354
    %v1321 = vunpack.c.l.b16 %v355
    %v1322 = vunpack.c.h.b16 %v355
    %v1323 = vunpack.c.l.b16 %v356
    %v1324 = vunpack.c.h.b16 %v356
    %v1325 = vunpack.c.l.b16 %v357
    %v1326 = vunpack.c.h.b16 %v357
    %v1327 = vunpack.c.l.b16 %v358
    %v1328 = vunpack.c.h.b16 %v358
    %v1329 = vunpack.c.l.b16 %v359
    %v1330 = vunpack.c.h.b16 %v359
    %v1331 = vunpack.c.l.b16 %v360
    %v1332 = vunpack.c.h.b16 %v360
    %v1333 = vunpack.c.l.b16 %v361
    %v1334 = vunpack.c.h.b16 %v361
    %v1335 = vunpack.c.l.b16 %v362
    %v1336 = vunpack.c.h.b16 %v362
    %v1337 = vunpack.c.l.b16 %v363
    %v1338 = vunpack.c.h.b16 %v363
    %v1339 = vunpack.c.l.b16 %v364
    %v1340 = vunpack.c.h.b16 %v364
    %v1341 = vunpack.c.l.b16 %v365
    %v1342 = vunpack.c.h.b16 %v365
    %v1343 = vunpack.c.l.b16 %v366
    %v1344 = vunpack.c.h.b16 %v366
    %v1345 = vunpack.c.l.b16 %v367
    %v1346 = vunpack.c.h.b16 %v367
    %v1347 = vunpack.c.l.b16 %v368
    %v1348 = vunpack.c.h.b16 %v368
    %v1349 = vunpack.c.l.b16 %v369
    %v1350 = vunpack.c.h.b16 %v369
    %v1351 = vunpack.c.l.b16 %v370
    %v1352 = vunpack.c.h.b16 %v370
    %v1353 = vunpack.c.l.b16 %v371
    %v1354 = vunpack.c.h.b16 %v371
    %v1355 = vunpack.c.l.b16 %v372
    %v1356 = vunpack.c.h.b16 %v372
    %v1357 = vunpack.c.l.b16 %v373
    %v1358 = vunpack.c.h.b16 %v373
    %v1359 = vunpack.c.l.b16 %v374
    %v1360 = vunpack.c.h.b16 %v374
    %v1361 = vunpack.c.l.b16 %v375
    %v1362 = vunpack.c.h.b16 %v375
    %v1363 = vunpack.c.l.b16 %v376
    %v1364 = vunpack.c.h.b16 %v376
    %v1365 = vunpack.c.l.b16 %v377
    %v1366 = vunpack.c.h.b16 %v377
    %v1367 = vunpack.c.l.b16 %v378
    %v1368 = vunpack.c.h.b16 %v378
    %v1369 = vunpack.c.l.b16 %v379
    %v1370 = vunpack.c.h.b16 %v379
    %v1371 = vunpack.c.l.b16 %v380
    %v1372 = vunpack.c.h.b16 %v380
    %v1373 = vunpack.c.l.b16 %v381
    %v1374 = vunpack.c.h.b16 %v381
    %v1375 = vunpack.c.l.b16 %v382
    %v1376 = vunpack.c.h.b16 %v382
    %v1377 = vunpack.c.l.b16 %v383
    %v1378 = vunpack.c.h.b16 %v383
    %v1379 = vunpack.c.l.b16 %v384
    %v1380 = vunpack.c.h.b16 %v384
    %v1381 = vunpack.c.l.b16 %v385
    %v1382 = vunpack.c.h.b16 %v385
    %v1383 = vunpack.c.l.b16 %v386
    %v1384 = vunpack.c.h.b16 %v386
    %v1385 = vunpack.c.l.b16 %v387
    %v1386 = vunpack.c.h.b16 %v387
    %v1387 = vunpack.c.l.b16 %v388
    %v1388 = vunpack.c.h.b16 %v388
    %v1389 = vunpack.c.l.b16 %v389
    %v1390 = vunpack.c.h.b16 %v389
    %v1391 = vunpack.c.l.b16 %v390
    %v1392 = vunpack.c.h.b16 %v390
    %v1393 = vunpack.c.l.b16 %v391
    %v1394 = vunpack.c.h.b16 %v391
    %v1395 = vunpack.c.l.b16 %v392
    %v1396 = vunpack.c.h.b16 %v392
    %v1397 = vunpack.c.l.b16 %v393
    %v1398 = vunpack.c.h.b16 %v393
    %v1399 = vunpack.c.l.b16 %v394
    %v1400 = vunpack.c.h.b16 %v394
    %v1401 = vunpack.c.l.b16 %v395
    %v1402 = vunpack.c.h.b16 %v395
    %v1403 = vunpack.c.l.b16 %v396
    %v1404 = vunpack.c.h.b16 %v396
    %v1405 = vunpack.c.l.b16 %v397
    %v1406 = vunpack.c.h.b16 %v397
    %v1407 = vunpack.c.l.b16 %v398
    %v1408 = vunpack.c.h.b16 %v398
    %v1409 = vunpack.c.l.b16 %v399
    %v1410 = vunpack.c.h.b16 %v399
    %v1411 = vunpack.c.l.b16 %v400
    %v1412 = vunpack.c.h.b16 %v400
    %v1413 = vunpack.c.l.b16 %v401
    %v1414 = vunpack.c.h.b16 %v401
    %v1415 = vunpack.c.l.b16 %v402
    %v1416 = vunpack.c.h.b16 %v402
    %v1417 = vunpack.c.l.b16 %v403
    %v1418 = vunpack.c.h.b16 %v403
    %v1419 = vunpack.c.l.b16 %v404
    %v1420 = vunpack.c.h.b16 %v404
    %v1421 = vunpack.c.l.b16 %v405
    %v1422 = vunpack.c.h.b16 %v405
    %v1423 = vunpack.c.l.b16 %v406
    %v1424 = vunpack.c.h.b16 %v406
    %v1425 = vunpack.c.l.b16 %v407
    %v1426 = vunpack.c.h.b16 %v407
    %v1427 = vunpack.c.l.b16 %v408
    %v1428 = vunpack.c.h.b16 %v408
    %v1429 = vunpack.c.l.b16 %v409
    %v1430 = vunpack.c.h.b16 %v409
    %v1431 = vunpack.c.l.b16 %v410
    %v1432 = vunpack.c.h.b16 %v410
    %v1433 = vunpack.c.l.b16 %v411
    %v1434 = vunpack.c.h.b16 %v411
    %v1435 = vunpack.c.l.b16 %v412
    %v1436 = vunpack.c.h.b16 %v412
    %v1437 = vunpack.c.l.b16 %v413
    %v1438 = vunpack.c.h.b16 %v413
    %v1439 = vunpack.c.l.b16 %v414
    %v1440 = vunpack.c.h.b16 %v414
    %v1441 = vunpack.c.l.b16 %v415
    %v1442 = vunpack.c.h.b16 %v415
    %v1443 = vunpack.c.l.b16 %v416
    %v1444 = vunpack.c.h.b16 %v416
    %v1445 = vunpack.c.l.b16 %v417
    %v1446 = vunpack.c.h.b16 %v417
    %v1447 = vunpack.c.l.b16 %v418
    %v1448 = vunpack.c.h.b16 %v418
    %v1449 = vunpack.c.l.b16 %v419
    %v1450 = vunpack.c.h.b16 %v419
    %v1451 = vunpack.c.l.b16 %v420
    %v1452 = vunpack.c.h.b16 %v420
    %v1453 = vunpack.c.l.b16 %v421
    %v1454 = vunpack.c.h.b16 %v421
    %v1455 = vunpack.c.l.b16 %v422
    %v1456 = vunpack.c.h.b16 %v422
    %v1457 = vunpack.c.l.b16 %v423
    %v1458 = vunpack.c.h.b16 %v423
    %v1459 = vunpack.c.l.b16 %v424
    %v1460 = vunpack.c.h.b16 %v424
    %v1461 = vunpack.c.l.b16 %v425
    %v1462 = vunpack.c.h.b16 %v425
    %v1463 = vunpack.c.l.b16 %v426
    %v1464 = vunpack.c.h.b16 %v426
    %v1465 = vunpack.c.l.b16 %v427
    %v1466 = vunpack.c.h.b16 %v427
    %v1467 = vunpack.c.l.b16 %v428
    %v1468 = vunpack.c.h.b16 %v428
    %v1469 = vunpack.c.l.b16 %v429
    %v1470 = vunpack.c.h.b16 %v429
    %v1471 = vunpack.c.l.b16 %v430
    %v1472 = vunpack.c.h.b16 %v430
    %v1473 = vunpack.c.l.b16 %v431
    %v1474 = vunpack.c.h.b16 %v431
    %v1475 = vunpack.c.l.b16 %v432
    %v1476 = vunpack.c.h.b16 %v432
    %v1477 = vunpack.c.l.b16 %v433
    %v1478 = vunpack.c.h.b16 %v433
    %v1479 = vunpack.c.l.b16 %v434
    %v1480 = vunpack.c.h.b16 %v434
    %v1481 = vunpack.c.l.b16 %v435
    %v1482 = vunpack.c.h.b16 %v435
    %v1483 = vunpack.c.l.b16 %v436
    %v1484 = vunpack.c.h.b16 %v436
    %v1485 = vunpack.c.l.b16 %v437
    %v1486 = vunpack.c.h.b16 %v437
    %v1487 = vunpack.c.l.b16 %v438
    %v1488 = vunpack.c.h.b16 %v438
    %v1489 = vunpack.c.l.b16 %v439
    %v1490 = vunpack.c.h.b16 %v439
    %v1491 = vunpack.c.l.b16 %v440
    %v1492 = vunpack.c.h.b16 %v440
    %v1493 = vunpack.c.l.b16 %v441
    %v1494 = vunpack.c.h.b16 %v441
    %v1495 = vunpack.c.l.b16 %v442
    %v1496 = vunpack.c.h.b16 %v442
    %v1497 = vunpack.c.l.b16 %v443
    %v1498 = vunpack.c.h.b16 %v443
    %v1499 = vunpack.c.l.b16 %v444
    %v1500 = vunpack.c.h.b16 %v444
    %v1501 = vunpack.c.l.b16 %v445
    %v1502 = vunpack.c.h.b16 %v445
    %v1503 = vunpack.c.l.b16 %v446
    %v1504 = vunpack.c.h.b16 %v446
    %v1505 = vunpack.c.l.b16 %v447
    %v1506 = vunpack.c.h.b16 %v447
    %v1507 = vunpack.c.l.b16 %v448
    %v1508 = vunpack.c.h.b16 %v448
    %v1509 = vunpack.c.l.b16 %v449
    %v1510 = vunpack.c.h.b16 %v449
    %v1511 = vunpack.c.l.b16 %v450
    %v1512 = vunpack.c.h.b16 %v450
    %v1513 = vunpack.c.l.b16 %v451
    %v1514 = vunpack.c.h.b16 %v451
    %v1515 = vunpack.c.l.b16 %v452
    %v1516 = vunpack.c.h.b16 %v452
    %v1517 = vunpack.c.l.b16 %v453
    %v1518 = vunpack.c.h.b16 %v453
    %v1519 = vunpack.c.l.b16 %v454
    %v1520 = vunpack.c.h.b16 %v454
    %v1521 = vunpack.c.l.b16 %v455
    %v1522 = vunpack.c.h.b16 %v455
    %v1523 = vunpack.c.l.b16 %v456
    %v1524 = vunpack.c.h.b16 %v456
    %v1525 = vunpack.c.l.b16 %v457
    %v1526 = vunpack.c.h.b16 %v457
    %v1527 = vunpack.c.l.b16 %v458
    %v1528 = vunpack.c.h.b16 %v458
    %v1529 = vunpack.c.l.b16 %v459
    %v1530 = vunpack.c.h.b16 %v459
    %v1531 = vunpack.c.l.b16 %v460
    %v1532 = vunpack.c.h.b16 %v460
    %v1533 = vunpack.c.l.b16 %v461
    %v1534 = vunpack.c.h.b16 %v461
    %v1535 = vunpack.c.l.b16 %v462
    %v1536 = vunpack.c.h.b16 %v462
    %v1537 = vunpack.c.l.b16 %v463
    %v1538 = vunpack.c.h.b16 %v463
    %v1539 = vunpack.c.l.b16 %v464
    %v1540 = vunpack.c.h.b16 %v464
    %v1541 = vunpack.c.l.b16 %v465
    %v1542 = vunpack.c.h.b16 %v465
    %v1543 = vunpack.c.l.b16 %v466
    %v1544 = vunpack.c.h.b16 %v466
    %v1545 = vunpack.c.l.b16 %v467
    %v1546 = vunpack.c.h.b16 %v467
    %v1547 = vunpack.c.l.b16 %v468
    %v1548 = vunpack.c.h.b16 %v468
    %v1549 = vunpack.c.l.b16 %v469
    %v1550 = vunpack.c.h.b16 %v469
    %v1551 = vunpack.c.l.b16 %v470
    %v1552 = vunpack.c.h.b16 %v470
    %v1553 = vunpack.c.l.b16 %v471
    %v1554 = vunpack.c.h.b16 %v471
    %v1555 = vunpack.c.l.b16 %v472
    %v1556 = vunpack.c.h.b16 %v472
    %v1557 = vunpack.c.l.b16 %v473
    %v1558 = vunpack.c.h.b16 %v473
    %v1559 = vunpack.c.l.b16 %v474
    %v1560 = vunpack.c.h.b16 %v474
    %v1561 = vunpack.c.l.b16 %v475
    %v1562 = vunpack.c.h.b16 %v475
    %v1563 = vunpack.c.l.b16 %v476
    %v1564 = vunpack.c.h.b16 %v476
    %v1565 = vunpack.c.l.b16 %v477
    %v1566 = vunpack.c.h.b16 %v477
    %v1567 = vunpack.c.l.b16 %v478
    %v1568 = vunpack.c.h.b16 %v478
    %v1569 = vunpack.c.l.b16 %v479
    %v1570 = vunpack.c.h.b16 %v479
    %v1571 = vunpack.c.l.b16 %v480
    %v1572 = vunpack.c.h.b16 %v480
    %v1573 = vunpack.c.l.b16 %v481
    %v1574 = vunpack.c.h.b16 %v481
    %v1575 = vunpack.c.l.b16 %v482
    %v1576 = vunpack.c.h.b16 %v482
    %v1577 = vunpack.c.l.b16 %v483
    %v1578 = vunpack.c.h.b16 %v483
    %v1579 = vunpack.c.l.b16 %v484
    %v1580 = vunpack.c.h.b16 %v484
    %v1581 = vunpack.c.l.b16 %v485
    %v1582 = vunpack.c.h.b16 %v485
    %v1583 = vunpack.c.l.b16 %v486
    %v1584 = vunpack.c.h.b16 %v486
    %v1585 = vunpack.c.l.b16 %v487
    %v1586 = vunpack.c.h.b16 %v487
    %v1587 = vunpack.c.l.b16 %v488
    %v1588 = vunpack.c.h.b16 %v488
    %v1589 = vunpack.c.l.b16 %v489
    %v1590 = vunpack.c.h.b16 %v489
    %v1591 = vunpack.c.l.b16 %v490
    %v1592 = vunpack.c.h.b16 %v490
    %v1593 = vunpack.c.l.b16 %v491
    %v1594 = vunpack.c.h.b16 %v491
    %v1595 = vunpack.c.l.b16 %v492
    %v1596 = vunpack.c.h.b16 %v492
    %v1597 = vunpack.c.l.b16 %v493
    %v1598 = vunpack.c.h.b16 %v493
    %v1599 = vunpack.c.l.b16 %v494
    %v1600 = vunpack.c.h.b16 %v494
    %v1601 = vunpack.c.l.b16 %v495
    %v1602 = vunpack.c.h.b16 %v495
    %v1603 = vunpack.c.l.b16 %v496
    %v1604 = vunpack.c.h.b16 %v496
    %v1605 = vunpack.c.l.b16 %v497
    %v1606 = vunpack.c.h.b16 %v497
    %v1607 = vunpack.c.l.b16 %v498
    %v1608 = vunpack.c.h.b16 %v498
    %v1609 = vunpack.c.l.b16 %v499
    %v1610 = vunpack.c.h.b16 %v499
    %v1611 = vunpack.c.l.b16 %v500
    %v1612 = vunpack.c.h.b16 %v500
    %v1613 = vunpack.c.l.b16 %v501
    %v1614 = vunpack.c.h.b16 %v501
    %v1615 = vunpack.c.l.b16 %v502
    %v1616 = vunpack.c.h.b16 %v502
    %v1617 = vunpack.c.l.b16 %v503
    %v1618 = vunpack.c.h.b16 %v503
    %v1619 = vunpack.c.l.b16 %v504
    %v1620 = vunpack.c.h.b16 %v504
    %v1621 = vunpack.c.l.b16 %v505
    %v1622 = vunpack.c.h.b16 %v505
    %v1623 = vunpack.c.l.b16 %v506
    %v1624 = vunpack.c.h.b16 %v506
    %v1625 = vunpack.c.l.b16 %v507
    %v1626 = vunpack.c.h.b16 %v507
    %v1627 = vunpack.c.l.b16 %v508
    %v1628 = vunpack.c.h.b16 %v508
    %v1629 = vunpack.c.l.b16 %v509
    %v1630 = vunpack.c.h.b16 %v509
    %v1631 = vunpack.c.l.b16 %v510
    %v1632 = vunpack.c.h.b16 %v510
    %v1633 = vunpack.c.l.b16 %v511
    %v1634 = vunpack.c.h.b16 %v511
    %v1635 = vunpack.c.l.b16 %v512
    %v1636 = vunpack.c.h.b16 %v512
    %v1637 = vunpack.c.l.b16 %v513
    %v1638 = vunpack.c.h.b16 %v513
    %v1639 = vunpack.c.l.b16 %v514
    %v1640 = vunpack.c.h.b16 %v514
    %v1641 = vunpack.c.l.b16 %v515
    %v1642 = vunpack.c.h.b16 %v515
    %v1643 = vunpack.c.l.b16 %v516
    %v1644 = vunpack.c.h.b16 %v516
    %v1645 = vunpack.c.l.b16 %v517
    %v1646 = vunpack.c.h.b16 %v517
    %v1647 = vunpack.c.l.b16 %v518
    %v1648 = vunpack.c.h.b16 %v518
    %v1649 = vunpack.c.l.b16 %v519
    %v1650 = vunpack.c.h.b16 %v519
    %v1651 = vunpack.c.l.b16 %v520
    %v1652 = vunpack.c.h.b16 %v520
    %v1653 = vunpack.c.l.b16 %v521
    %v1654 = vunpack.c.h.b16 %v521
    %v1655 = vunpack.c.l.b16 %v522
    %v1656 = vunpack.c.h.b16 %v522
    %v1657 = vunpack.c.l.b16 %v523
    %v1658 = vunpack.c.h.b16 %v523
    %v1659 = vunpack.c.l.b16 %v524
    %v1660 = vunpack.c.h.b16 %v524
    %v1661 = vunpack.c.l.b16 %v525
    %v1662 = vunpack.c.h.b16 %v525
    %v1663 = vunpack.c.l.b16 %v526
    %v1664 = vunpack.c.h.b16 %v526
    %v1665 = vunpack.c.l.b16 %v527
    %v1666 = vunpack.c.h.b16 %v527
    %v1667 = vunpack.c.l.b16 %v528
    %v1668 = vunpack.c.h.b16 %v528
    %v1669 = vunpack.c.l.b16 %v529
    %v1670 = vunpack.c.h.b16 %v529
    %v1671 = vunpack.c.l.b16 %v530
    %v1672 = vunpack.c.h.b16 %v530
    %v1673 = vunpack.c.l.b16 %v531
    %v1674 = vunpack.c.h.b16 %v531
    %v1675 = vunpack.c.l.b16 %v532
    %v1676 = vunpack.c.h.b16 %v532
    %v1677 = vunpack.c.l.b16 %v533
    %v1678 = vunpack.c.h.b16 %v533
    %v1679 = vunpack.c.l.b16 %v534
    %v1680 = vunpack.c.h.b16 %v534
    %v1681 = vunpack.c.l.b16 %v535
    %v1682 = vunpack.c.h.b16 %v535
    %v1683 = vunpack.c.l.b16 %v536
    %v1684 = vunpack.c.h.b16 %v536
    %v1685 = vunpack.c.l.b16 %v537
    %v1686 = vunpack.c.h.b16 %v537
    %v1687 = vunpack.c.l.b16 %v538
    %v1688 = vunpack.c.h.b16 %v538
    %v1689 = vunpack.c.l.b16 %v539
    %v1690 = vunpack.c.h.b16 %v539
    %v1691 = vunpack.c.l.b16 %v540
    %v1692 = vunpack.c.h.b16 %v540
    %v1693 = vunpack.c.l.b16 %v541
    %v1694 = vunpack.c.h.b16 %v541
    %v1695 = vunpack.c.l.b16 %v542
    %v1696 = vunpack.c.h.b16 %v542
    %v1697 = vunpack.c.l.b16 %v543
    %v1698 = vunpack.c.h.b16 %v543
    %v1699 = vunpack.c.l.b16 %v544
    %v1700 = vunpack.c.h.b16 %v544
    %v1701 = vunpack.c.l.b16 %v545
    %v1702 = vunpack.c.h.b16 %v545
    %v1703 = vunpack.c.l.b16 %v546
    %v1704 = vunpack.c.h.b16 %v546
    %v1705 = vunpack.c.l.b16 %v547
    %v1706 = vunpack.c.h.b16 %v547
    %v1707 = vunpack.c.l.b16 %v548
    %v1708 = vunpack.c.h.b16 %v548
    %v1709 = vunpack.c.l.b16 %v549
    %v1710 = vunpack.c.h.b16 %v549
    %v1711 = vunpack.c.l.b16 %v550
    %v1712 = vunpack.c.h.b16 %v550
    %v1713 = vpack.c.b16 %v949, %v945
    %v1714 = vpack.c.b16 %v950, %v946
    %v1715 = vpack.c.b16 %v951, %v947
    %v1716 = vpack.c.b16 %v952, %v948
    %v1717 = vpack.c.b16 %v957, %v953
    %v1718 = vpack.c.b16 %v958, %v954
    %v1719 = vpack.c.b16 %v959, %v955
    %v1720 = vpack.c.b16 %v960, %v956
    %v1721 = vpack.c.b16 %v965, %v961
    %v1722 = vpack.c.b16 %v966, %v962
    %v1723 = vpack.c.b16 %v967, %v963
    %v1724 = vpack.c.b16 %v968, %v964
    %v1725 = vpack.c.b16 %v973, %v969
    %v1726 = vpack.c.b16 %v974, %v970
    %v1727 = vpack.c.b16 %v975, %v971
    %v1728 = vpack.c.b16 %v976, %v972
    %v1729 = vpack.c.b16 %v981, %v977
    %v1730 = vpack.c.b16 %v982, %v978
    %v1731 = vpack.c.b16 %v983, %v979
    %v1732 = vpack.c.b16 %v984, %v980
    %v1733 = vpack.c.b16 %v989, %v985
    %v1734 = vpack.c.b16 %v990, %v986
    %v1735 = vpack.c.b16 %v991, %v987
    %v1736 = vpack.c.b16 %v992, %v988
    %v1737 = vpack.c.b16 %v997, %v993
    %v1738 = vpack.c.b16 %v998, %v994
    %v1739 = vpack.c.b16 %v999, %v995
    %v1740 = vpack.c.b16 %v1000, %v996
    %v1741 = vpack.c.b16 %v1005, %v1001
    %v1742 = vpack.c.b16 %v1006, %v1002
    %v1743 = vpack.c.b16 %v1007, %v1003
    %v1744 = vpack.c.b16 %v1008, %v1004
    %v1745 = vpack.c.b16 %v1013, %v1009
    %v1746 = vpack.c.b16 %v1014, %v1010
    %v1747 = vpack.c.b16 %v1015, %v1011
    %v1748 = vpack.c.b16 %v1016, %v1012
    %v1749 = vpack.c.b16 %v1021, %v1017
    %v1750 = vpack.c.b16 %v1022, %v1018
    %v1751 = vpack.c.b16 %v1023, %v1019
    %v1752 = vpack.c.b16 %v1024, %v1020
    %v1753 = vpack.c.b16 %v1029, %v1025
    %v1754 = vpack.c.b16 %v1030, %v1026
    %v1755 = vpack.c.b16 %v1031, %v1027
    %v1756 = vpack.c.b16 %v1032, %v1028
    %v1757 = vpack.c.b16 %v1037, %v1033
    %v1758 = vpack.c.b16 %v1038, %v1034
    %v1759 = vpack.c.b16 %v1039, %v1035
    %v1760 = vpack.c.b16 %v1040, %v1036
    %v1761 = vpack.c.b16 %v1045, %v1041
    %v1762 = vpack.c.b16 %v1046, %v1042
    %v1763 = vpack.c.b16 %v1047, %v1043
    %v1764 = vpack.c.b16 %v1048, %v1044
    %v1765 = vpack.c.b16 %v1053, %v1049
    %v1766 = vpack.c.b16 %v1054, %v1050
    %v1767 = vpack.c.b16 %v1055, %v1051
    %v1768 = vpack.c.b16 %v1056, %v1052
    %v1769 = vpack.c.b16 %v1061, %v1057
    %v1770 = vpack.c.b16 %v1062, %v1058
    %v1771 = vpack.c.b16 %v1063, %v1059
    %v1772 = vpack.c.b16 %v1064, %v1060
    %v1773 = vpack.c.b16 %v1069, %v1065
    %v1774 = vpack.c.b16 %v1070, %v1066
    %v1775 = vpack.c.b16 %v1071, %v1067
    %v1776 = vpack.c.b16 %v1072, %v1068
    %v1777 = vpack.c.b16 %v1077, %v1073
    %v1778 = vpack.c.b16 %v1078, %v1074
    %v1779 = vpack.c.b16 %v1079, %v1075
    %v1780 = vpack.c.b16 %v1080, %v1076
    %v1781 = vpack.c.b16 %v1085, %v1081
    %v1782 = vpack.c.b16 %v1086, %v1082
    %v1783 = vpack.c.b16 %v1087, %v1083
    %v1784 = vpack.c.b16 %v1088, %v1084
    %v1785 = vpack.c.b16 %v1093, %v1089
    %v1786 = vpack.c.b16 %v1094, %v1090
    %v1787 = vpack.c.b16 %v1095, %v1091
    %v1788 = vpack.c.b16 %v1096, %v1092
    %v1789 = vpack.c.b16 %v1101, %v1097
    %v1790 = vpack.c.b16 %v1102, %v1098
    %v1791 = vpack.c.b16 %v1103, %v1099
    %v1792 = vpack.c.b16 %v1104, %v1100
    %v1793 = vpack.c.b16 %v1109, %v1105
    %v1794 = vpack.c.b16 %v1110, %v1106
    %v1795 = vpack.c.b16 %v1111, %v1107
    %v1796 = vpack.c.b16 %v1112, %v1108
    %v1797 = vpack.c.b16 %v1117, %v1113
    %v1798 = vpack.c.b16 %v1118, %v1114
    %v1799 = vpack.c.b16 %v1119, %v1115
    %v1800 = vpack.c.b16 %v1120, %v1116
    %v1801 = vpack.c.b16 %v1125, %v1121
    %v1802 = vpack.c.b16 %v1126, %v1122
    %v1803 = vpack.c.b16 %v1127, %v1123
    %v1804 = vpack.c.b16 %v1128, %v1124
    %v1805 = vpack.c.b16 %v1133, %v1129
    %v1806 = vpack.c.b16 %v1134, %v1130
    %v1807 = vpack.c.b16 %v1135, %v1131
    %v1808 = vpack.c.b16 %v1136, %v1132
    %v1809 = vpack.c.b16 %v1141, %v1137
    %v1810 = vpack.c.b16 %v1142, %v1138
    %v1811 = vpack.c.b16 %v1143, %v1139
    %v1812 = vpack.c.b16 %v1144, %v1140
    %v1813 = vpack.c.b16 %v1149, %v1145
    %v1814 = vpack.c.b16 %v1150, %v1146
    %v1815 = vpack.c.b16 %v1151, %v1147
    %v1816 = vpack.c.b16 %v1152, %v1148
    %v1817 = vpack.c.b16 %v1157, %v1153
    %v1818 = vpack.c.b16 %v1158, %v1154
    %v1819 = vpack.c.b16 %v1159, %v1155
    %v1820 = vpack.c.b16 %v1160, %v1156
    %v1821 = vpack.c.b16 %v1165, %v1161
    %v1822 = vpack.c.b16 %v1166, %v1162
    %v1823 = vpack.c.b16 %v1167, %v1163
    %v1824 = vpack.c.b16 %v1168, %v1164
    %v1825 = vpack.c.b16 %v1173, %v1169
    %v1826 = vpack.c.b16 %v1174, %v1170
    %v1827 = vpack.c.b16 %v1175, %v1171
    %v1828 = vpack.c.b16 %v1176, %v1172
    %v1829 = vpack.c.b16 %v1181, %v1177
    %v1830 = vpack.c.b16 %v1182, %v1178
    %v1831 = vpack.c.b16 %v1183, %v1179
    %v1832 = vpack.c.b16 %v1184, %v1180
    %v1833 = vpack.c.b16 %v1189, %v1185
    %v1834 = vpack.c.b16 %v1190, %v1186
    %v1835 = vpack.c.b16 %v1191, %v1187
    %v1836 = vpack.c.b16 %v1192, %v1188
    %v1837 = vpack.c.b16 %v1197, %v1193
    %v1838 = vpack.c.b16 %v1198, %v1194
    %v1839 = vpack.c.b16 %v1199, %v1195
    %v1840 = vpack.c.b16 %v1200, %v1196
    %v1841 = vpack.c.b16 %v1205, %v1201
    %v1842 = vpack.c.b16 %v1206, %v1202
    %v1843 = vpack.c.b16 %v1207, %v1203
    %v1844 = vpack.c.b16 %v1208, %v1204
    %v1845 = vpack.c.b16 %v1213, %v1209
    %v1846 = vpack.c.b16 %v1214, %v1210
    %v1847 = vpack.c.b16 %v1215, %v1211
    %v1848 = vpack.c.b16 %v1216, %v1212
    %v1849 = vpack.c.b16 %v1221, %v1217
    %v1850 = vpack.c.b16 %v1222, %v1218
    %v1851 = vpack.c.b16 %v1223, %v1219
    %v1852 = vpack.c.b16 %v1224, %v1220
    %v1853 = vpack.c.b16 %v1229, %v1225
    %v1854 = vpack.c.b16 %v1230, %v1226
    %v1855 = vpack.c.b16 %v1231, %v1227
    %v1856 = vpack.c.b16 %v1232, %v1228
    %v1857 = vpack.c.b16 %v1237, %v1233
    %v1858 = vpack.c.b16 %v1238, %v1234
    %v1859 = vpack.c.b16 %v1239, %v1235
    %v1860 = vpack.c.b16 %v1240, %v1236
    %v1861 = vpack.c.b16 %v1245, %v1241
    %v1862 = vpack.c.b16 %v1246, %v1242
    %v1863 = vpack.c.b16 %v1247, %v1243
    %v1864 = vpack.c.b16 %v1248, %v1244
    %v1865 = vpack.c.b16 %v1253, %v1249
    %v1866 = vpack.c.b16 %v1254, %v1250
    %v1867 = vpack.c.b16 %v1255, %v1251
    %v1868 = vpack.c.b16 %v1256, %v1252
    %v1869 = vpack.c.b16 %v1261, %v1257
    %v1870 = vpack.c.b16 %v1262, %v1258
    %v1871 = vpack.c.b16 %v1263, %v1259
    %v1872 = vpack.c.b16 %v1264, %v1260
    %v1873 = vpack.c.b16 %v1269, %v1265
    %v1874 = vpack.c.b16 %v1270, %v1266
    %v1875 = vpack.c.b16 %v1271, %v1267
    %v1876 = vpack.c.b16 %v1272, %v1268
    %v1877 = vpack.c.b16 %v1277, %v1273
    %v1878 = vpack.c.b16 %v1278, %v1274
    %v1879 = vpack.c.b16 %v1279, %v1275
    %v1880 = vpack.c.b16 %v1280, %v1276
    %v1881 = vpack.c.b16 %v1285, %v1281
    %v1882 = vpack.c.b16 %v1286, %v1282
    %v1883 = vpack.c.b16 %v1287, %v1283
    %v1884 = vpack.c.b16 %v1288, %v1284
    %v1885 = vpack.c.b16 %v1293, %v1289
    %v1886 = vpack.c.b16 %v1294, %v1290
    %v1887 = vpack.c.b16 %v1295, %v1291
    %v1888 = vpack.c.b16 %v1296, %v1292
    %v1889 = vpack.c.b16 %v1301, %v1297
    %v1890 = vpack.c.b16 %v1302, %v1298
    %v1891 = vpack.c.b16 %v1303, %v1299
    %v1892 = vpack.c.b16 %v1304, %v1300
    %v1893 = vpack.c.b16 %v1309, %v1305
    %v1894 = vpack.c.b16 %v1310, %v1306
    %v1895 = vpack.c.b16 %v1311, %v1307
    %v1896 = vpack.c.b16 %v1312, %v1308
    %v1897 = vpack.c.b16 %v1317, %v1313
    %v1898 = vpack.c.b16 %v1318, %v1314
    %v1899 = vpack.c.b16 %v1319, %v1315
    %v1900 = vpack.c.b16 %v1320, %v1316
    %v1901 = vpack.c.b16 %v1325, %v1321
    %v1902 = vpack.c.b16 %v1326, %v1322
    %v1903 = vpack.c.b16 %v1327, %v1323
    %v1904 = vpack.c.b16 %v1328, %v1324
    %v1905 = vpack.c.b16 %v1333, %v1329
    %v1906 = vpack.c.b16 %v1334, %v1330
    %v1907 = vpack.c.b16 %v1335, %v1331
    %v1908 = vpack.c.b16 %v1336, %v1332
    %v1909 = vpack.c.b16 %v1341, %v1337
    %v1910 = vpack.c.b16 %v1342, %v1338
    %v1911 = vpack.c.b16 %v1343, %v1339
    %v1912 = vpack.c.b16 %v1344, %v1340
    %v1913 = vpack.c.b16 %v1349, %v1345
    %v1914 = vpack.c.b16 %v1350, %v1346
    %v1915 = vpack.c.b16 %v1351, %v1347
    %v1916 = vpack.c.b16 %v1352, %v1348
    %v1917 = vpack.c.b16 %v1357, %v1353
    %v1918 = vpack.c.b16 %v1358, %v1354
    %v1919 = vpack.c.b16 %v1359, %v1355
    %v1920 = vpack.c.b16 %v1360, %v1356
    %v1921 = vpack.c.b16 %v1365, %v1361
    %v1922 = vpack.c.b16 %v1366, %v1362
    %v1923 = vpack.c.b16 %v1367, %v1363
    %v1924 = vpack.c.b16 %v1368, %v1364
    %v1925 = vpack.c.b16 %v1373, %v1369
    %v1926 = vpack.c.b16 %v1374, %v1370
    %v1927 = vpack.c.b16 %v1375, %v1371
    %v1928 = vpack.c.b16 %v1376, %v1372
    %v1929 = vpack.c.b16 %v1381, %v1377
    %v1930 = vpack.c.b16 %v1382, %v1378
    %v1931 = vpack.c.b16 %v1383, %v1379
    %v1932 = vpack.c.b16 %v1384, %v1380
    %v1933 = vpack.c.b16 %v1389, %v1385
    %v1934 = vpack.c.b16 %v1390, %v1386
    %v1935 = vpack.c.b16 %v1391, %v1387
    %v1936 = vpack.c.b16 %v1392, %v1388
    %v1937 = vpack.c.b16 %v1397, %v1393
    %v1938 = vpack.c.b16 %v1398, %v1394
    %v1939 = vpack.c.b16 %v1399, %v1395
    %v1940 = vpack.c.b16 %v1400, %v1396
    %v1941 = vpack.c.b16 %v1405, %v1401
    %v1942 = vpack.c.b16 %v1406, %v1402
    %v1943 = vpack.c.b16 %v1407, %v1403
    %v1944 = vpack.c.b16 %v1408, %v1404
    %v1945 = vpack.c.b16 %v1413, %v1409
    %v1946 = vpack.c.b16 %v1414, %v1410
    %v1947 = vpack.c.b16 %v1415, %v1411
    %v1948 = vpack.c.b16 %v1416, %v1412
    %v1949 = vpack.c.b16 %v1421, %v1417
    %v1950 = vpack.c.b16 %v1422, %v1418
    %v1951 = vpack.c.b16 %v1423, %v1419
    %v1952 = vpack.c.b16 %v1424, %v1420
    %v1953 = vpack.c.b16 %v1429, %v1425
    %v1954 = vpack.c.b16 %v1430, %v1426
    %v1955 = vpack.c.b16 %v1431, %v1427
    %v1956 = vpack.c.b16 %v1432, %v1428
    %v1957 = vpack.c.b16 %v1437, %v1433
    %v1958 = vpack.c.b16 %v1438, %v1434
    %v1959 = vpack.c.b16 %v1439, %v1435
    %v1960 = vpack.c.b16 %v1440, %v1436
    %v1961 = vpack.c.b16 %v1445, %v1441
    %v1962 = vpack.c.b16 %v1446, %v1442
    %v1963 = vpack.c.b16 %v1447, %v1443
    %v1964 = vpack.c.b16 %v1448, %v1444
    %v1965 = vpack.c.b16 %v1453, %v1449
    %v1966 = vpack.c.b16 %v1454, %v1450
    %v1967 = vpack.c.b16 %v1455, %v1451
    %v1968 = vpack.c.b16 %v1456, %v1452
    %v1969 = vpack.c.b16 %v1461, %v1457
    %v1970 = vpack.c.b16 %v1462, %v1458
    %v1971 = vpack.c.b16 %v1463, %v1459
    %v1972 = vpack.c.b16 %v1464, %v1460
    %v1973 = vpack.c.b16 %v1469, %v1465
    %v1974 = vpack.c.b16 %v1470, %v1466
    %v1975 = vpack.c.b16 %v1471, %v1467
    %v1976 = vpack.c.b16 %v1472, %v1468
    %v1977 = vpack.c.b16 %v1477, %v1473
    %v1978 = vpack.c.b16 %v1478, %v1474
    %v1979 = vpack.c.b16 %v1479, %v1475
    %v1980 = vpack.c.b16 %v1480, %v1476
    %v1981 = vpack.c.b16 %v1485, %v1481
    %v1982 = vpack.c.b16 %v1486, %v1482
    %v1983 = vpack.c.b16 %v1487, %v1483
    %v1984 = vpack.c.b16 %v1488, %v1484
    %v1985 = vpack.c.b16 %v1493, %v1489
    %v1986 = vpack.c.b16 %v1494, %v1490
    %v1987 = vpack.c.b16 %v1495, %v1491
    %v1988 = vpack.c.b16 %v1496, %v1492
    %v1989 = vpack.c.b16 %v1501, %v1497
    %v1990 = vpack.c.b16 %v1502, %v1498
    %v1991 = vpack.c.b16 %v1503, %v1499
    %v1992 = vpack.c.b16 %v1504, %v1500
    %v1993 = vpack.c.b16 %v1509, %v1505
    %v1994 = vpack.c.b16 %v1510, %v1506
    %v1995 = vpack.c.b16 %v1511, %v1507
    %v1996 = vpack.c.b16 %v1512, %v1508
    %v1997 = vpack.c.b16 %v1517, %v1513
    %v1998 = vpack.c.b16 %v1518, %v1514
    %v1999 = vpack.c.b16 %v1519, %v1515
    %v2000 = vpack.c.b16 %v1520, %v1516
    %v2001 = vpack.c.b16 %v1525, %v1521
    %v2002 = vpack.c.b16 %v1526, %v1522
    %v2003 = vpack.c.b16 %v1527, %v1523
    %v2004 = vpack.c.b16 %v1528, %v1524
    %v2005 = vpack.c.b16 %v1533, %v1529
    %v2006 = vpack.c.b16 %v1534, %v1530
    %v2007 = vpack.c.b16 %v1535, %v1531
    %v2008 = vpack.c.b16 %v1536, %v1532
    %v2009 = vpack.c.b16 %v1541, %v1537
    %v2010 = vpack.c.b16 %v1542, %v1538
    %v2011 = vpack.c.b16 %v1543, %v1539
    %v2012 = vpack.c.b16 %v1544, %v1540
    %v2013 = vpack.c.b16 %v1549, %v1545
    %v2014 = vpack.c.b16 %v1550, %v1546
    %v2015 = vpack.c.b16 %v1551, %v1547
    %v2016 = vpack.c.b16 %v1552, %v1548
    %v2017 = vpack.c.b16 %v1557, %v1553
    %v2018 = vpack.c.b16 %v1558, %v1554
    %v2019 = vpack.c.b16 %v1559, %v1555
    %v2020 = vpack.c.b16 %v1560, %v1556
    %v2021 = vpack.c.b16 %v1565, %v1561
    %v2022 = vpack.c.b16 %v1566, %v1562
    %v2023 = vpack.c.b16 %v1567, %v1563
    %v2024 = vpack.c.b16 %v1568, %v1564
    %v2025 = vpack.c.b16 %v1573, %v1569
    %v2026 = vpack.c.b16 %v1574, %v1570
    %v2027 = vpack.c.b16 %v1575, %v1571
    %v2028 = vpack.c.b16 %v1576, %v1572
    %v2029 = vpack.c.b16 %v1581, %v1577
    %v2030 = vpack.c.b16 %v1582, %v1578
    %v2031 = vpack.c.b16 %v1583, %v1579
    %v2032 = vpack.c.b16 %v1584, %v1580
    %v2033 = vpack.c.b16 %v1589, %v1585
    %v2034 = vpack.c.b16 %v1590, %v1586
    %v2035 = vpack.c.b16 %v1591, %v1587
    %v2036 = vpack.c.b16 %v1592, %v1588
    %v2037 = vpack.c.b16 %v1597, %v1593
    %v2038 = vpack.c.b16 %v1598, %v1594
    %v2039 = vpack.c.b16 %v1599, %v1595
    %v2040 = vpack.c.b16 %v1600, %v1596
    %v2041 = vpack.c.b16 %v1605, %v1601
    %v2042 = vpack.c.b16 %v1606, %v1602
    %v2043 = vpack.c.b16 %v1607, %v1603
    %v2044 = vpack.c.b16 %v1608, %v1604
    %v2045 = vpack.c.b16 %v1613, %v1609
    %v2046 = vpack.c.b16 %v1614, %v1610
    %v2047 = vpack.c.b16 %v1615, %v1611
    %v2048 = vpack.c.b16 %v1616, %v1612
    %v2049 = vpack.c.b16 %v1621, %v1617
    %v2050 = vpack.c.b16 %v1622, %v1618
    %v2051 = vpack.c.b16 %v1623, %v1619
    %v2052 = vpack.c.b16 %v1624, %v1620
    %v2053 = vpack.c.b16 %v1629, %v1625
    %v2054 = vpack.c.b16 %v1630, %v1626
    %v2055 = vpack.c.b16 %v1631, %v1627
    %v2056 = vpack.c.b16 %v1632, %v1628
    %v2057 = vpack.c.b16 %v1637, %v1633
    %v2058 = vpack.c.b16 %v1638, %v1634
    %v2059 = vpack.c.b16 %v1639, %v1635
    %v2060 = vpack.c.b16 %v1640, %v1636
    %v2061 = vpack.c.b16 %v1645, %v1641
    %v2062 = vpack.c.b16 %v1646, %v1642
    %v2063 = vpack.c.b16 %v1647, %v1643
    %v2064 = vpack.c.b16 %v1648, %v1644
    %v2065 = vpack.c.b16 %v1653, %v1649
    %v2066 = vpack.c.b16 %v1654, %v1650
    %v2067 = vpack.c.b16 %v1655, %v1651
    %v2068 = vpack.c.b16 %v1656, %v1652
    %v2069 = vpack.c.b16 %v1661, %v1657
    %v2070 = vpack.c.b16 %v1662, %v1658
    %v2071 = vpack.c.b16 %v1663, %v1659
    %v2072 = vpack.c.b16 %v1664, %v1660
    %v2073 = vpack.c.b16 %v1669, %v1665
    %v2074 = vpack.c.b16 %v1670, %v1666
    %v2075 = vpack.c.b16 %v1671, %v1667
    %v2076 = vpack.c.b16 %v1672, %v1668
    %v2077 = vpack.c.b16 %v1677, %v1673
    %v2078 = vpack.c.b16 %v1678, %v1674
    %v2079 = vpack.c.b16 %v1679, %v1675
    %v2080 = vpack.c.b16 %v1680, %v1676
    %v2081 = vpack.c.b16 %v1685, %v1681
    %v2082 = vpack.c.b16 %v1686, %v1682
    %v2083 = vpack.c.b16 %v1687, %v1683
    %v2084 = vpack.c.b16 %v1688, %v1684
    %v2085 = vpack.c.b16 %v1693, %v1689
    %v2086 = vpack.c.b16 %v1694, %v1690
    %v2087 = vpack.c.b16 %v1695, %v1691
    %v2088 = vpack.c.b16 %v1696, %v1692
    %v2089 = vpack.c.b16 %v1701, %v1697
    %v2090 = vpack.c.b16 %v1702, %v1698
    %v2091 = vpack.c.b16 %v1703, %v1699
    %v2092 = vpack.c.b16 %v1704, %v1700
    %v2093 = vpack.c.b16 %v1709, %v1705
    %v2094 = vpack.c.b16 %v1710, %v1706
    %v2095 = vpack.c.b16 %v1711, %v1707
    %v2096 = vpack.c.b16 %v1712, %v1708
    %2481 = vmatpush.bf16.msra.mxu0 %v1741
    %2482 = vmatpush.bf16.msra.mxu0 %v1737
    %2483 = vmatpush.bf16.msra.mxu0 %v1733
    %2484 = vmatpush.bf16.msra.mxu0 %v1729
    %2485 = vmatpush.bf16.msra.mxu0 %v1725
    %2486 = vmatpush.bf16.msra.mxu0 %v1721
    %2487 = vmatpush.bf16.msra.mxu0 %v1717
    %2488 = vmatpush.bf16.msra.mxu0 %v1713
    %2489 = vmatmul.bf16.gmra.mxu0 %v143
    %v2490 = vpop.f32.mrf.mxu0
    %v2491 = vadd.f32 %v553, %v2490
    %v2492 = vpop.f32.mrf.mxu0
    %v2493 = vadd.f32 %v553, %v2492
    %2494 = vmatmul.bf16.gmra.mxu0 %v155
    %v2495 = vpop.f32.mrf.mxu0
    %v2496 = vadd.f32 %v553, %v2495
    %v2497 = vpop.f32.mrf.mxu0
    %v2498 = vadd.f32 %v553, %v2497
    %2499 = vdwg.mxu0
    %2500 = vmatpush.bf16.msra.mxu0 %v1773
    %2501 = vmatpush.bf16.msra.mxu0 %v1769
    %2502 = vmatpush.bf16.msra.mxu0 %v1765
    %2503 = vmatpush.bf16.msra.mxu0 %v1761
    %2504 = vmatpush.bf16.msra.mxu0 %v1757
    %2505 = vmatpush.bf16.msra.mxu0 %v1753
    %2506 = vmatpush.bf16.msra.mxu0 %v1749
    %2507 = vmatpush.bf16.msra.mxu0 %v1745
    %2508 = vmatmul.bf16.gmra.mxu0 %v144
    %v2509 = vpop.f32.mrf.mxu0
    %v2510 = vadd.f32 %v2491, %v2509
    %v2511 = vpop.f32.mrf.mxu0
    %v2512 = vadd.f32 %v2493, %v2511
    %2513 = vmatmul.bf16.gmra.mxu0 %v156
    %v2514 = vpop.f32.mrf.mxu0
    %v2515 = vadd.f32 %v2496, %v2514
    %v2516 = vpop.f32.mrf.mxu0
    %v2517 = vadd.f32 %v2498, %v2516
    %2518 = vdwg.mxu0
    %2519 = vmatpush.bf16.msra.mxu0 %v1805
    %2520 = vmatpush.bf16.msra.mxu0 %v1801
    %2521 = vmatpush.bf16.msra.mxu0 %v1797
    %2522 = vmatpush.bf16.msra.mxu0 %v1793
    %2523 = vmatpush.bf16.msra.mxu0 %v1789
    %2524 = vmatpush.bf16.msra.mxu0 %v1785
    %2525 = vmatpush.bf16.msra.mxu0 %v1781
    %2526 = vmatpush.bf16.msra.mxu0 %v1777
    %2527 = vmatmul.bf16.gmra.mxu0 %v145
    %v2528 = vpop.f32.mrf.mxu0
    %v2529 = vadd.f32 %v2510, %v2528
    %v2530 = vpop.f32.mrf.mxu0
    %v2531 = vadd.f32 %v2512, %v2530
    %2532 = vmatmul.bf16.gmra.mxu0 %v157
    %v2533 = vpop.f32.mrf.mxu0
    %v2534 = vadd.f32 %v2515, %v2533
    %v2535 = vpop.f32.mrf.mxu0
    %v2536 = vadd.f32 %v2517, %v2535
    %2537 = vdwg.mxu0
    %2538 = vmatpush.bf16.msra.mxu0 %v1837
    %2539 = vmatpush.bf16.msra.mxu0 %v1833
    %2540 = vmatpush.bf16.msra.mxu0 %v1829
    %2541 = vmatpush.bf16.msra.mxu0 %v1825
    %2542 = vmatpush.bf16.msra.mxu0 %v1821
    %2543 = vmatpush.bf16.msra.mxu0 %v1817
    %2544 = vmatpush.bf16.msra.mxu0 %v1813
    %2545 = vmatpush.bf16.msra.mxu0 %v1809
    %2546 = vmatmul.bf16.gmra.mxu0 %v146
    %v2547 = vpop.f32.mrf.mxu0
    %v2548 = vadd.f32 %v2529, %v2547
    %v2549 = vpop.f32.mrf.mxu0
    %v2550 = vadd.f32 %v2531, %v2549
    %2551 = vmatmul.bf16.gmra.mxu0 %v158
    %v2552 = vpop.f32.mrf.mxu0
    %v2553 = vadd.f32 %v2534, %v2552
    %v2554 = vpop.f32.mrf.mxu0
    %v2555 = vadd.f32 %v2536, %v2554
    %2556 = vdwg.mxu0
    %2557 = vmatpush.bf16.msra.mxu0 %v1869
    %2558 = vmatpush.bf16.msra.mxu0 %v1865
    %2559 = vmatpush.bf16.msra.mxu0 %v1861
    %2560 = vmatpush.bf16.msra.mxu0 %v1857
    %2561 = vmatpush.bf16.msra.mxu0 %v1853
    %2562 = vmatpush.bf16.msra.mxu0 %v1849
    %2563 = vmatpush.bf16.msra.mxu0 %v1845
    %2564 = vmatpush.bf16.msra.mxu0 %v1841
    %2565 = vmatmul.bf16.gmra.mxu0 %v147
    %v2566 = vpop.f32.mrf.mxu0
    %v2567 = vadd.f32 %v2548, %v2566
    %v2568 = vpop.f32.mrf.mxu0
    %v2569 = vadd.f32 %v2550, %v2568
    %2570 = vmatmul.bf16.gmra.mxu0 %v159
    %v2571 = vpop.f32.mrf.mxu0
    %v2572 = vadd.f32 %v2553, %v2571
    %v2573 = vpop.f32.mrf.mxu0
    %v2574 = vadd.f32 %v2555, %v2573
    %2575 = vdwg.mxu0
    %2576 = vmatpush.bf16.msra.mxu0 %v1901
    %2577 = vmatpush.bf16.msra.mxu0 %v1897
    %2578 = vmatpush.bf16.msra.mxu0 %v1893
    %2579 = vmatpush.bf16.msra.mxu0 %v1889
    %2580 = vmatpush.bf16.msra.mxu0 %v1885
    %2581 = vmatpush.bf16.msra.mxu0 %v1881
    %2582 = vmatpush.bf16.msra.mxu0 %v1877
    %2583 = vmatpush.bf16.msra.mxu0 %v1873
    %2584 = vmatmul.bf16.gmra.mxu0 %v148
    %v2585 = vpop.f32.mrf.mxu0
    %v2586 = vadd.f32 %v2567, %v2585
    %v2587 = vpop.f32.mrf.mxu0
    %v2588 = vadd.f32 %v2569, %v2587
    %2589 = vmatmul.bf16.gmra.mxu0 %v160
    %v2590 = vpop.f32.mrf.mxu0
    %v2591 = vadd.f32 %v2572, %v2590
    %v2592 = vpop.f32.mrf.mxu0
    %v2593 = vadd.f32 %v2574, %v2592
    %2594 = vdwg.mxu0
    %2595 = vmatpush.bf16.msra.mxu0 %v1933
    %2596 = vmatpush.bf16.msra.mxu0 %v1929
    %2597 = vmatpush.bf16.msra.mxu0 %v1925
    %2598 = vmatpush.bf16.msra.mxu0 %v1921
    %2599 = vmatpush.bf16.msra.mxu0 %v1917
    %2600 = vmatpush.bf16.msra.mxu0 %v1913
    %2601 = vmatpush.bf16.msra.mxu0 %v1909
    %2602 = vmatpush.bf16.msra.mxu0 %v1905
    %2603 = vmatmul.bf16.gmra.mxu0 %v149
    %v2604 = vpop.f32.mrf.mxu0
    %v2605 = vadd.f32 %v2586, %v2604
    %v2606 = vpop.f32.mrf.mxu0
    %v2607 = vadd.f32 %v2588, %v2606
    %2608 = vmatmul.bf16.gmra.mxu0 %v161
    %v2609 = vpop.f32.mrf.mxu0
    %v2610 = vadd.f32 %v2591, %v2609
    %v2611 = vpop.f32.mrf.mxu0
    %v2612 = vadd.f32 %v2593, %v2611
    %2613 = vdwg.mxu0
    %2614 = vmatpush.bf16.msra.mxu0 %v1965
    %2615 = vmatpush.bf16.msra.mxu0 %v1961
    %2616 = vmatpush.bf16.msra.mxu0 %v1957
    %2617 = vmatpush.bf16.msra.mxu0 %v1953
    %2618 = vmatpush.bf16.msra.mxu0 %v1949
    %2619 = vmatpush.bf16.msra.mxu0 %v1945
    %2620 = vmatpush.bf16.msra.mxu0 %v1941
    %2621 = vmatpush.bf16.msra.mxu0 %v1937
    %2622 = vmatmul.bf16.gmra.mxu0 %v150
    %v2623 = vpop.f32.mrf.mxu0
    %v2624 = vadd.f32 %v2605, %v2623
    %v2625 = vpop.f32.mrf.mxu0
    %v2626 = vadd.f32 %v2607, %v2625
    %2627 = vmatmul.bf16.gmra.mxu0 %v162
    %v2628 = vpop.f32.mrf.mxu0
    %v2629 = vadd.f32 %v2610, %v2628
    %v2630 = vpop.f32.mrf.mxu0
    %v2631 = vadd.f32 %v2612, %v2630
    %2632 = vdwg.mxu0
    %2633 = vmatpush.bf16.msra.mxu0 %v1997
    %2634 = vmatpush.bf16.msra.mxu0 %v1993
    %2635 = vmatpush.bf16.msra.mxu0 %v1989
    %2636 = vmatpush.bf16.msra.mxu0 %v1985
    %2637 = vmatpush.bf16.msra.mxu0 %v1981
    %2638 = vmatpush.bf16.msra.mxu0 %v1977
    %2639 = vmatpush.bf16.msra.mxu0 %v1973
    %2640 = vmatpush.bf16.msra.mxu0 %v1969
    %2641 = vmatmul.bf16.gmra.mxu0 %v151
    %v2642 = vpop.f32.mrf.mxu0
    %v2643 = vadd.f32 %v2624, %v2642
    %v2644 = vpop.f32.mrf.mxu0
    %v2645 = vadd.f32 %v2626, %v2644
    %2646 = vmatmul.bf16.gmra.mxu0 %v163
    %v2647 = vpop.f32.mrf.mxu0
    %v2648 = vadd.f32 %v2629, %v2647
    %v2649 = vpop.f32.mrf.mxu0
    %v2650 = vadd.f32 %v2631, %v2649
    %2651 = vdwg.mxu0
    %2652 = vmatpush.bf16.msra.mxu0 %v2029
    %2653 = vmatpush.bf16.msra.mxu0 %v2025
    %2654 = vmatpush.bf16.msra.mxu0 %v2021
    %2655 = vmatpush.bf16.msra.mxu0 %v2017
    %2656 = vmatpush.bf16.msra.mxu0 %v2013
    %2657 = vmatpush.bf16.msra.mxu0 %v2009
    %2658 = vmatpush.bf16.msra.mxu0 %v2005
    %2659 = vmatpush.bf16.msra.mxu0 %v2001
    %2660 = vmatmul.bf16.gmra.mxu0 %v152
    %v2661 = vpop.f32.mrf.mxu0
    %v2662 = vadd.f32 %v2643, %v2661
    %v2663 = vpop.f32.mrf.mxu0
    %v2664 = vadd.f32 %v2645, %v2663
    %2665 = vmatmul.bf16.gmra.mxu0 %v164
    %v2666 = vpop.f32.mrf.mxu0
    %v2667 = vadd.f32 %v2648, %v2666
    %v2668 = vpop.f32.mrf.mxu0
    %v2669 = vadd.f32 %v2650, %v2668
    %2670 = vdwg.mxu0
    %2671 = vmatpush.bf16.msra.mxu0 %v2061
    %2672 = vmatpush.bf16.msra.mxu0 %v2057
    %2673 = vmatpush.bf16.msra.mxu0 %v2053
    %2674 = vmatpush.bf16.msra.mxu0 %v2049
    %2675 = vmatpush.bf16.msra.mxu0 %v2045
    %2676 = vmatpush.bf16.msra.mxu0 %v2041
    %2677 = vmatpush.bf16.msra.mxu0 %v2037
    %2678 = vmatpush.bf16.msra.mxu0 %v2033
    %2679 = vmatmul.bf16.gmra.mxu0 %v153
    %v2680 = vpop.f32.mrf.mxu0
    %v2681 = vadd.f32 %v2662, %v2680
    %v2682 = vpop.f32.mrf.mxu0
    %v2683 = vadd.f32 %v2664, %v2682
    %2684 = vmatmul.bf16.gmra.mxu0 %v165
    %v2685 = vpop.f32.mrf.mxu0
    %v2686 = vadd.f32 %v2667, %v2685
    %v2687 = vpop.f32.mrf.mxu0
    %v2688 = vadd.f32 %v2669, %v2687
    %2689 = vdwg.mxu0
    %2690 = vmatpush.bf16.msra.mxu0 %v2093
    %2691 = vmatpush.bf16.msra.mxu0 %v2089
    %2692 = vmatpush.bf16.msra.mxu0 %v2085
    %2693 = vmatpush.bf16.msra.mxu0 %v2081
    %2694 = vmatpush.bf16.msra.mxu0 %v2077
    %2695 = vmatpush.bf16.msra.mxu0 %v2073
    %2696 = vmatpush.bf16.msra.mxu0 %v2069
    %2697 = vmatpush.bf16.msra.mxu0 %v2065
    %2698 = vmatmul.bf16.gmra.mxu0 %v154
    %v2699 = vpop.f32.mrf.mxu0
    %v2700 = vadd.f32 %v2681, %v2699
    %v2701 = vpop.f32.mrf.mxu0
    %v2702 = vadd.f32 %v2683, %v2701
    %2703 = vmatmul.bf16.gmra.mxu0 %v166
    %v2704 = vpop.f32.mrf.mxu0
    %v2705 = vadd.f32 %v2686, %v2704
    %v2706 = vpop.f32.mrf.mxu0
    %v2707 = vadd.f32 %v2688, %v2706
    %2708 = vdwg.mxu0
    %2709 = vmatpush.bf16.msra.mxu0 %v1742
    %2710 = vmatpush.bf16.msra.mxu0 %v1738
    %2711 = vmatpush.bf16.msra.mxu0 %v1734
    %2712 = vmatpush.bf16.msra.mxu0 %v1730
    %2713 = vmatpush.bf16.msra.mxu0 %v1726
    %2714 = vmatpush.bf16.msra.mxu0 %v1722
    %2715 = vmatpush.bf16.msra.mxu0 %v1718
    %2716 = vmatpush.bf16.msra.mxu0 %v1714
    %2717 = vmatmul.bf16.gmra.mxu0 %v143
    %v2718 = vpop.f32.mrf.mxu0
    %v2719 = vadd.f32 %v554, %v2718
    %v2720 = vpop.f32.mrf.mxu0
    %v2721 = vadd.f32 %v554, %v2720
    %2722 = vmatmul.bf16.gmra.mxu0 %v155
    %v2723 = vpop.f32.mrf.mxu0
    %v2724 = vadd.f32 %v554, %v2723
    %v2725 = vpop.f32.mrf.mxu0
    %v2726 = vadd.f32 %v554, %v2725
    %2727 = vdwg.mxu0
    %2728 = vmatpush.bf16.msra.mxu0 %v1774
    %2729 = vmatpush.bf16.msra.mxu0 %v1770
    %2730 = vmatpush.bf16.msra.mxu0 %v1766
    %2731 = vmatpush.bf16.msra.mxu0 %v1762
    %2732 = vmatpush.bf16.msra.mxu0 %v1758
    %2733 = vmatpush.bf16.msra.mxu0 %v1754
    %2734 = vmatpush.bf16.msra.mxu0 %v1750
    %2735 = vmatpush.bf16.msra.mxu0 %v1746
    %2736 = vmatmul.bf16.gmra.mxu0 %v144
    %v2737 = vpop.f32.mrf.mxu0
    %v2738 = vadd.f32 %v2719, %v2737
    %v2739 = vpop.f32.mrf.mxu0
    %v2740 = vadd.f32 %v2721, %v2739
    %2741 = vmatmul.bf16.gmra.mxu0 %v156
    %v2742 = vpop.f32.mrf.mxu0
    %v2743 = vadd.f32 %v2724, %v2742
    %v2744 = vpop.f32.mrf.mxu0
    %v2745 = vadd.f32 %v2726, %v2744
    %2746 = vdwg.mxu0
    %2747 = vmatpush.bf16.msra.mxu0 %v1806
    %2748 = vmatpush.bf16.msra.mxu0 %v1802
    %2749 = vmatpush.bf16.msra.mxu0 %v1798
    %2750 = vmatpush.bf16.msra.mxu0 %v1794
    %2751 = vmatpush.bf16.msra.mxu0 %v1790
    %2752 = vmatpush.bf16.msra.mxu0 %v1786
    %2753 = vmatpush.bf16.msra.mxu0 %v1782
    %2754 = vmatpush.bf16.msra.mxu0 %v1778
    %2755 = vmatmul.bf16.gmra.mxu0 %v145
    %v2756 = vpop.f32.mrf.mxu0
    %v2757 = vadd.f32 %v2738, %v2756
    %v2758 = vpop.f32.mrf.mxu0
    %v2759 = vadd.f32 %v2740, %v2758
    %2760 = vmatmul.bf16.gmra.mxu0 %v157
    %v2761 = vpop.f32.mrf.mxu0
    %v2762 = vadd.f32 %v2743, %v2761
    %v2763 = vpop.f32.mrf.mxu0
    %v2764 = vadd.f32 %v2745, %v2763
    %2765 = vdwg.mxu0
    %2766 = vmatpush.bf16.msra.mxu0 %v1838
    %2767 = vmatpush.bf16.msra.mxu0 %v1834
    %2768 = vmatpush.bf16.msra.mxu0 %v1830
    %2769 = vmatpush.bf16.msra.mxu0 %v1826
    %2770 = vmatpush.bf16.msra.mxu0 %v1822
    %2771 = vmatpush.bf16.msra.mxu0 %v1818
    %2772 = vmatpush.bf16.msra.mxu0 %v1814
    %2773 = vmatpush.bf16.msra.mxu0 %v1810
    %2774 = vmatmul.bf16.gmra.mxu0 %v146
    %v2775 = vpop.f32.mrf.mxu0
    %v2776 = vadd.f32 %v2757, %v2775
    %v2777 = vpop.f32.mrf.mxu0
    %v2778 = vadd.f32 %v2759, %v2777
    %2779 = vmatmul.bf16.gmra.mxu0 %v158
    %v2780 = vpop.f32.mrf.mxu0
    %v2781 = vadd.f32 %v2762, %v2780
    %v2782 = vpop.f32.mrf.mxu0
    %v2783 = vadd.f32 %v2764, %v2782
    %2784 = vdwg.mxu0
    %2785 = vmatpush.bf16.msra.mxu0 %v1870
    %2786 = vmatpush.bf16.msra.mxu0 %v1866
    %2787 = vmatpush.bf16.msra.mxu0 %v1862
    %2788 = vmatpush.bf16.msra.mxu0 %v1858
    %2789 = vmatpush.bf16.msra.mxu0 %v1854
    %2790 = vmatpush.bf16.msra.mxu0 %v1850
    %2791 = vmatpush.bf16.msra.mxu0 %v1846
    %2792 = vmatpush.bf16.msra.mxu0 %v1842
    %2793 = vmatmul.bf16.gmra.mxu0 %v147
    %v2794 = vpop.f32.mrf.mxu0
    %v2795 = vadd.f32 %v2776, %v2794
    %v2796 = vpop.f32.mrf.mxu0
    %v2797 = vadd.f32 %v2778, %v2796
    %2798 = vmatmul.bf16.gmra.mxu0 %v159
    %v2799 = vpop.f32.mrf.mxu0
    %v2800 = vadd.f32 %v2781, %v2799
    %v2801 = vpop.f32.mrf.mxu0
    %v2802 = vadd.f32 %v2783, %v2801
    %2803 = vdwg.mxu0
    %2804 = vmatpush.bf16.msra.mxu0 %v1902
    %2805 = vmatpush.bf16.msra.mxu0 %v1898
    %2806 = vmatpush.bf16.msra.mxu0 %v1894
    %2807 = vmatpush.bf16.msra.mxu0 %v1890
    %2808 = vmatpush.bf16.msra.mxu0 %v1886
    %2809 = vmatpush.bf16.msra.mxu0 %v1882
    %2810 = vmatpush.bf16.msra.mxu0 %v1878
    %2811 = vmatpush.bf16.msra.mxu0 %v1874
    %2812 = vmatmul.bf16.gmra.mxu0 %v148
    %v2813 = vpop.f32.mrf.mxu0
    %v2814 = vadd.f32 %v2795, %v2813
    %v2815 = vpop.f32.mrf.mxu0
    %v2816 = vadd.f32 %v2797, %v2815
    %2817 = vmatmul.bf16.gmra.mxu0 %v160
    %v2818 = vpop.f32.mrf.mxu0
    %v2819 = vadd.f32 %v2800, %v2818
    %v2820 = vpop.f32.mrf.mxu0
    %v2821 = vadd.f32 %v2802, %v2820
    %2822 = vdwg.mxu0
    %2823 = vmatpush.bf16.msra.mxu0 %v1934
    %2824 = vmatpush.bf16.msra.mxu0 %v1930
    %2825 = vmatpush.bf16.msra.mxu0 %v1926
    %2826 = vmatpush.bf16.msra.mxu0 %v1922
    %2827 = vmatpush.bf16.msra.mxu0 %v1918
    %2828 = vmatpush.bf16.msra.mxu0 %v1914
    %2829 = vmatpush.bf16.msra.mxu0 %v1910
    %2830 = vmatpush.bf16.msra.mxu0 %v1906
    %2831 = vmatmul.bf16.gmra.mxu0 %v149
    %v2832 = vpop.f32.mrf.mxu0
    %v2833 = vadd.f32 %v2814, %v2832
    %v2834 = vpop.f32.mrf.mxu0
    %v2835 = vadd.f32 %v2816, %v2834
    %2836 = vmatmul.bf16.gmra.mxu0 %v161
    %v2837 = vpop.f32.mrf.mxu0
    %v2838 = vadd.f32 %v2819, %v2837
    %v2839 = vpop.f32.mrf.mxu0
    %v2840 = vadd.f32 %v2821, %v2839
    %2841 = vdwg.mxu0
    %2842 = vmatpush.bf16.msra.mxu0 %v1966
    %2843 = vmatpush.bf16.msra.mxu0 %v1962
    %2844 = vmatpush.bf16.msra.mxu0 %v1958
    %2845 = vmatpush.bf16.msra.mxu0 %v1954
    %2846 = vmatpush.bf16.msra.mxu0 %v1950
    %2847 = vmatpush.bf16.msra.mxu0 %v1946
    %2848 = vmatpush.bf16.msra.mxu0 %v1942
    %2849 = vmatpush.bf16.msra.mxu0 %v1938
    %2850 = vmatmul.bf16.gmra.mxu0 %v150
    %v2851 = vpop.f32.mrf.mxu0
    %v2852 = vadd.f32 %v2833, %v2851
    %v2853 = vpop.f32.mrf.mxu0
    %v2854 = vadd.f32 %v2835, %v2853
    %2855 = vmatmul.bf16.gmra.mxu0 %v162
    %v2856 = vpop.f32.mrf.mxu0
    %v2857 = vadd.f32 %v2838, %v2856
    %v2858 = vpop.f32.mrf.mxu0
    %v2859 = vadd.f32 %v2840, %v2858
    %2860 = vdwg.mxu0
    %2861 = vmatpush.bf16.msra.mxu0 %v1998
    %2862 = vmatpush.bf16.msra.mxu0 %v1994
    %2863 = vmatpush.bf16.msra.mxu0 %v1990
    %2864 = vmatpush.bf16.msra.mxu0 %v1986
    %2865 = vmatpush.bf16.msra.mxu0 %v1982
    %2866 = vmatpush.bf16.msra.mxu0 %v1978
    %2867 = vmatpush.bf16.msra.mxu0 %v1974
    %2868 = vmatpush.bf16.msra.mxu0 %v1970
    %2869 = vmatmul.bf16.gmra.mxu0 %v151
    %v2870 = vpop.f32.mrf.mxu0
    %v2871 = vadd.f32 %v2852, %v2870
    %v2872 = vpop.f32.mrf.mxu0
    %v2873 = vadd.f32 %v2854, %v2872
    %2874 = vmatmul.bf16.gmra.mxu0 %v163
    %v2875 = vpop.f32.mrf.mxu0
    %v2876 = vadd.f32 %v2857, %v2875
    %v2877 = vpop.f32.mrf.mxu0
    %v2878 = vadd.f32 %v2859, %v2877
    %2879 = vdwg.mxu0
    %2880 = vmatpush.bf16.msra.mxu0 %v2030
    %2881 = vmatpush.bf16.msra.mxu0 %v2026
    %2882 = vmatpush.bf16.msra.mxu0 %v2022
    %2883 = vmatpush.bf16.msra.mxu0 %v2018
    %2884 = vmatpush.bf16.msra.mxu0 %v2014
    %2885 = vmatpush.bf16.msra.mxu0 %v2010
    %2886 = vmatpush.bf16.msra.mxu0 %v2006
    %2887 = vmatpush.bf16.msra.mxu0 %v2002
    %2888 = vmatmul.bf16.gmra.mxu0 %v152
    %v2889 = vpop.f32.mrf.mxu0
    %v2890 = vadd.f32 %v2871, %v2889
    %v2891 = vpop.f32.mrf.mxu0
    %v2892 = vadd.f32 %v2873, %v2891
    %2893 = vmatmul.bf16.gmra.mxu0 %v164
    %v2894 = vpop.f32.mrf.mxu0
    %v2895 = vadd.f32 %v2876, %v2894
    %v2896 = vpop.f32.mrf.mxu0
    %v2897 = vadd.f32 %v2878, %v2896
    %2898 = vdwg.mxu0
    %2899 = vmatpush.bf16.msra.mxu0 %v2062
    %2900 = vmatpush.bf16.msra.mxu0 %v2058
    %2901 = vmatpush.bf16.msra.mxu0 %v2054
    %2902 = vmatpush.bf16.msra.mxu0 %v2050
    %2903 = vmatpush.bf16.msra.mxu0 %v2046
    %2904 = vmatpush.bf16.msra.mxu0 %v2042
    %2905 = vmatpush.bf16.msra.mxu0 %v2038
    %2906 = vmatpush.bf16.msra.mxu0 %v2034
    %2907 = vmatmul.bf16.gmra.mxu0 %v153
    %v2908 = vpop.f32.mrf.mxu0
    %v2909 = vadd.f32 %v2890, %v2908
    %v2910 = vpop.f32.mrf.mxu0
    %v2911 = vadd.f32 %v2892, %v2910
    %2912 = vmatmul.bf16.gmra.mxu0 %v165
    %v2913 = vpop.f32.mrf.mxu0
    %v2914 = vadd.f32 %v2895, %v2913
    %v2915 = vpop.f32.mrf.mxu0
    %v2916 = vadd.f32 %v2897, %v2915
    %2917 = vdwg.mxu0
    %2918 = vmatpush.bf16.msra.mxu0 %v2094
    %2919 = vmatpush.bf16.msra.mxu0 %v2090
    %2920 = vmatpush.bf16.msra.mxu0 %v2086
    %2921 = vmatpush.bf16.msra.mxu0 %v2082
    %2922 = vmatpush.bf16.msra.mxu0 %v2078
    %2923 = vmatpush.bf16.msra.mxu0 %v2074
    %2924 = vmatpush.bf16.msra.mxu0 %v2070
    %2925 = vmatpush.bf16.msra.mxu0 %v2066
    %2926 = vmatmul.bf16.gmra.mxu0 %v154
    %v2927 = vpop.f32.mrf.mxu0
    %v2928 = vadd.f32 %v2909, %v2927
    %v2929 = vpop.f32.mrf.mxu0
    %v2930 = vadd.f32 %v2911, %v2929
    %2931 = vmatmul.bf16.gmra.mxu0 %v166
    %v2932 = vpop.f32.mrf.mxu0
    %v2933 = vadd.f32 %v2914, %v2932
    %v2934 = vpop.f32.mrf.mxu0
    %v2935 = vadd.f32 %v2916, %v2934
    %2936 = vdwg.mxu0
    %2937 = vmatpush.bf16.msra.mxu0 %v1743
    %2938 = vmatpush.bf16.msra.mxu0 %v1739
    %2939 = vmatpush.bf16.msra.mxu0 %v1735
    %2940 = vmatpush.bf16.msra.mxu0 %v1731
    %2941 = vmatpush.bf16.msra.mxu0 %v1727
    %2942 = vmatpush.bf16.msra.mxu0 %v1723
    %2943 = vmatpush.bf16.msra.mxu0 %v1719
    %2944 = vmatpush.bf16.msra.mxu0 %v1715
    %2945 = vmatmul.bf16.gmra.mxu0 %v143
    %v2946 = vpop.f32.mrf.mxu0
    %v2947 = vadd.f32 %v555, %v2946
    %v2948 = vpop.f32.mrf.mxu0
    %v2949 = vadd.f32 %v555, %v2948
    %2950 = vmatmul.bf16.gmra.mxu0 %v155
    %v2951 = vpop.f32.mrf.mxu0
    %v2952 = vadd.f32 %v555, %v2951
    %v2953 = vpop.f32.mrf.mxu0
    %v2954 = vadd.f32 %v555, %v2953
    %2955 = vdwg.mxu0
    %2956 = vmatpush.bf16.msra.mxu0 %v1775
    %2957 = vmatpush.bf16.msra.mxu0 %v1771
    %2958 = vmatpush.bf16.msra.mxu0 %v1767
    %2959 = vmatpush.bf16.msra.mxu0 %v1763
    %2960 = vmatpush.bf16.msra.mxu0 %v1759
    %2961 = vmatpush.bf16.msra.mxu0 %v1755
    %2962 = vmatpush.bf16.msra.mxu0 %v1751
    %2963 = vmatpush.bf16.msra.mxu0 %v1747
    %2964 = vmatmul.bf16.gmra.mxu0 %v144
    %v2965 = vpop.f32.mrf.mxu0
    %v2966 = vadd.f32 %v2947, %v2965
    %v2967 = vpop.f32.mrf.mxu0
    %v2968 = vadd.f32 %v2949, %v2967
    %2969 = vmatmul.bf16.gmra.mxu0 %v156
    %v2970 = vpop.f32.mrf.mxu0
    %v2971 = vadd.f32 %v2952, %v2970
    %v2972 = vpop.f32.mrf.mxu0
    %v2973 = vadd.f32 %v2954, %v2972
    %2974 = vdwg.mxu0
    %2975 = vmatpush.bf16.msra.mxu0 %v1807
    %2976 = vmatpush.bf16.msra.mxu0 %v1803
    %2977 = vmatpush.bf16.msra.mxu0 %v1799
    %2978 = vmatpush.bf16.msra.mxu0 %v1795
    %2979 = vmatpush.bf16.msra.mxu0 %v1791
    %2980 = vmatpush.bf16.msra.mxu0 %v1787
    %2981 = vmatpush.bf16.msra.mxu0 %v1783
    %2982 = vmatpush.bf16.msra.mxu0 %v1779
    %2983 = vmatmul.bf16.gmra.mxu0 %v145
    %v2984 = vpop.f32.mrf.mxu0
    %v2985 = vadd.f32 %v2966, %v2984
    %v2986 = vpop.f32.mrf.mxu0
    %v2987 = vadd.f32 %v2968, %v2986
    %2988 = vmatmul.bf16.gmra.mxu0 %v157
    %v2989 = vpop.f32.mrf.mxu0
    %v2990 = vadd.f32 %v2971, %v2989
    %v2991 = vpop.f32.mrf.mxu0
    %v2992 = vadd.f32 %v2973, %v2991
    %2993 = vdwg.mxu0
    %2994 = vmatpush.bf16.msra.mxu0 %v1839
    %2995 = vmatpush.bf16.msra.mxu0 %v1835
    %2996 = vmatpush.bf16.msra.mxu0 %v1831
    %2997 = vmatpush.bf16.msra.mxu0 %v1827
    %2998 = vmatpush.bf16.msra.mxu0 %v1823
    %2999 = vmatpush.bf16.msra.mxu0 %v1819
    %3000 = vmatpush.bf16.msra.mxu0 %v1815
    %3001 = vmatpush.bf16.msra.mxu0 %v1811
    %3002 = vmatmul.bf16.gmra.mxu0 %v146
    %v3003 = vpop.f32.mrf.mxu0
    %v3004 = vadd.f32 %v2985, %v3003
    %v3005 = vpop.f32.mrf.mxu0
    %v3006 = vadd.f32 %v2987, %v3005
    %3007 = vmatmul.bf16.gmra.mxu0 %v158
    %v3008 = vpop.f32.mrf.mxu0
    %v3009 = vadd.f32 %v2990, %v3008
    %v3010 = vpop.f32.mrf.mxu0
    %v3011 = vadd.f32 %v2992, %v3010
    %3012 = vdwg.mxu0
    %3013 = vmatpush.bf16.msra.mxu0 %v1871
    %3014 = vmatpush.bf16.msra.mxu0 %v1867
    %3015 = vmatpush.bf16.msra.mxu0 %v1863
    %3016 = vmatpush.bf16.msra.mxu0 %v1859
    %3017 = vmatpush.bf16.msra.mxu0 %v1855
    %3018 = vmatpush.bf16.msra.mxu0 %v1851
    %3019 = vmatpush.bf16.msra.mxu0 %v1847
    %3020 = vmatpush.bf16.msra.mxu0 %v1843
    %3021 = vmatmul.bf16.gmra.mxu0 %v147
    %v3022 = vpop.f32.mrf.mxu0
    %v3023 = vadd.f32 %v3004, %v3022
    %v3024 = vpop.f32.mrf.mxu0
    %v3025 = vadd.f32 %v3006, %v3024
    %3026 = vmatmul.bf16.gmra.mxu0 %v159
    %v3027 = vpop.f32.mrf.mxu0
    %v3028 = vadd.f32 %v3009, %v3027
    %v3029 = vpop.f32.mrf.mxu0
    %v3030 = vadd.f32 %v3011, %v3029
    %3031 = vdwg.mxu0
    %3032 = vmatpush.bf16.msra.mxu0 %v1903
    %3033 = vmatpush.bf16.msra.mxu0 %v1899
    %3034 = vmatpush.bf16.msra.mxu0 %v1895
    %3035 = vmatpush.bf16.msra.mxu0 %v1891
    %3036 = vmatpush.bf16.msra.mxu0 %v1887
    %3037 = vmatpush.bf16.msra.mxu0 %v1883
    %3038 = vmatpush.bf16.msra.mxu0 %v1879
    %3039 = vmatpush.bf16.msra.mxu0 %v1875
    %3040 = vmatmul.bf16.gmra.mxu0 %v148
    %v3041 = vpop.f32.mrf.mxu0
    %v3042 = vadd.f32 %v3023, %v3041
    %v3043 = vpop.f32.mrf.mxu0
    %v3044 = vadd.f32 %v3025, %v3043
    %3045 = vmatmul.bf16.gmra.mxu0 %v160
    %v3046 = vpop.f32.mrf.mxu0
    %v3047 = vadd.f32 %v3028, %v3046
    %v3048 = vpop.f32.mrf.mxu0
    %v3049 = vadd.f32 %v3030, %v3048
    %3050 = vdwg.mxu0
    %3051 = vmatpush.bf16.msra.mxu0 %v1935
    %3052 = vmatpush.bf16.msra.mxu0 %v1931
    %3053 = vmatpush.bf16.msra.mxu0 %v1927
    %3054 = vmatpush.bf16.msra.mxu0 %v1923
    %3055 = vmatpush.bf16.msra.mxu0 %v1919
    %3056 = vmatpush.bf16.msra.mxu0 %v1915
    %3057 = vmatpush.bf16.msra.mxu0 %v1911
    %3058 = vmatpush.bf16.msra.mxu0 %v1907
    %3059 = vmatmul.bf16.gmra.mxu0 %v149
    %v3060 = vpop.f32.mrf.mxu0
    %v3061 = vadd.f32 %v3042, %v3060
    %v3062 = vpop.f32.mrf.mxu0
    %v3063 = vadd.f32 %v3044, %v3062
    %3064 = vmatmul.bf16.gmra.mxu0 %v161
    %v3065 = vpop.f32.mrf.mxu0
    %v3066 = vadd.f32 %v3047, %v3065
    %v3067 = vpop.f32.mrf.mxu0
    %v3068 = vadd.f32 %v3049, %v3067
    %3069 = vdwg.mxu0
    %3070 = vmatpush.bf16.msra.mxu0 %v1967
    %3071 = vmatpush.bf16.msra.mxu0 %v1963
    %3072 = vmatpush.bf16.msra.mxu0 %v1959
    %3073 = vmatpush.bf16.msra.mxu0 %v1955
    %3074 = vmatpush.bf16.msra.mxu0 %v1951
    %3075 = vmatpush.bf16.msra.mxu0 %v1947
    %3076 = vmatpush.bf16.msra.mxu0 %v1943
    %3077 = vmatpush.bf16.msra.mxu0 %v1939
    %3078 = vmatmul.bf16.gmra.mxu0 %v150
    %v3079 = vpop.f32.mrf.mxu0
    %v3080 = vadd.f32 %v3061, %v3079
    %v3081 = vpop.f32.mrf.mxu0
    %v3082 = vadd.f32 %v3063, %v3081
    %3083 = vmatmul.bf16.gmra.mxu0 %v162
    %v3084 = vpop.f32.mrf.mxu0
    %v3085 = vadd.f32 %v3066, %v3084
    %v3086 = vpop.f32.mrf.mxu0
    %v3087 = vadd.f32 %v3068, %v3086
    %3088 = vdwg.mxu0
    %3089 = vmatpush.bf16.msra.mxu0 %v1999
    %3090 = vmatpush.bf16.msra.mxu0 %v1995
    %3091 = vmatpush.bf16.msra.mxu0 %v1991
    %3092 = vmatpush.bf16.msra.mxu0 %v1987
    %3093 = vmatpush.bf16.msra.mxu0 %v1983
    %3094 = vmatpush.bf16.msra.mxu0 %v1979
    %3095 = vmatpush.bf16.msra.mxu0 %v1975
    %3096 = vmatpush.bf16.msra.mxu0 %v1971
    %3097 = vmatmul.bf16.gmra.mxu0 %v151
    %v3098 = vpop.f32.mrf.mxu0
    %v3099 = vadd.f32 %v3080, %v3098
    %v3100 = vpop.f32.mrf.mxu0
    %v3101 = vadd.f32 %v3082, %v3100
    %3102 = vmatmul.bf16.gmra.mxu0 %v163
    %v3103 = vpop.f32.mrf.mxu0
    %v3104 = vadd.f32 %v3085, %v3103
    %v3105 = vpop.f32.mrf.mxu0
    %v3106 = vadd.f32 %v3087, %v3105
    %3107 = vdwg.mxu0
    %3108 = vmatpush.bf16.msra.mxu0 %v2031
    %3109 = vmatpush.bf16.msra.mxu0 %v2027
    %3110 = vmatpush.bf16.msra.mxu0 %v2023
    %3111 = vmatpush.bf16.msra.mxu0 %v2019
    %3112 = vmatpush.bf16.msra.mxu0 %v2015
    %3113 = vmatpush.bf16.msra.mxu0 %v2011
    %3114 = vmatpush.bf16.msra.mxu0 %v2007
    %3115 = vmatpush.bf16.msra.mxu0 %v2003
    %3116 = vmatmul.bf16.gmra.mxu0 %v152
    %v3117 = vpop.f32.mrf.mxu0
    %v3118 = vadd.f32 %v3099, %v3117
    %v3119 = vpop.f32.mrf.mxu0
    %v3120 = vadd.f32 %v3101, %v3119
    %3121 = vmatmul.bf16.gmra.mxu0 %v164
    %v3122 = vpop.f32.mrf.mxu0
    %v3123 = vadd.f32 %v3104, %v3122
    %v3124 = vpop.f32.mrf.mxu0
    %v3125 = vadd.f32 %v3106, %v3124
    %3126 = vdwg.mxu0
    %3127 = vmatpush.bf16.msra.mxu0 %v2063
    %3128 = vmatpush.bf16.msra.mxu0 %v2059
    %3129 = vmatpush.bf16.msra.mxu0 %v2055
    %3130 = vmatpush.bf16.msra.mxu0 %v2051
    %3131 = vmatpush.bf16.msra.mxu0 %v2047
    %3132 = vmatpush.bf16.msra.mxu0 %v2043
    %3133 = vmatpush.bf16.msra.mxu0 %v2039
    %3134 = vmatpush.bf16.msra.mxu0 %v2035
    %3135 = vmatmul.bf16.gmra.mxu0 %v153
    %v3136 = vpop.f32.mrf.mxu0
    %v3137 = vadd.f32 %v3118, %v3136
    %v3138 = vpop.f32.mrf.mxu0
    %v3139 = vadd.f32 %v3120, %v3138
    %3140 = vmatmul.bf16.gmra.mxu0 %v165
    %v3141 = vpop.f32.mrf.mxu0
    %v3142 = vadd.f32 %v3123, %v3141
    %v3143 = vpop.f32.mrf.mxu0
    %v3144 = vadd.f32 %v3125, %v3143
    %3145 = vdwg.mxu0
    %3146 = vmatpush.bf16.msra.mxu0 %v2095
    %3147 = vmatpush.bf16.msra.mxu0 %v2091
    %3148 = vmatpush.bf16.msra.mxu0 %v2087
    %3149 = vmatpush.bf16.msra.mxu0 %v2083
    %3150 = vmatpush.bf16.msra.mxu0 %v2079
    %3151 = vmatpush.bf16.msra.mxu0 %v2075
    %3152 = vmatpush.bf16.msra.mxu0 %v2071
    %3153 = vmatpush.bf16.msra.mxu0 %v2067
    %3154 = vmatmul.bf16.gmra.mxu0 %v154
    %v3155 = vpop.f32.mrf.mxu0
    %v3156 = vadd.f32 %v3137, %v3155
    %v3157 = vpop.f32.mrf.mxu0
    %v3158 = vadd.f32 %v3139, %v3157
    %3159 = vmatmul.bf16.gmra.mxu0 %v166
    %v3160 = vpop.f32.mrf.mxu0
    %v3161 = vadd.f32 %v3142, %v3160
    %v3162 = vpop.f32.mrf.mxu0
    %v3163 = vadd.f32 %v3144, %v3162
    %3164 = vdwg.mxu0
    %3165 = vmatpush.bf16.msra.mxu0 %v1744
    %3166 = vmatpush.bf16.msra.mxu0 %v1740
    %3167 = vmatpush.bf16.msra.mxu0 %v1736
    %3168 = vmatpush.bf16.msra.mxu0 %v1732
    %3169 = vmatpush.bf16.msra.mxu0 %v1728
    %3170 = vmatpush.bf16.msra.mxu0 %v1724
    %3171 = vmatpush.bf16.msra.mxu0 %v1720
    %3172 = vmatpush.bf16.msra.mxu0 %v1716
    %3173 = vmatmul.bf16.gmra.mxu0 %v143
    %v3174 = vpop.f32.mrf.mxu0
    %v3175 = vadd.f32 %v556, %v3174
    %v3176 = vpop.f32.mrf.mxu0
    %v3177 = vadd.f32 %v556, %v3176
    %3178 = vmatmul.bf16.gmra.mxu0 %v155
    %v3179 = vpop.f32.mrf.mxu0
    %v3180 = vadd.f32 %v556, %v3179
    %v3181 = vpop.f32.mrf.mxu0
    %v3182 = vadd.f32 %v556, %v3181
    %3183 = vdwg.mxu0
    %3184 = vmatpush.bf16.msra.mxu0 %v1776
    %3185 = vmatpush.bf16.msra.mxu0 %v1772
    %3186 = vmatpush.bf16.msra.mxu0 %v1768
    %3187 = vmatpush.bf16.msra.mxu0 %v1764
    %3188 = vmatpush.bf16.msra.mxu0 %v1760
    %3189 = vmatpush.bf16.msra.mxu0 %v1756
    %3190 = vmatpush.bf16.msra.mxu0 %v1752
    %3191 = vmatpush.bf16.msra.mxu0 %v1748
    %3192 = vmatmul.bf16.gmra.mxu0 %v144
    %v3193 = vpop.f32.mrf.mxu0
    %v3194 = vadd.f32 %v3175, %v3193
    %v3195 = vpop.f32.mrf.mxu0
    %v3196 = vadd.f32 %v3177, %v3195
    %3197 = vmatmul.bf16.gmra.mxu0 %v156
    %v3198 = vpop.f32.mrf.mxu0
    %v3199 = vadd.f32 %v3180, %v3198
    %v3200 = vpop.f32.mrf.mxu0
    %v3201 = vadd.f32 %v3182, %v3200
    %3202 = vdwg.mxu0
    %3203 = vmatpush.bf16.msra.mxu0 %v1808
    %3204 = vmatpush.bf16.msra.mxu0 %v1804
    %3205 = vmatpush.bf16.msra.mxu0 %v1800
    %3206 = vmatpush.bf16.msra.mxu0 %v1796
    %3207 = vmatpush.bf16.msra.mxu0 %v1792
    %3208 = vmatpush.bf16.msra.mxu0 %v1788
    %3209 = vmatpush.bf16.msra.mxu0 %v1784
    %3210 = vmatpush.bf16.msra.mxu0 %v1780
    %3211 = vmatmul.bf16.gmra.mxu0 %v145
    %v3212 = vpop.f32.mrf.mxu0
    %v3213 = vadd.f32 %v3194, %v3212
    %v3214 = vpop.f32.mrf.mxu0
    %v3215 = vadd.f32 %v3196, %v3214
    %3216 = vmatmul.bf16.gmra.mxu0 %v157
    %v3217 = vpop.f32.mrf.mxu0
    %v3218 = vadd.f32 %v3199, %v3217
    %v3219 = vpop.f32.mrf.mxu0
    %v3220 = vadd.f32 %v3201, %v3219
    %3221 = vdwg.mxu0
    %3222 = vmatpush.bf16.msra.mxu0 %v1840
    %3223 = vmatpush.bf16.msra.mxu0 %v1836
    %3224 = vmatpush.bf16.msra.mxu0 %v1832
    %3225 = vmatpush.bf16.msra.mxu0 %v1828
    %3226 = vmatpush.bf16.msra.mxu0 %v1824
    %3227 = vmatpush.bf16.msra.mxu0 %v1820
    %3228 = vmatpush.bf16.msra.mxu0 %v1816
    %3229 = vmatpush.bf16.msra.mxu0 %v1812
    %3230 = vmatmul.bf16.gmra.mxu0 %v146
    %v3231 = vpop.f32.mrf.mxu0
    %v3232 = vadd.f32 %v3213, %v3231
    %v3233 = vpop.f32.mrf.mxu0
    %v3234 = vadd.f32 %v3215, %v3233
    %3235 = vmatmul.bf16.gmra.mxu0 %v158
    %v3236 = vpop.f32.mrf.mxu0
    %v3237 = vadd.f32 %v3218, %v3236
    %v3238 = vpop.f32.mrf.mxu0
    %v3239 = vadd.f32 %v3220, %v3238
    %3240 = vdwg.mxu0
    %3241 = vmatpush.bf16.msra.mxu0 %v1872
    %3242 = vmatpush.bf16.msra.mxu0 %v1868
    %3243 = vmatpush.bf16.msra.mxu0 %v1864
    %3244 = vmatpush.bf16.msra.mxu0 %v1860
    %3245 = vmatpush.bf16.msra.mxu0 %v1856
    %3246 = vmatpush.bf16.msra.mxu0 %v1852
    %3247 = vmatpush.bf16.msra.mxu0 %v1848
    %3248 = vmatpush.bf16.msra.mxu0 %v1844
    %3249 = vmatmul.bf16.gmra.mxu0 %v147
    %v3250 = vpop.f32.mrf.mxu0
    %v3251 = vadd.f32 %v3232, %v3250
    %v3252 = vpop.f32.mrf.mxu0
    %v3253 = vadd.f32 %v3234, %v3252
    %3254 = vmatmul.bf16.gmra.mxu0 %v159
    %v3255 = vpop.f32.mrf.mxu0
    %v3256 = vadd.f32 %v3237, %v3255
    %v3257 = vpop.f32.mrf.mxu0
    %v3258 = vadd.f32 %v3239, %v3257
    %3259 = vdwg.mxu0
    %3260 = vmatpush.bf16.msra.mxu0 %v1904
    %3261 = vmatpush.bf16.msra.mxu0 %v1900
    %3262 = vmatpush.bf16.msra.mxu0 %v1896
    %3263 = vmatpush.bf16.msra.mxu0 %v1892
    %3264 = vmatpush.bf16.msra.mxu0 %v1888
    %3265 = vmatpush.bf16.msra.mxu0 %v1884
    %3266 = vmatpush.bf16.msra.mxu0 %v1880
    %3267 = vmatpush.bf16.msra.mxu0 %v1876
    %3268 = vmatmul.bf16.gmra.mxu0 %v148
    %v3269 = vpop.f32.mrf.mxu0
    %v3270 = vadd.f32 %v3251, %v3269
    %v3271 = vpop.f32.mrf.mxu0
    %v3272 = vadd.f32 %v3253, %v3271
    %3273 = vmatmul.bf16.gmra.mxu0 %v160
    %v3274 = vpop.f32.mrf.mxu0
    %v3275 = vadd.f32 %v3256, %v3274
    %v3276 = vpop.f32.mrf.mxu0
    %v3277 = vadd.f32 %v3258, %v3276
    %3278 = vdwg.mxu0
    %3279 = vmatpush.bf16.msra.mxu0 %v1936
    %3280 = vmatpush.bf16.msra.mxu0 %v1932
    %3281 = vmatpush.bf16.msra.mxu0 %v1928
    %3282 = vmatpush.bf16.msra.mxu0 %v1924
    %3283 = vmatpush.bf16.msra.mxu0 %v1920
    %3284 = vmatpush.bf16.msra.mxu0 %v1916
    %3285 = vmatpush.bf16.msra.mxu0 %v1912
    %3286 = vmatpush.bf16.msra.mxu0 %v1908
    %3287 = vmatmul.bf16.gmra.mxu0 %v149
    %v3288 = vpop.f32.mrf.mxu0
    %v3289 = vadd.f32 %v3270, %v3288
    %v3290 = vpop.f32.mrf.mxu0
    %v3291 = vadd.f32 %v3272, %v3290
    %3292 = vmatmul.bf16.gmra.mxu0 %v161
    %v3293 = vpop.f32.mrf.mxu0
    %v3294 = vadd.f32 %v3275, %v3293
    %v3295 = vpop.f32.mrf.mxu0
    %v3296 = vadd.f32 %v3277, %v3295
    %3297 = vdwg.mxu0
    %3298 = vmatpush.bf16.msra.mxu0 %v1968
    %3299 = vmatpush.bf16.msra.mxu0 %v1964
    %3300 = vmatpush.bf16.msra.mxu0 %v1960
    %3301 = vmatpush.bf16.msra.mxu0 %v1956
    %3302 = vmatpush.bf16.msra.mxu0 %v1952
    %3303 = vmatpush.bf16.msra.mxu0 %v1948
    %3304 = vmatpush.bf16.msra.mxu0 %v1944
    %3305 = vmatpush.bf16.msra.mxu0 %v1940
    %3306 = vmatmul.bf16.gmra.mxu0 %v150
    %v3307 = vpop.f32.mrf.mxu0
    %v3308 = vadd.f32 %v3289, %v3307
    %v3309 = vpop.f32.mrf.mxu0
    %v3310 = vadd.f32 %v3291, %v3309
    %3311 = vmatmul.bf16.gmra.mxu0 %v162
    %v3312 = vpop.f32.mrf.mxu0
    %v3313 = vadd.f32 %v3294, %v3312
    %v3314 = vpop.f32.mrf.mxu0
    %v3315 = vadd.f32 %v3296, %v3314
    %3316 = vdwg.mxu0
    %3317 = vmatpush.bf16.msra.mxu0 %v2000
    %3318 = vmatpush.bf16.msra.mxu0 %v1996
    %3319 = vmatpush.bf16.msra.mxu0 %v1992
    %3320 = vmatpush.bf16.msra.mxu0 %v1988
    %3321 = vmatpush.bf16.msra.mxu0 %v1984
    %3322 = vmatpush.bf16.msra.mxu0 %v1980
    %3323 = vmatpush.bf16.msra.mxu0 %v1976
    %3324 = vmatpush.bf16.msra.mxu0 %v1972
    %3325 = vmatmul.bf16.gmra.mxu0 %v151
    %v3326 = vpop.f32.mrf.mxu0
    %v3327 = vadd.f32 %v3308, %v3326
    %v3328 = vpop.f32.mrf.mxu0
    %v3329 = vadd.f32 %v3310, %v3328
    %3330 = vmatmul.bf16.gmra.mxu0 %v163
    %v3331 = vpop.f32.mrf.mxu0
    %v3332 = vadd.f32 %v3313, %v3331
    %v3333 = vpop.f32.mrf.mxu0
    %v3334 = vadd.f32 %v3315, %v3333
    %3335 = vdwg.mxu0
    %3336 = vmatpush.bf16.msra.mxu0 %v2032
    %3337 = vmatpush.bf16.msra.mxu0 %v2028
    %3338 = vmatpush.bf16.msra.mxu0 %v2024
    %3339 = vmatpush.bf16.msra.mxu0 %v2020
    %3340 = vmatpush.bf16.msra.mxu0 %v2016
    %3341 = vmatpush.bf16.msra.mxu0 %v2012
    %3342 = vmatpush.bf16.msra.mxu0 %v2008
    %3343 = vmatpush.bf16.msra.mxu0 %v2004
    %3344 = vmatmul.bf16.gmra.mxu0 %v152
    %v3345 = vpop.f32.mrf.mxu0
    %v3346 = vadd.f32 %v3327, %v3345
    %v3347 = vpop.f32.mrf.mxu0
    %v3348 = vadd.f32 %v3329, %v3347
    %3349 = vmatmul.bf16.gmra.mxu0 %v164
    %v3350 = vpop.f32.mrf.mxu0
    %v3351 = vadd.f32 %v3332, %v3350
    %v3352 = vpop.f32.mrf.mxu0
    %v3353 = vadd.f32 %v3334, %v3352
    %3354 = vdwg.mxu0
    %3355 = vmatpush.bf16.msra.mxu0 %v2064
    %3356 = vmatpush.bf16.msra.mxu0 %v2060
    %3357 = vmatpush.bf16.msra.mxu0 %v2056
    %3358 = vmatpush.bf16.msra.mxu0 %v2052
    %3359 = vmatpush.bf16.msra.mxu0 %v2048
    %3360 = vmatpush.bf16.msra.mxu0 %v2044
    %3361 = vmatpush.bf16.msra.mxu0 %v2040
    %3362 = vmatpush.bf16.msra.mxu0 %v2036
    %3363 = vmatmul.bf16.gmra.mxu0 %v153
    %v3364 = vpop.f32.mrf.mxu0
    %v3365 = vadd.f32 %v3346, %v3364
    %v3366 = vpop.f32.mrf.mxu0
    %v3367 = vadd.f32 %v3348, %v3366
    %3368 = vmatmul.bf16.gmra.mxu0 %v165
    %v3369 = vpop.f32.mrf.mxu0
    %v3370 = vadd.f32 %v3351, %v3369
    %v3371 = vpop.f32.mrf.mxu0
    %v3372 = vadd.f32 %v3353, %v3371
    %3373 = vdwg.mxu0
    %3374 = vmatpush.bf16.msra.mxu0 %v2096
    %3375 = vmatpush.bf16.msra.mxu0 %v2092
    %3376 = vmatpush.bf16.msra.mxu0 %v2088
    %3377 = vmatpush.bf16.msra.mxu0 %v2084
    %3378 = vmatpush.bf16.msra.mxu0 %v2080
    %3379 = vmatpush.bf16.msra.mxu0 %v2076
    %3380 = vmatpush.bf16.msra.mxu0 %v2072
    %3381 = vmatpush.bf16.msra.mxu0 %v2068
    %3382 = vmatmul.bf16.gmra.mxu0 %v154
    %v3383 = vpop.f32.mrf.mxu0
    %v3384 = vadd.f32 %v3365, %v3383
    %v3385 = vpop.f32.mrf.mxu0
    %v3386 = vadd.f32 %v3367, %v3385
    %3387 = vmatmul.bf16.gmra.mxu0 %v166
    %v3388 = vpop.f32.mrf.mxu0
    %v3389 = vadd.f32 %v3370, %v3388
    %v3390 = vpop.f32.mrf.mxu0
    %v3391 = vadd.f32 %v3372, %v3390
    %3392 = vdwg.mxu0
    %v3393 = vmax.f32 %v2700, 0.0
    %v3394 = vmax.f32 %v2928, 0.0
    %v3395 = vmax.f32 %v3156, 0.0
    %v3396 = vmax.f32 %v3384, 0.0
    %v3397 = vmax.f32 %v2702, 0.0
    %v3398 = vmax.f32 %v2930, 0.0
    %v3399 = vmax.f32 %v3158, 0.0
    %v3400 = vmax.f32 %v3386, 0.0
    %v3401 = vmax.f32 %v2705, 0.0
    %v3402 = vmax.f32 %v2933, 0.0
    %v3403 = vmax.f32 %v3161, 0.0
    %v3404 = vmax.f32 %v3389, 0.0
    %v3405 = vmax.f32 %v2707, 0.0
    %v3406 = vmax.f32 %v2935, 0.0
    %v3407 = vmax.f32 %v3163, 0.0
    %v3408 = vmax.f32 %v3391, 0.0
    %v3409 = vpack.c.bf16 %v3397, %v3393
    %v3410 = vpack.c.bf16 %v3398, %v3394
    %v3411 = vpack.c.bf16 %v3399, %v3395
    %v3412 = vpack.c.bf16 %v3400, %v3396
    %v3413 = vpack.c.bf16 %v3405, %v3401
    %v3414 = vpack.c.bf16 %v3406, %v3402
    %v3415 = vpack.c.bf16 %v3407, %v3403
    %v3416 = vpack.c.bf16 %v3408, %v3404
    %v3417 = vld [vmem:[#allocation8] sm:$0xf]
    %v3418 = vld [vmem:[#allocation8 + $0x4] sm:$0xf]
    %v3419 = vld [vmem:[#allocation8 + $0x8] sm:$0xf]
    %v3420 = vld [vmem:[#allocation8 + $0xc] sm:$0xf]
    %v3421 = vld [vmem:[#allocation8 + $0x10] sm:$0xf]
    %v3422 = vld [vmem:[#allocation8 + $0x14] sm:$0xf]
    %v3423 = vld [vmem:[#allocation8 + $0x18] sm:$0xf]
    %v3424 = vld [vmem:[#allocation8 + $0x1c] sm:$0xf]
    %v3425 = vld [vmem:[#allocation8 + $0x20] sm:$0xf]
    %v3426 = vld [vmem:[#allocation8 + $0x24] sm:$0xf]
    %v3427 = vld [vmem:[#allocation8 + $0x28] sm:$0xf]
    %v3428 = vld [vmem:[#allocation8 + $0x2c] sm:$0xf]
    %v3429 = vld [vmem:[#allocation8 + $0x30] sm:$0xf]
    %v3430 = vld [vmem:[#allocation8 + $0x34] sm:$0xf]
    %v3431 = vld [vmem:[#allocation8 + $0x38] sm:$0xf]
    %v3432 = vld [vmem:[#allocation8 + $0x3c] sm:$0xf]
    %v3433 = vld [vmem:[#allocation8 + $0x40] sm:$0xf]
    %v3434 = vld [vmem:[#allocation8 + $0x44] sm:$0xf]
    %v3435 = vld [vmem:[#allocation8 + $0x48] sm:$0xf]
    %v3436 = vld [vmem:[#allocation8 + $0x4c] sm:$0xf]
    %v3437 = vld [vmem:[#allocation8 + $0x50] sm:$0xf]
    %v3438 = vld [vmem:[#allocation8 + $0x54] sm:$0xf]
    %v3439 = vld [vmem:[#allocation8 + $0x58] sm:$0xf]
    %v3440 = vld [vmem:[#allocation8 + $0x5c] sm:$0xf]
    %v3441 = vld [vmem:[#allocation8 + $0x60] sm:$0xf]
    %v3442 = vld [vmem:[#allocation8 + $0x64] sm:$0xf]
    %v3443 = vld [vmem:[#allocation8 + $0x68] sm:$0xf]
    %v3444 = vld [vmem:[#allocation8 + $0x6c] sm:$0xf]
    %v3445 = vld [vmem:[#allocation8 + $0x70] sm:$0xf]
    %v3446 = vld [vmem:[#allocation8 + $0x74] sm:$0xf]
    %v3447 = vld [vmem:[#allocation8 + $0x78] sm:$0xf]
    %v3448 = vld [vmem:[#allocation8 + $0x7c] sm:$0xf]
    %v3449 = vld [vmem:[#allocation8 + $0x80] sm:$0xf]
    %v3450 = vld [vmem:[#allocation8 + $0x84] sm:$0xf]
    %v3451 = vld [vmem:[#allocation8 + $0x88] sm:$0xf]
    %v3452 = vld [vmem:[#allocation8 + $0x8c] sm:$0xf]
    %v3453 = vld [vmem:[#allocation8 + $0x90] sm:$0xf]
    %v3454 = vld [vmem:[#allocation8 + $0x94] sm:$0xf]
    %v3455 = vld [vmem:[#allocation8 + $0x98] sm:$0xf]
    %v3456 = vld [vmem:[#allocation8 + $0x9c] sm:$0xf]
    %v3457 = vld [vmem:[#allocation8 + $0xa0] sm:$0xf]
    %v3458 = vld [vmem:[#allocation8 + $0xa4] sm:$0xf]
    %v3459 = vld [vmem:[#allocation8 + $0xa8] sm:$0xf]
    %v3460 = vld [vmem:[#allocation8 + $0xac] sm:$0xf]
    %v3461 = vld [vmem:[#allocation8 + $0xb0] sm:$0xf]
    %v3462 = vld [vmem:[#allocation8 + $0xb4] sm:$0xf]
    %v3463 = vld [vmem:[#allocation8 + $0xb8] sm:$0xf]
    %v3464 = vld [vmem:[#allocation8 + $0xbc] sm:$0xf]
    %v3465 = vld [vmem:[#allocation8 + $0xc0] sm:$0xf]
    %v3466 = vld [vmem:[#allocation8 + $0xc4] sm:$0xf]
    %v3467 = vld [vmem:[#allocation8 + $0xc8] sm:$0xf]
    %v3468 = vld [vmem:[#allocation8 + $0xcc] sm:$0xf]
    %v3469 = vld [vmem:[#allocation8 + $0xd0] sm:$0xf]
    %v3470 = vld [vmem:[#allocation8 + $0xd4] sm:$0xf]
    %v3471 = vld [vmem:[#allocation8 + $0xd8] sm:$0xf]
    %v3472 = vld [vmem:[#allocation8 + $0xdc] sm:$0xf]
    %v3473 = vld [vmem:[#allocation8 + $0xe0] sm:$0xf]
    %v3474 = vld [vmem:[#allocation8 + $0xe4] sm:$0xf]
    %v3475 = vld [vmem:[#allocation8 + $0xe8] sm:$0xf]
    %v3476 = vld [vmem:[#allocation8 + $0xec] sm:$0xf]
    %v3477 = vld [vmem:[#allocation8 + $0xf0] sm:$0xf]
    %v3478 = vld [vmem:[#allocation8 + $0xf4] sm:$0xf]
    %v3479 = vld [vmem:[#allocation8 + $0xf8] sm:$0xf]
    %v3480 = vld [vmem:[#allocation8 + $0xfc] sm:$0xf]
    %v3481 = vld [vmem:[#allocation10] sm:$0x1]
    %v3483 = vperm.slane %v3481, 0
    %v3549 = vunpack.c.l.b16 %v3417
    %v3550 = vunpack.c.l.b16 %v3418
    %v3551 = vunpack.c.l.b16 %v3419
    %v3552 = vunpack.c.l.b16 %v3420
    %v3553 = vunpack.c.l.b16 %v3421
    %v3554 = vunpack.c.l.b16 %v3422
    %v3555 = vunpack.c.l.b16 %v3423
    %v3556 = vunpack.c.l.b16 %v3424
    %v3557 = vunpack.c.l.b16 %v3425
    %v3558 = vunpack.c.l.b16 %v3426
    %v3559 = vunpack.c.l.b16 %v3427
    %v3560 = vunpack.c.l.b16 %v3428
    %v3561 = vunpack.c.l.b16 %v3429
    %v3562 = vunpack.c.l.b16 %v3430
    %v3563 = vunpack.c.l.b16 %v3431
    %v3564 = vunpack.c.l.b16 %v3432
    %v3565 = vunpack.c.l.b16 %v3433
    %v3566 = vunpack.c.l.b16 %v3434
    %v3567 = vunpack.c.l.b16 %v3435
    %v3568 = vunpack.c.l.b16 %v3436
    %v3569 = vunpack.c.l.b16 %v3437
    %v3570 = vunpack.c.l.b16 %v3438
    %v3571 = vunpack.c.l.b16 %v3439
    %v3572 = vunpack.c.l.b16 %v3440
    %v3573 = vunpack.c.l.b16 %v3441
    %v3574 = vunpack.c.l.b16 %v3442
    %v3575 = vunpack.c.l.b16 %v3443
    %v3576 = vunpack.c.l.b16 %v3444
    %v3577 = vunpack.c.l.b16 %v3445
    %v3578 = vunpack.c.l.b16 %v3446
    %v3579 = vunpack.c.l.b16 %v3447
    %v3580 = vunpack.c.l.b16 %v3448
    %v3581 = vunpack.c.l.b16 %v3449
    %v3582 = vunpack.c.l.b16 %v3450
    %v3583 = vunpack.c.l.b16 %v3451
    %v3584 = vunpack.c.l.b16 %v3452
    %v3585 = vunpack.c.l.b16 %v3453
    %v3586 = vunpack.c.l.b16 %v3454
    %v3587 = vunpack.c.l.b16 %v3455
    %v3588 = vunpack.c.l.b16 %v3456
    %v3589 = vunpack.c.l.b16 %v3457
    %v3590 = vunpack.c.l.b16 %v3458
    %v3591 = vunpack.c.l.b16 %v3459
    %v3592 = vunpack.c.l.b16 %v3460
    %v3593 = vunpack.c.l.b16 %v3461
    %v3594 = vunpack.c.l.b16 %v3462
    %v3595 = vunpack.c.l.b16 %v3463
    %v3596 = vunpack.c.l.b16 %v3464
    %v3597 = vunpack.c.l.b16 %v3465
    %v3598 = vunpack.c.l.b16 %v3466
    %v3599 = vunpack.c.l.b16 %v3467
    %v3600 = vunpack.c.l.b16 %v3468
    %v3601 = vunpack.c.l.b16 %v3469
    %v3602 = vunpack.c.l.b16 %v3470
    %v3603 = vunpack.c.l.b16 %v3471
    %v3604 = vunpack.c.l.b16 %v3472
    %v3605 = vunpack.c.l.b16 %v3473
    %v3606 = vunpack.c.l.b16 %v3474
    %v3607 = vunpack.c.l.b16 %v3475
    %v3608 = vunpack.c.l.b16 %v3476
    %v3609 = vunpack.c.l.b16 %v3477
    %v3610 = vunpack.c.l.b16 %v3478
    %v3611 = vunpack.c.l.b16 %v3479
    %v3612 = vunpack.c.l.b16 %v3480
    %v3613 = vpack.c.b16 %v3550, %v3549
    %v3614 = vpack.c.b16 %v3552, %v3551
    %v3615 = vpack.c.b16 %v3554, %v3553
    %v3616 = vpack.c.b16 %v3556, %v3555
    %v3617 = vpack.c.b16 %v3558, %v3557
    %v3618 = vpack.c.b16 %v3560, %v3559
    %v3619 = vpack.c.b16 %v3562, %v3561
    %v3620 = vpack.c.b16 %v3564, %v3563
    %v3621 = vpack.c.b16 %v3566, %v3565
    %v3622 = vpack.c.b16 %v3568, %v3567
    %v3623 = vpack.c.b16 %v3570, %v3569
    %v3624 = vpack.c.b16 %v3572, %v3571
    %v3625 = vpack.c.b16 %v3574, %v3573
    %v3626 = vpack.c.b16 %v3576, %v3575
    %v3627 = vpack.c.b16 %v3578, %v3577
    %v3628 = vpack.c.b16 %v3580, %v3579
    %v3629 = vpack.c.b16 %v3582, %v3581
    %v3630 = vpack.c.b16 %v3584, %v3583
    %v3631 = vpack.c.b16 %v3586, %v3585
    %v3632 = vpack.c.b16 %v3588, %v3587
    %v3633 = vpack.c.b16 %v3590, %v3589
    %v3634 = vpack.c.b16 %v3592, %v3591
    %v3635 = vpack.c.b16 %v3594, %v3593
    %v3636 = vpack.c.b16 %v3596, %v3595
    %v3637 = vpack.c.b16 %v3598, %v3597
    %v3638 = vpack.c.b16 %v3600, %v3599
    %v3639 = vpack.c.b16 %v3602, %v3601
    %v3640 = vpack.c.b16 %v3604, %v3603
    %v3641 = vpack.c.b16 %v3606, %v3605
    %v3642 = vpack.c.b16 %v3608, %v3607
    %v3643 = vpack.c.b16 %v3610, %v3609
    %v3644 = vpack.c.b16 %v3612, %v3611
    %3677 = vmatpush.bf16.msra.mxu0 %v3620
    %3678 = vmatpush.bf16.msra.mxu0 %v3619
    %3679 = vmatpush.bf16.msra.mxu0 %v3618
    %3680 = vmatpush.bf16.msra.mxu0 %v3617
    %3681 = vmatpush.bf16.msra.mxu0 %v3616
    %3682 = vmatpush.bf16.msra.mxu0 %v3615
    %3683 = vmatpush.bf16.msra.mxu0 %v3614
    %3684 = vmatpush.bf16.msra.mxu0 %v3613
    %3685 = vmatmul.bf16.gmra.mxu0 %v3409
    %v3686 = vpop.f32.mrf.mxu0
    %v3687 = vadd.f32 %v3483, %v3686
    %v3688 = vpop.f32.mrf.mxu0
    %v3689 = vadd.f32 %v3483, %v3688
    %3690 = vmatmul.bf16.gmra.mxu0 %v3413
    %v3691 = vpop.f32.mrf.mxu0
    %v3692 = vadd.f32 %v3483, %v3691
    %v3693 = vpop.f32.mrf.mxu0
    %v3694 = vadd.f32 %v3483, %v3693
    %3695 = vdwg.mxu0
    %3696 = vmatpush.bf16.msra.mxu0 %v3628
    %3697 = vmatpush.bf16.msra.mxu0 %v3627
    %3698 = vmatpush.bf16.msra.mxu0 %v3626
    %3699 = vmatpush.bf16.msra.mxu0 %v3625
    %3700 = vmatpush.bf16.msra.mxu0 %v3624
    %3701 = vmatpush.bf16.msra.mxu0 %v3623
    %3702 = vmatpush.bf16.msra.mxu0 %v3622
    %3703 = vmatpush.bf16.msra.mxu0 %v3621
    %3704 = vmatmul.bf16.gmra.mxu0 %v3410
    %v3705 = vpop.f32.mrf.mxu0
    %v3706 = vadd.f32 %v3687, %v3705
    %v3707 = vpop.f32.mrf.mxu0
    %v3708 = vadd.f32 %v3689, %v3707
    %3709 = vmatmul.bf16.gmra.mxu0 %v3414
    %v3710 = vpop.f32.mrf.mxu0
    %v3711 = vadd.f32 %v3692, %v3710
    %v3712 = vpop.f32.mrf.mxu0
    %v3713 = vadd.f32 %v3694, %v3712
    %3714 = vdwg.mxu0
    %3715 = vmatpush.bf16.msra.mxu0 %v3636
    %3716 = vmatpush.bf16.msra.mxu0 %v3635
    %3717 = vmatpush.bf16.msra.mxu0 %v3634
    %3718 = vmatpush.bf16.msra.mxu0 %v3633
    %3719 = vmatpush.bf16.msra.mxu0 %v3632
    %3720 = vmatpush.bf16.msra.mxu0 %v3631
    %3721 = vmatpush.bf16.msra.mxu0 %v3630
    %3722 = vmatpush.bf16.msra.mxu0 %v3629
    %3723 = vmatmul.bf16.gmra.mxu0 %v3411
    %v3724 = vpop.f32.mrf.mxu0
    %v3725 = vadd.f32 %v3706, %v3724
    %v3726 = vpop.f32.mrf.mxu0
    %v3727 = vadd.f32 %v3708, %v3726
    %3728 = vmatmul.bf16.gmra.mxu0 %v3415
    %v3729 = vpop.f32.mrf.mxu0
    %v3730 = vadd.f32 %v3711, %v3729
    %v3731 = vpop.f32.mrf.mxu0
    %v3732 = vadd.f32 %v3713, %v3731
    %3733 = vdwg.mxu0
    %3734 = vmatpush.bf16.msra.mxu0 %v3644
    %3735 = vmatpush.bf16.msra.mxu0 %v3643
    %3736 = vmatpush.bf16.msra.mxu0 %v3642
    %3737 = vmatpush.bf16.msra.mxu0 %v3641
    %3738 = vmatpush.bf16.msra.mxu0 %v3640
    %3739 = vmatpush.bf16.msra.mxu0 %v3639
    %3740 = vmatpush.bf16.msra.mxu0 %v3638
    %3741 = vmatpush.bf16.msra.mxu0 %v3637
    %3742 = vmatmul.bf16.gmra.mxu0 %v3412
    %v3743 = vpop.f32.mrf.mxu0
    %v3744 = vadd.f32 %v3725, %v3743
    %v3745 = vpop.f32.mrf.mxu0
    %v3746 = vadd.f32 %v3727, %v3745
    %3747 = vmatmul.bf16.gmra.mxu0 %v3416
    %v3748 = vpop.f32.mrf.mxu0
    %v3749 = vadd.f32 %v3730, %v3748
    %v3750 = vpop.f32.mrf.mxu0
    %v3751 = vadd.f32 %v3732, %v3750
    %3752 = vdwg.mxu0
    %3753 = vst [vmem:[#allocation11] sm:$0xff] %v3744
    %3754 = vst [vmem:[#allocation11 + $0x8] sm:$0xff] %v3746
    %3755 = vst [vmem:[#allocation11 + $0x10] sm:$0xff] %v3749
    %3756 = vst [vmem:[#allocation11 + $0x18] sm:$0xff] %v3751
    // Predicated region
    $region42: #{tpu_custom_call.1} parent=1 // pred_check
      _
    $region43: #{tpu_custom_call.1} parent=1 // pred_check_branch
      %3758 = sbr.rel (0) target = $region45
    $region44: #{tpu_custom_call.1} parent=1 // pred_region
      %3760 = vsyncadd [#allocation4], 0
      %s3761 = sshll.u32 [#allocation11], 4
      %s3762 = int_to_ptr.vmem [resolvable:$true] %s3761
      %s3763 = sshll.u32 %s5, 4
      %s3764 = int_to_ptr.hbm [resolvable:$true] %s3763
      %3769 = dma.vmem_to_hbm [thread:$0]  %s3762, 512, %s3764, [#allocation4], 128, 128, 8
    $region45: #{tpu_custom_call.1} parent=1 // pred_fallthru
      _
    // Predicated region
    $region46: #{tpu_custom_call.1} parent=1 // pred_check
      _
    $region47: #{tpu_custom_call.1} parent=1 // pred_check_branch
      %3771 = sbr.rel (0) target = $region49
    $region48: #{tpu_custom_call.1} parent=1 // pred_region
      %3773 = dma.done [#allocation4], 512
    $region49: #{tpu_custom_call.1} parent=1 // pred_fallthru
      _
    %3774 = vsyncpa [#allocation3], 1
    %3775 = vsyncpa [#allocation6], 1
    %3776 = vsyncpa [#allocation9], 1
    %3777 = vsyncpa [#allocation4], 1

</llo_original>
